<compile_context>
chip_gen: v5e
topology: v5e:2x2
jax: 0.10.0
libtpu: 0.0.40
codegen_flags: <defaults>
</compile_context>

<pallas_src>
import jax
import jax.numpy as jnp
from jax import lax
from jax.experimental import pallas as pl
from jax.experimental.pallas import tpu as pltpu


def _encoder_kernel(keep_ref, emb_ref, wih_ref, whh_ref, b_ref,
                    gamma_ref, beta_ref, out_ref, xw_ref):
    """Fused L x (apply_mask -> LSTM over T -> LayerNorm(x + h)) for one batch tile."""
    T, TB, H = out_ref.shape
    L = wih_ref.shape[0]
    G = 4 * H

    keep = keep_ref[...]                       # (T, TB, 1), == (1 - mask)
    out_ref[...] = emb_ref[...]                # out block doubles as the activation buffer

    unroll = True if T <= 32 else 8

    for l in range(L):                         # L is a small static int
        wih = wih_ref[l]                       # (H, 4H) bf16, gate order i,f,g,o
        whh = whh_ref[l]                       # (H, 4H) bf16
        b = b_ref[l]                           # (1, 4H) f32
        gamma_b = jnp.broadcast_to(gamma_ref[l], (TB, H))   # hoisted broadcasts
        beta_b = jnp.broadcast_to(beta_ref[l], (TB, H))

        # apply_mask: x = act * (1 - mask); out_ref now holds the masked input x.
        out_ref[...] = out_ref[...] * keep

        # Hoisted input projection for ALL timesteps: (T*TB, H) @ (H, 4H) + b.
        x_all = out_ref[...].reshape(T * TB, H).astype(jnp.bfloat16)
        xw_ref[...] = (jnp.dot(x_all, wih, preferred_element_type=jnp.float32)
                       + b).reshape(T, TB, G)

        def step(t, carry):
            h, c = carry                       # (TB, H) f32 each
            pre = xw_ref[t] + jnp.dot(h.astype(jnp.bfloat16), whh,
                                      preferred_element_type=jnp.float32)
            # PyTorch LSTM gate order: i, f, g, o (static lane slices).
            i_g = jax.nn.sigmoid(pre[:, 0:H])
            f_g = jax.nn.sigmoid(pre[:, H:2 * H])
            g_g = jnp.tanh(pre[:, 2 * H:3 * H])
            o_g = jax.nn.sigmoid(pre[:, 3 * H:4 * H])
            c_new = f_g * c + i_g * g_g
            h_new = o_g * jnp.tanh(c_new)

            # ResidualBlock (assumed): LayerNorm(x_t + Dropout(h_t)); Dropout == id.
            y = out_ref[t] + h_new             # full-tile (TB, H) load
            mu = jnp.mean(y, axis=-1, keepdims=True)
            var = jnp.mean((y - mu) ** 2, axis=-1, keepdims=True)
            out_ref[t] = (y - mu) * lax.rsqrt(var + 1e-5) * gamma_b + beta_b
            return (h_new, c_new)

        h0 = jnp.zeros((TB, H), jnp.float32)
        c0 = jnp.zeros((TB, H), jnp.float32)
        lax.fori_loop(0, T, step, (h0, c0), unroll=unroll)


def _pick_batch_tile(B):
    """Largest batch tile that divides B, is a multiple of 8 (sublane tiling)
    and yields >= 2 tiles (feeds both TensorCores on v7x); else full batch."""
    for ntiles in (2, 4, 8):
        if B % ntiles == 0 and (B // ntiles) % 8 == 0:
            return B // ntiles
    return B


def _vmem_limit_bytes(T, tb, H, L):
    f32, bf16 = 4, 2
    act_blk = T * tb * H * f32                        # emb-in block / out block
    keep_blk = T * tb * 1 * f32
    w_bytes = 2 * L * H * 4 * H * bf16                # wih + whh
    small = L * (4 * H + 2 * H) * f32                 # b, gamma, beta
    xw = T * tb * 4 * H * f32                         # scratch
    est = 2 * (2 * act_blk + keep_blk + w_bytes + small) + xw   # x2: double buffering
    return int(min(64 << 20, max(32 << 20, 2 * est)))           # headroom, v7x-safe cap


def text_sequence_encoder(emb, mask, params):
    """Forward pass of TextSequenceEncoder (eval mode).

    emb: (B, T, H) float32; mask: (B, T) float {0,1} (1 == masked, ByteTensor semantics).
    """
    wih, whh, b, gamma, beta = params
    B, T, H = emb.shape
    tb = _pick_batch_tile(B)
    grid = (B // tb,)

    # Layout plumbing (glue): time-major activations, (1 - mask) as (T, B, 1).
    emb_t = jnp.transpose(emb.astype(jnp.float32), (1, 0, 2))        # (T, B, H)
    keep = (1.0 - mask.astype(jnp.float32)).T[:, :, None]            # (T, B, 1)

    out_t = pl.pallas_call(
        _encoder_kernel,
        out_shape=jax.ShapeDtypeStruct((T, B, H), jnp.float32),
        grid_spec=pltpu.PrefetchScalarGridSpec(
            num_scalar_prefetch=0,
            grid=grid,
            in_specs=[
                pl.BlockSpec((T, tb, 1), lambda i: (0, i, 0)),       # keep (1 - mask)
                pl.BlockSpec((T, tb, H), lambda i: (0, i, 0)),       # emb (time-major)
                pl.BlockSpec(wih.shape, lambda i: (0, 0, 0)),        # (L, H, 4H) bf16
                pl.BlockSpec(whh.shape, lambda i: (0, 0, 0)),        # (L, H, 4H) bf16
                pl.BlockSpec(b.shape, lambda i: (0, 0, 0)),          # (L, 1, 4H)
                pl.BlockSpec(gamma.shape, lambda i: (0, 0, 0)),      # (L, 1, H)
                pl.BlockSpec(beta.shape, lambda i: (0, 0, 0)),       # (L, 1, H)
            ],
            out_specs=pl.BlockSpec((T, tb, H), lambda i: (0, i, 0)),
            scratch_shapes=[pltpu.VMEM((T, tb, 4 * H), jnp.float32)],  # hoisted x@Wih
        ),
        compiler_params=pltpu.CompilerParams(
            dimension_semantics=("parallel",),
            vmem_limit_bytes=_vmem_limit_bytes(T, tb, H, wih.shape[0]),
        ),
    )(keep, emb_t, wih, whh, b, gamma, beta)

    return jnp.transpose(out_t, (1, 0, 2))                           # back to (B, T, H)


def init_params(key, hidden_size, num_layers):
    """PyTorch-shaped params, repacked: per layer W_ih,(4H,H) W_hh,(4H,H) b_ih,b_hh,(4H,)
    and LayerNorm(H) -> stacked (L,H,4H) bf16 gate-packed weights, fused bias, gamma/beta."""
    H = hidden_size
    k = 1.0 / jnp.sqrt(jnp.float32(H))
    wih_l, whh_l, b_l = [], [], []
    for _ in range(num_layers):
        kw1, kw2, kb1, kb2, key = jax.random.split(key, 5)
        w_ih = jax.random.uniform(kw1, (4 * H, H), jnp.float32, -k, k)
        w_hh = jax.random.uniform(kw2, (4 * H, H), jnp.float32, -k, k)
        b_ih = jax.random.uniform(kb1, (4 * H,), jnp.float32, -k, k)
        b_hh = jax.random.uniform(kb2, (4 * H,), jnp.float32, -k, k)
        wih_l.append(w_ih.T)                       # (H, 4H): x @ W_ih.T, gates i,f,g,o
        whh_l.append(w_hh.T)                       # (H, 4H)
        b_l.append((b_ih + b_hh)[None, :])         # (1, 4H)
    wih = jnp.stack(wih_l).astype(jnp.bfloat16)    # (L, H, 4H)
    whh = jnp.stack(whh_l).astype(jnp.bfloat16)    # (L, H, 4H)
    b = jnp.stack(b_l)                             # (L, 1, 4H) f32
    gamma = jnp.ones((num_layers, 1, H), jnp.float32)
    beta = jnp.zeros((num_layers, 1, H), jnp.float32)
    return wih, whh, b, gamma, beta


def _reference(emb, mask, params):
    """Pure-JAX reference with identical math (bf16 weights, f32 accumulation)."""
    wih, whh, b, gamma, beta = params
    B, T, H = emb.shape
    keep = (1.0 - mask.astype(jnp.float32))[:, :, None]
    act = emb.astype(jnp.float32)
    for l in range(wih.shape[0]):
        x = act * keep
        xw = (jnp.dot(x.reshape(B * T, H).astype(jnp.bfloat16), wih[l],
                      preferred_element_type=jnp.float32).reshape(B, T, 4 * H) + b[l])
        h = jnp.zeros((B, H), jnp.float32)
        c = jnp.zeros((B, H), jnp.float32)
        hs = []
        for t in range(T):
            pre = xw[:, t, :] + jnp.dot(h.astype(jnp.bfloat16), whh[l],
                                        preferred_element_type=jnp.float32)
            i_g = jax.nn.sigmoid(pre[:, 0:H])
            f_g = jax.nn.sigmoid(pre[:, H:2 * H])
            g_g = jnp.tanh(pre[:, 2 * H:3 * H])
            o_g = jax.nn.sigmoid(pre[:, 3 * H:4 * H])
            c = f_g * c + i_g * g_g
            h = o_g * jnp.tanh(c)
            hs.append(h)
        y = x + jnp.stack(hs, axis=1)
        mu = jnp.mean(y, axis=-1, keepdims=True)
        var = jnp.mean((y - mu) ** 2, axis=-1, keepdims=True)
        act = (y - mu) * lax.rsqrt(var + 1e-5) * gamma[l] + beta[l]
    return act


if __name__ == "__main__":
    B, T, H, L = 16, 8, 32, 3
    key = jax.random.PRNGKey(0)
    k_emb, k_mask, k_par = jax.random.split(key, 3)

    emb = jax.random.normal(k_emb, (B, T, H), jnp.float32)
    # ByteTensor mask semantics (1 == masked); converted to float32 as glue.
    mask = (jax.random.uniform(k_mask, (B, T)) < 0.25).astype(jnp.float32)

    params = init_params(k_par, H, L)

    out = text_sequence_encoder(emb, mask, params)
    out = jax.block_until_ready(out)

    assert out.shape == (B, T, H) and out.dtype == jnp.float32
    assert bool(jnp.all(jnp.isfinite(out)))
    ref = _reference(emb, mask, params)
    assert bool(jnp.allclose(out, ref, atol=2e-2, rtol=2e-2)), \
        float(jnp.max(jnp.abs(out - ref)))
    print("KERNEL_OK")
</pallas_src>

<mosaic_0001>
module attributes {stable_mosaic.version = 11 : i64} {
  func.func @_encoder_kernel(%arg0: i32, %arg1: memref<8x8x1xf32, #tpu.memory_space<vmem>>, %arg2: memref<8x8x32xf32, #tpu.memory_space<vmem>>, %arg3: memref<3x32x128xbf16, #tpu.memory_space<vmem>>, %arg4: memref<3x32x128xbf16, #tpu.memory_space<vmem>>, %arg5: memref<3x1x128xf32, #tpu.memory_space<vmem>>, %arg6: memref<3x1x32xf32, #tpu.memory_space<vmem>>, %arg7: memref<3x1x32xf32, #tpu.memory_space<vmem>>, %arg8: memref<8x8x32xf32, #tpu.memory_space<vmem>>, %arg9: memref<8x8x128xf32, #tpu.memory_space<vmem>>) attributes {dimension_semantics = [#tpu.dimension_semantics<parallel>], iteration_bounds = array<i64: 2>, scalar_prefetch = 0 : i64, scratch_operands = 1 : i64, tpu.core_type = #tpu.core_type<tc>, window_params = [{transform_indices = @transform_0, window_bounds = array<i64: 8, 8, 1>}, {transform_indices = @transform_1, window_bounds = array<i64: 8, 8, 32>}, {pipeline_mode = #tpu.pipeline_mode<synchronous>, transform_indices = @transform_2, window_bounds = array<i64: 3, 32, 128>}, {pipeline_mode = #tpu.pipeline_mode<synchronous>, transform_indices = @transform_3, window_bounds = array<i64: 3, 32, 128>}, {pipeline_mode = #tpu.pipeline_mode<synchronous>, transform_indices = @transform_4, window_bounds = array<i64: 3, 1, 128>}, {pipeline_mode = #tpu.pipeline_mode<synchronous>, transform_indices = @transform_5, window_bounds = array<i64: 3, 1, 32>}, {pipeline_mode = #tpu.pipeline_mode<synchronous>, transform_indices = @transform_6, window_bounds = array<i64: 3, 1, 32>}, {transform_indices = @transform_7, window_bounds = array<i64: 8, 8, 32>}]} {
    %c0 = arith.constant 0 : index
    %c0_0 = arith.constant 0 : index
    %c0_1 = arith.constant 0 : index
    %0 = vector.load %arg1[%c0, %c0_0, %c0_1] : memref<8x8x1xf32, #tpu.memory_space<vmem>>, vector<8x8x1xf32>
    %c0_2 = arith.constant 0 : index
    %c0_3 = arith.constant 0 : index
    %c0_4 = arith.constant 0 : index
    %1 = vector.load %arg2[%c0_2, %c0_3, %c0_4] : memref<8x8x32xf32, #tpu.memory_space<vmem>>, vector<8x8x32xf32>
    %c0_5 = arith.constant 0 : index
    %c0_6 = arith.constant 0 : index
    %c0_7 = arith.constant 0 : index
    %2 = vector.load %arg8[%c0_5, %c0_6, %c0_7] : memref<8x8x32xf32, #tpu.memory_space<vmem>>, vector<8x8x32xf32>
    tpu.vector_store %arg8[%c0_5, %c0_6, %c0_7], %1 {strides = array<i32>} : memref<8x8x32xf32, #tpu.memory_space<vmem>>, vector<8x8x32xf32>,
    %c0_8 = arith.constant 0 : index
    %c0_9 = arith.constant 0 : index
    %c0_10 = arith.constant 0 : index
    %3 = vector.load %arg3[%c0_8, %c0_9, %c0_10] : memref<3x32x128xbf16, #tpu.memory_space<vmem>>, vector<1x32x128xbf16>
    %4 = vector.shape_cast %3 : vector<1x32x128xbf16> to vector<32x128xbf16>
    %c0_11 = arith.constant 0 : index
    %c0_12 = arith.constant 0 : index
    %c0_13 = arith.constant 0 : index
    %5 = vector.load %arg4[%c0_11, %c0_12, %c0_13] : memref<3x32x128xbf16, #tpu.memory_space<vmem>>, vector<1x32x128xbf16>
    %6 = vector.shape_cast %5 : vector<1x32x128xbf16> to vector<32x128xbf16>
    %c0_14 = arith.constant 0 : index
    %c0_15 = arith.constant 0 : index
    %c0_16 = arith.constant 0 : index
    %7 = vector.load %arg5[%c0_14, %c0_15, %c0_16] : memref<3x1x128xf32, #tpu.memory_space<vmem>>, vector<1x1x128xf32>
    %8 = vector.shape_cast %7 : vector<1x1x128xf32> to vector<1x128xf32>
    %c0_17 = arith.constant 0 : index
    %c0_18 = arith.constant 0 : index
    %c0_19 = arith.constant 0 : index
    %9 = vector.load %arg6[%c0_17, %c0_18, %c0_19] : memref<3x1x32xf32, #tpu.memory_space<vmem>>, vector<1x1x32xf32>
    %10 = vector.shape_cast %9 : vector<1x1x32xf32> to vector<1x32xf32>
    %11 = vector.shape_cast %10 : vector<1x32xf32> to vector<1x32xf32>
    %12 = vector.broadcast %11 : vector<1x32xf32> to vector<8x32xf32>
    %c0_20 = arith.constant 0 : index
    %c0_21 = arith.constant 0 : index
    %c0_22 = arith.constant 0 : index
    %13 = vector.load %arg7[%c0_20, %c0_21, %c0_22] : memref<3x1x32xf32, #tpu.memory_space<vmem>>, vector<1x1x32xf32>
    %14 = vector.shape_cast %13 : vector<1x1x32xf32> to vector<1x32xf32>
    %15 = vector.shape_cast %14 : vector<1x32xf32> to vector<1x32xf32>
    %16 = vector.broadcast %15 : vector<1x32xf32> to vector<8x32xf32>
    %c0_23 = arith.constant 0 : index
    %c0_24 = arith.constant 0 : index
    %c0_25 = arith.constant 0 : index
    %17 = vector.load %arg8[%c0_23, %c0_24, %c0_25] : memref<8x8x32xf32, #tpu.memory_space<vmem>>, vector<8x8x32xf32>
    %18 = vector.broadcast %0 : vector<8x8x1xf32> to vector<8x8x32xf32>
    %19 = arith.mulf %17, %18 : vector<8x8x32xf32>
    %c0_26 = arith.constant 0 : index
    %c0_27 = arith.constant 0 : index
    %c0_28 = arith.constant 0 : index
    %20 = vector.load %arg8[%c0_26, %c0_27, %c0_28] : memref<8x8x32xf32, #tpu.memory_space<vmem>>, vector<8x8x32xf32>
    tpu.vector_store %arg8[%c0_26, %c0_27, %c0_28], %19 {strides = array<i32>} : memref<8x8x32xf32, #tpu.memory_space<vmem>>, vector<8x8x32xf32>,
    %c0_29 = arith.constant 0 : index
    %c0_30 = arith.constant 0 : index
    %c0_31 = arith.constant 0 : index
    %21 = vector.load %arg8[%c0_29, %c0_30, %c0_31] : memref<8x8x32xf32, #tpu.memory_space<vmem>>, vector<8x8x32xf32>
    %22 = vector.shape_cast %21 : vector<8x8x32xf32> to vector<64x32xf32>
    %23 = arith.truncf %22 : vector<64x32xf32> to vector<64x32xbf16>
    %cst = arith.constant dense<0.000000e+00> : vector<64x128xf32>
    %24 = tpu.matmul %23, %4, %cst {dimension_numbers = #tpu.dot_dimension_numbers<[1], [0], [0], [1], [0, 0, 1, 1], [], []>} : vector<64x32xbf16>, vector<32x128xbf16>, vector<64x128xf32> -> vector<64x128xf32>
    %25 = vector.broadcast %8 : vector<1x128xf32> to vector<64x128xf32>
    %26 = arith.addf %24, %25 : vector<64x128xf32>
    %27 = vector.shape_cast %26 : vector<64x128xf32> to vector<8x8x128xf32>
    %c0_32 = arith.constant 0 : index
    %c0_33 = arith.constant 0 : index
    %c0_34 = arith.constant 0 : index
    %28 = vector.load %arg9[%c0_32, %c0_33, %c0_34] : memref<8x8x128xf32, #tpu.memory_space<vmem>>, vector<8x8x128xf32>
    tpu.vector_store %arg9[%c0_32, %c0_33, %c0_34], %27 {strides = array<i32>} : memref<8x8x128xf32, #tpu.memory_space<vmem>>, vector<8x8x128xf32>,
    %cst_35 = arith.constant 0.000000e+00 : f32
    %29 = vector.broadcast %cst_35 : f32 to vector<8x32xf32>
    %cst_36 = arith.constant 0.000000e+00 : f32
    %30 = vector.broadcast %cst_36 : f32 to vector<8x32xf32>
    %c0_i32 = arith.constant 0 : i32
    %31 = arith.index_cast %c0_i32 : i32 to index
    %c0_37 = arith.constant 0 : index
    %c0_38 = arith.constant 0 : index
    %32 = vector.load %arg9[%31, %c0_37, %c0_38] : memref<8x8x128xf32, #tpu.memory_space<vmem>>, vector<1x8x128xf32>
    %33 = vector.shape_cast %32 : vector<1x8x128xf32> to vector<8x128xf32>
    %34 = arith.truncf %29 : vector<8x32xf32> to vector<8x32xbf16>
    %cst_39 = arith.constant dense<0.000000e+00> : vector<8x128xf32>
    %35 = tpu.matmul %34, %6, %cst_39 {dimension_numbers = #tpu.dot_dimension_numbers<[1], [0], [0], [1], [0, 0, 1, 1], [], []>} : vector<8x32xbf16>, vector<32x128xbf16>, vector<8x128xf32> -> vector<8x128xf32>
    %36 = arith.addf %33, %35 : vector<8x128xf32>
    %37 = vector.extract_strided_slice %36 {offsets = [0, 0], sizes = [8, 32], strides = [1, 1]} : vector<8x128xf32> to vector<8x32xf32>
    %38 = arith.negf %37 : vector<8x32xf32>
    %39 = math.exp %38 : vector<8x32xf32>
    %cst_40 = arith.constant 1.000000e+00 : f32
    %40 = vector.broadcast %cst_40 : f32 to vector<8x32xf32>
    %41 = arith.addf %40, %39 : vector<8x32xf32>
    %42 = arith.divf %40, %41 : vector<8x32xf32>
    %43 = vector.extract_strided_slice %36 {offsets = [0, 32], sizes = [8, 32], strides = [1, 1]} : vector<8x128xf32> to vector<8x32xf32>
    %44 = arith.negf %43 : vector<8x32xf32>
    %45 = math.exp %44 : vector<8x32xf32>
    %cst_41 = arith.constant 1.000000e+00 : f32
    %46 = vector.broadcast %cst_41 : f32 to vector<8x32xf32>
    %47 = arith.addf %46, %45 : vector<8x32xf32>
    %48 = arith.divf %46, %47 : vector<8x32xf32>
    %49 = vector.extract_strided_slice %36 {offsets = [0, 64], sizes = [8, 32], strides = [1, 1]} : vector<8x128xf32> to vector<8x32xf32>
    %50 = math.tanh %49 : vector<8x32xf32>
    %51 = vector.extract_strided_slice %36 {offsets = [0, 96], sizes = [8, 32], strides = [1, 1]} : vector<8x128xf32> to vector<8x32xf32>
    %52 = arith.negf %51 : vector<8x32xf32>
    %53 = math.exp %52 : vector<8x32xf32>
    %cst_42 = arith.constant 1.000000e+00 : f32
    %54 = vector.broadcast %cst_42 : f32 to vector<8x32xf32>
    %55 = arith.addf %54, %53 : vector<8x32xf32>
    %56 = arith.divf %54, %55 : vector<8x32xf32>
    %57 = arith.mulf %48, %30 : vector<8x32xf32>
    %58 = arith.mulf %42, %50 : vector<8x32xf32>
    %59 = arith.addf %57, %58 : vector<8x32xf32>
    %60 = math.tanh %59 : vector<8x32xf32>
    %61 = arith.mulf %56, %60 : vector<8x32xf32>
    %62 = arith.index_cast %c0_i32 : i32 to index
    %c0_43 = arith.constant 0 : index
    %c0_44 = arith.constant 0 : index
    %63 = vector.load %arg8[%62, %c0_43, %c0_44] : memref<8x8x32xf32, #tpu.memory_space<vmem>>, vector<1x8x32xf32>
    %64 = vector.shape_cast %63 : vector<1x8x32xf32> to vector<8x32xf32>
    %65 = arith.addf %64, %61 : vector<8x32xf32>
    %cst_45 = arith.constant dense<0.000000e+00> : vector<8xf32>
    %66 = vector.multi_reduction <add>, %65, %cst_45 [1] : vector<8x32xf32> to vector<8xf32>
    %67 = vector.shape_cast %66 : vector<8xf32> to vector<8x1xf32>
    %cst_46 = arith.constant 3.200000e+01 : f32
    %68 = vector.broadcast %cst_46 : f32 to vector<8x1xf32>
    %69 = arith.divf %67, %68 : vector<8x1xf32>
    %70 = vector.broadcast %69 : vector<8x1xf32> to vector<8x32xf32>
    %71 = arith.subf %65, %70 : vector<8x32xf32>
    %72 = arith.mulf %71, %71 : vector<8x32xf32>
    %cst_47 = arith.constant dense<0.000000e+00> : vector<8xf32>
    %73 = vector.multi_reduction <add>, %72, %cst_47 [1] : vector<8x32xf32> to vector<8xf32>
    %74 = vector.shape_cast %73 : vector<8xf32> to vector<8x1xf32>
    %cst_48 = arith.constant 3.200000e+01 : f32
    %75 = vector.broadcast %cst_48 : f32 to vector<8x1xf32>
    %76 = arith.divf %74, %75 : vector<8x1xf32>
    %77 = vector.broadcast %69 : vector<8x1xf32> to vector<8x32xf32>
    %78 = arith.subf %65, %77 : vector<8x32xf32>
    %cst_49 = arith.constant 9.99999974E-6 : f32
    %79 = vector.broadcast %cst_49 : f32 to vector<8x1xf32>
    %80 = arith.addf %76, %79 : vector<8x1xf32>
    %81 = math.rsqrt %80 : vector<8x1xf32>
    %82 = vector.broadcast %81 : vector<8x1xf32> to vector<8x32xf32>
    %83 = arith.mulf %78, %82 : vector<8x32xf32>
    %84 = arith.mulf %83, %12 : vector<8x32xf32>
    %85 = arith.addf %84, %16 : vector<8x32xf32>
    %86 = arith.index_cast %c0_i32 : i32 to index
    %c0_50 = arith.constant 0 : index
    %c0_51 = arith.constant 0 : index
    %87 = vector.load %arg8[%86, %c0_50, %c0_51] : memref<8x8x32xf32, #tpu.memory_space<vmem>>, vector<1x8x32xf32>
    %88 = vector.shape_cast %87 : vector<1x8x32xf32> to vector<8x32xf32>
    %89 = vector.shape_cast %85 : vector<8x32xf32> to vector<1x8x32xf32>
    tpu.vector_store %arg8[%86, %c0_50, %c0_51], %89 {strides = array<i32>} : memref<8x8x32xf32, #tpu.memory_space<vmem>>, vector<1x8x32xf32>,
    %c1_i32 = arith.constant 1 : i32
    %90 = arith.index_cast %c1_i32 : i32 to index
    %c0_52 = arith.constant 0 : index
    %c0_53 = arith.constant 0 : index
    %91 = vector.load %arg9[%90, %c0_52, %c0_53] : memref<8x8x128xf32, #tpu.memory_space<vmem>>, vector<1x8x128xf32>
    %92 = vector.shape_cast %91 : vector<1x8x128xf32> to vector<8x128xf32>
    %93 = arith.truncf %61 : vector<8x32xf32> to vector<8x32xbf16>
    %cst_54 = arith.constant dense<0.000000e+00> : vector<8x128xf32>
    %94 = tpu.matmul %93, %6, %cst_54 {dimension_numbers = #tpu.dot_dimension_numbers<[1], [0], [0], [1], [0, 0, 1, 1], [], []>} : vector<8x32xbf16>, vector<32x128xbf16>, vector<8x128xf32> -> vector<8x128xf32>
    %95 = arith.addf %92, %94 : vector<8x128xf32>
    %96 = vector.extract_strided_slice %95 {offsets = [0, 0], sizes = [8, 32], strides = [1, 1]} : vector<8x128xf32> to vector<8x32xf32>
    %97 = arith.negf %96 : vector<8x32xf32>
    %98 = math.exp %97 : vector<8x32xf32>
    %cst_55 = arith.constant 1.000000e+00 : f32
    %99 = vector.broadcast %cst_55 : f32 to vector<8x32xf32>
    %100 = arith.addf %99, %98 : vector<8x32xf32>
    %101 = arith.divf %99, %100 : vector<8x32xf32>
    %102 = vector.extract_strided_slice %95 {offsets = [0, 32], sizes = [8, 32], strides = [1, 1]} : vector<8x128xf32> to vector<8x32xf32>
    %103 = arith.negf %102 : vector<8x32xf32>
    %104 = math.exp %103 : vector<8x32xf32>
    %cst_56 = arith.constant 1.000000e+00 : f32
    %105 = vector.broadcast %cst_56 : f32 to vector<8x32xf32>
    %106 = arith.addf %105, %104 : vector<8x32xf32>
    %107 = arith.divf %105, %106 : vector<8x32xf32>
    %108 = vector.extract_strided_slice %95 {offsets = [0, 64], sizes = [8, 32], strides = [1, 1]} : vector<8x128xf32> to vector<8x32xf32>
    %109 = math.tanh %108 : vector<8x32xf32>
    %110 = vector.extract_strided_slice %95 {offsets = [0, 96], sizes = [8, 32], strides = [1, 1]} : vector<8x128xf32> to vector<8x32xf32>
    %111 = arith.negf %110 : vector<8x32xf32>
    %112 = math.exp %111 : vector<8x32xf32>
    %cst_57 = arith.constant 1.000000e+00 : f32
    %113 = vector.broadcast %cst_57 : f32 to vector<8x32xf32>
    %114 = arith.addf %113, %112 : vector<8x32xf32>
    %115 = arith.divf %113, %114 : vector<8x32xf32>
    %116 = arith.mulf %107, %59 : vector<8x32xf32>
    %117 = arith.mulf %101, %109 : vector<8x32xf32>
    %118 = arith.addf %116, %117 : vector<8x32xf32>
    %119 = math.tanh %118 : vector<8x32xf32>
    %120 = arith.mulf %115, %119 : vector<8x32xf32>
    %121 = arith.index_cast %c1_i32 : i32 to index
    %c0_58 = arith.constant 0 : index
    %c0_59 = arith.constant 0 : index
    %122 = vector.load %arg8[%121, %c0_58, %c0_59] : memref<8x8x32xf32, #tpu.memory_space<vmem>>, vector<1x8x32xf32>
    %123 = vector.shape_cast %122 : vector<1x8x32xf32> to vector<8x32xf32>
    %124 = arith.addf %123, %120 : vector<8x32xf32>
    %cst_60 = arith.constant dense<0.000000e+00> : vector<8xf32>
    %125 = vector.multi_reduction <add>, %124, %cst_60 [1] : vector<8x32xf32> to vector<8xf32>
    %126 = vector.shape_cast %125 : vector<8xf32> to vector<8x1xf32>
    %cst_61 = arith.constant 3.200000e+01 : f32
    %127 = vector.broadcast %cst_61 : f32 to vector<8x1xf32>
    %128 = arith.divf %126, %127 : vector<8x1xf32>
    %129 = vector.broadcast %128 : vector<8x1xf32> to vector<8x32xf32>
    %130 = arith.subf %124, %129 : vector<8x32xf32>
    %131 = arith.mulf %130, %130 : vector<8x32xf32>
    %cst_62 = arith.constant dense<0.000000e+00> : vector<8xf32>
    %132 = vector.multi_reduction <add>, %131, %cst_62 [1] : vector<8x32xf32> to vector<8xf32>
    %133 = vector.shape_cast %132 : vector<8xf32> to vector<8x1xf32>
    %cst_63 = arith.constant 3.200000e+01 : f32
    %134 = vector.broadcast %cst_63 : f32 to vector<8x1xf32>
    %135 = arith.divf %133, %134 : vector<8x1xf32>
    %136 = vector.broadcast %128 : vector<8x1xf32> to vector<8x32xf32>
    %137 = arith.subf %124, %136 : vector<8x32xf32>
    %cst_64 = arith.constant 9.99999974E-6 : f32
    %138 = vector.broadcast %cst_64 : f32 to vector<8x1xf32>
    %139 = arith.addf %135, %138 : vector<8x1xf32>
    %140 = math.rsqrt %139 : vector<8x1xf32>
    %141 = vector.broadcast %140 : vector<8x1xf32> to vector<8x32xf32>
    %142 = arith.mulf %137, %141 : vector<8x32xf32>
    %143 = arith.mulf %142, %12 : vector<8x32xf32>
    %144 = arith.addf %143, %16 : vector<8x32xf32>
    %145 = arith.index_cast %c1_i32 : i32 to index
    %c0_65 = arith.constant 0 : index
    %c0_66 = arith.constant 0 : index
    %146 = vector.load %arg8[%145, %c0_65, %c0_66] : memref<8x8x32xf32, #tpu.memory_space<vmem>>, vector<1x8x32xf32>
    %147 = vector.shape_cast %146 : vector<1x8x32xf32> to vector<8x32xf32>
    %148 = vector.shape_cast %144 : vector<8x32xf32> to vector<1x8x32xf32>
    tpu.vector_store %arg8[%145, %c0_65, %c0_66], %148 {strides = array<i32>} : memref<8x8x32xf32, #tpu.memory_space<vmem>>, vector<1x8x32xf32>,
    %c2_i32 = arith.constant 2 : i32
    %149 = arith.index_cast %c2_i32 : i32 to index
    %c0_67 = arith.constant 0 : index
    %c0_68 = arith.constant 0 : index
    %150 = vector.load %arg9[%149, %c0_67, %c0_68] : memref<8x8x128xf32, #tpu.memory_space<vmem>>, vector<1x8x128xf32>
    %151 = vector.shape_cast %150 : vector<1x8x128xf32> to vector<8x128xf32>
    %152 = arith.truncf %120 : vector<8x32xf32> to vector<8x32xbf16>
    %cst_69 = arith.constant dense<0.000000e+00> : vector<8x128xf32>
    %153 = tpu.matmul %152, %6, %cst_69 {dimension_numbers = #tpu.dot_dimension_numbers<[1], [0], [0], [1], [0, 0, 1, 1], [], []>} : vector<8x32xbf16>, vector<32x128xbf16>, vector<8x128xf32> -> vector<8x128xf32>
    %154 = arith.addf %151, %153 : vector<8x128xf32>
    %155 = vector.extract_strided_slice %154 {offsets = [0, 0], sizes = [8, 32], strides = [1, 1]} : vector<8x128xf32> to vector<8x32xf32>
    %156 = arith.negf %155 : vector<8x32xf32>
    %157 = math.exp %156 : vector<8x32xf32>
    %cst_70 = arith.constant 1.000000e+00 : f32
    %158 = vector.broadcast %cst_70 : f32 to vector<8x32xf32>
    %159 = arith.addf %158, %157 : vector<8x32xf32>
    %160 = arith.divf %158, %159 : vector<8x32xf32>
    %161 = vector.extract_strided_slice %154 {offsets = [0, 32], sizes = [8, 32], strides = [1, 1]} : vector<8x128xf32> to vector<8x32xf32>
    %162 = arith.negf %161 : vector<8x32xf32>
    %163 = math.exp %162 : vector<8x32xf32>
    %cst_71 = arith.constant 1.000000e+00 : f32
    %164 = vector.broadcast %cst_71 : f32 to vector<8x32xf32>
    %165 = arith.addf %164, %163 : vector<8x32xf32>
    %166 = arith.divf %164, %165 : vector<8x32xf32>
    %167 = vector.extract_strided_slice %154 {offsets = [0, 64], sizes = [8, 32], strides = [1, 1]} : vector<8x128xf32> to vector<8x32xf32>
    %168 = math.tanh %167 : vector<8x32xf32>
    %169 = vector.extract_strided_slice %154 {offsets = [0, 96], sizes = [8, 32], strides = [1, 1]} : vector<8x128xf32> to vector<8x32xf32>
    %170 = arith.negf %169 : vector<8x32xf32>
    %171 = math.exp %170 : vector<8x32xf32>
    %cst_72 = arith.constant 1.000000e+00 : f32
    %172 = vector.broadcast %cst_72 : f32 to vector<8x32xf32>
    %173 = arith.addf %172, %171 : vector<8x32xf32>
    %174 = arith.divf %172, %173 : vector<8x32xf32>
    %175 = arith.mulf %166, %118 : vector<8x32xf32>
    %176 = arith.mulf %160, %168 : vector<8x32xf32>
    %177 = arith.addf %175, %176 : vector<8x32xf32>
    %178 = math.tanh %177 : vector<8x32xf32>
    %179 = arith.mulf %174, %178 : vector<8x32xf32>
    %180 = arith.index_cast %c2_i32 : i32 to index
    %c0_73 = arith.constant 0 : index
    %c0_74 = arith.constant 0 : index
    %181 = vector.load %arg8[%180, %c0_73, %c0_74] : memref<8x8x32xf32, #tpu.memory_space<vmem>>, vector<1x8x32xf32>
    %182 = vector.shape_cast %181 : vector<1x8x32xf32> to vector<8x32xf32>
    %183 = arith.addf %182, %179 : vector<8x32xf32>
    %cst_75 = arith.constant dense<0.000000e+00> : vector<8xf32>
    %184 = vector.multi_reduction <add>, %183, %cst_75 [1] : vector<8x32xf32> to vector<8xf32>
    %185 = vector.shape_cast %184 : vector<8xf32> to vector<8x1xf32>
    %cst_76 = arith.constant 3.200000e+01 : f32
    %186 = vector.broadcast %cst_76 : f32 to vector<8x1xf32>
    %187 = arith.divf %185, %186 : vector<8x1xf32>
    %188 = vector.broadcast %187 : vector<8x1xf32> to vector<8x32xf32>
    %189 = arith.subf %183, %188 : vector<8x32xf32>
    %190 = arith.mulf %189, %189 : vector<8x32xf32>
    %cst_77 = arith.constant dense<0.000000e+00> : vector<8xf32>
    %191 = vector.multi_reduction <add>, %190, %cst_77 [1] : vector<8x32xf32> to vector<8xf32>
    %192 = vector.shape_cast %191 : vector<8xf32> to vector<8x1xf32>
    %cst_78 = arith.constant 3.200000e+01 : f32
    %193 = vector.broadcast %cst_78 : f32 to vector<8x1xf32>
    %194 = arith.divf %192, %193 : vector<8x1xf32>
    %195 = vector.broadcast %187 : vector<8x1xf32> to vector<8x32xf32>
    %196 = arith.subf %183, %195 : vector<8x32xf32>
    %cst_79 = arith.constant 9.99999974E-6 : f32
    %197 = vector.broadcast %cst_79 : f32 to vector<8x1xf32>
    %198 = arith.addf %194, %197 : vector<8x1xf32>
    %199 = math.rsqrt %198 : vector<8x1xf32>
    %200 = vector.broadcast %199 : vector<8x1xf32> to vector<8x32xf32>
    %201 = arith.mulf %196, %200 : vector<8x32xf32>
    %202 = arith.mulf %201, %12 : vector<8x32xf32>
    %203 = arith.addf %202, %16 : vector<8x32xf32>
    %204 = arith.index_cast %c2_i32 : i32 to index
    %c0_80 = arith.constant 0 : index
    %c0_81 = arith.constant 0 : index
    %205 = vector.load %arg8[%204, %c0_80, %c0_81] : memref<8x8x32xf32, #tpu.memory_space<vmem>>, vector<1x8x32xf32>
    %206 = vector.shape_cast %205 : vector<1x8x32xf32> to vector<8x32xf32>
    %207 = vector.shape_cast %203 : vector<8x32xf32> to vector<1x8x32xf32>
    tpu.vector_store %arg8[%204, %c0_80, %c0_81], %207 {strides = array<i32>} : memref<8x8x32xf32, #tpu.memory_space<vmem>>, vector<1x8x32xf32>,
    %c3_i32 = arith.constant 3 : i32
    %208 = arith.index_cast %c3_i32 : i32 to index
    %c0_82 = arith.constant 0 : index
    %c0_83 = arith.constant 0 : index
    %209 = vector.load %arg9[%208, %c0_82, %c0_83] : memref<8x8x128xf32, #tpu.memory_space<vmem>>, vector<1x8x128xf32>
    %210 = vector.shape_cast %209 : vector<1x8x128xf32> to vector<8x128xf32>
    %211 = arith.truncf %179 : vector<8x32xf32> to vector<8x32xbf16>
    %cst_84 = arith.constant dense<0.000000e+00> : vector<8x128xf32>
    %212 = tpu.matmul %211, %6, %cst_84 {dimension_numbers = #tpu.dot_dimension_numbers<[1], [0], [0], [1], [0, 0, 1, 1], [], []>} : vector<8x32xbf16>, vector<32x128xbf16>, vector<8x128xf32> -> vector<8x128xf32>
    %213 = arith.addf %210, %212 : vector<8x128xf32>
    %214 = vector.extract_strided_slice %213 {offsets = [0, 0], sizes = [8, 32], strides = [1, 1]} : vector<8x128xf32> to vector<8x32xf32>
    %215 = arith.negf %214 : vector<8x32xf32>
    %216 = math.exp %215 : vector<8x32xf32>
    %cst_85 = arith.constant 1.000000e+00 : f32
    %217 = vector.broadcast %cst_85 : f32 to vector<8x32xf32>
    %218 = arith.addf %217, %216 : vector<8x32xf32>
    %219 = arith.divf %217, %218 : vector<8x32xf32>
    %220 = vector.extract_strided_slice %213 {offsets = [0, 32], sizes = [8, 32], strides = [1, 1]} : vector<8x128xf32> to vector<8x32xf32>
    %221 = arith.negf %220 : vector<8x32xf32>
    %222 = math.exp %221 : vector<8x32xf32>
    %cst_86 = arith.constant 1.000000e+00 : f32
    %223 = vector.broadcast %cst_86 : f32 to vector<8x32xf32>
    %224 = arith.addf %223, %222 : vector<8x32xf32>
    %225 = arith.divf %223, %224 : vector<8x32xf32>
    %226 = vector.extract_strided_slice %213 {offsets = [0, 64], sizes = [8, 32], strides = [1, 1]} : vector<8x128xf32> to vector<8x32xf32>
    %227 = math.tanh %226 : vector<8x32xf32>
    %228 = vector.extract_strided_slice %213 {offsets = [0, 96], sizes = [8, 32], strides = [1, 1]} : vector<8x128xf32> to vector<8x32xf32>
    %229 = arith.negf %228 : vector<8x32xf32>
    %230 = math.exp %229 : vector<8x32xf32>
    %cst_87 = arith.constant 1.000000e+00 : f32
    %231 = vector.broadcast %cst_87 : f32 to vector<8x32xf32>
    %232 = arith.addf %231, %230 : vector<8x32xf32>
    %233 = arith.divf %231, %232 : vector<8x32xf32>
    %234 = arith.mulf %225, %177 : vector<8x32xf32>
    %235 = arith.mulf %219, %227 : vector<8x32xf32>
    %236 = arith.addf %234, %235 : vector<8x32xf32>
    %237 = math.tanh %236 : vector<8x32xf32>
    %238 = arith.mulf %233, %237 : vector<8x32xf32>
    %239 = arith.index_cast %c3_i32 : i32 to index
    %c0_88 = arith.constant 0 : index
    %c0_89 = arith.constant 0 : index
    %240 = vector.load %arg8[%239, %c0_88, %c0_89] : memref<8x8x32xf32, #tpu.memory_space<vmem>>, vector<1x8x32xf32>
    %241 = vector.shape_cast %240 : vector<1x8x32xf32> to vector<8x32xf32>
    %242 = arith.addf %241, %238 : vector<8x32xf32>
    %cst_90 = arith.constant dense<0.000000e+00> : vector<8xf32>
    %243 = vector.multi_reduction <add>, %242, %cst_90 [1] : vector<8x32xf32> to vector<8xf32>
    %244 = vector.shape_cast %243 : vector<8xf32> to vector<8x1xf32>
    %cst_91 = arith.constant 3.200000e+01 : f32
    %245 = vector.broadcast %cst_91 : f32 to vector<8x1xf32>
    %246 = arith.divf %244, %245 : vector<8x1xf32>
    %247 = vector.broadcast %246 : vector<8x1xf32> to vector<8x32xf32>
    %248 = arith.subf %242, %247 : vector<8x32xf32>
    %249 = arith.mulf %248, %248 : vector<8x32xf32>
    %cst_92 = arith.constant dense<0.000000e+00> : vector<8xf32>
    %250 = vector.multi_reduction <add>, %249, %cst_92 [1] : vector<8x32xf32> to vector<8xf32>
    %251 = vector.shape_cast %250 : vector<8xf32> to vector<8x1xf32>
    %cst_93 = arith.constant 3.200000e+01 : f32
    %252 = vector.broadcast %cst_93 : f32 to vector<8x1xf32>
    %253 = arith.divf %251, %252 : vector<8x1xf32>
    %254 = vector.broadcast %246 : vector<8x1xf32> to vector<8x32xf32>
    %255 = arith.subf %242, %254 : vector<8x32xf32>
    %cst_94 = arith.constant 9.99999974E-6 : f32
    %256 = vector.broadcast %cst_94 : f32 to vector<8x1xf32>
    %257 = arith.addf %253, %256 : vector<8x1xf32>
    %258 = math.rsqrt %257 : vector<8x1xf32>
    %259 = vector.broadcast %258 : vector<8x1xf32> to vector<8x32xf32>
    %260 = arith.mulf %255, %259 : vector<8x32xf32>
    %261 = arith.mulf %260, %12 : vector<8x32xf32>
    %262 = arith.addf %261, %16 : vector<8x32xf32>
    %263 = arith.index_cast %c3_i32 : i32 to index
    %c0_95 = arith.constant 0 : index
    %c0_96 = arith.constant 0 : index
    %264 = vector.load %arg8[%263, %c0_95, %c0_96] : memref<8x8x32xf32, #tpu.memory_space<vmem>>, vector<1x8x32xf32>
    %265 = vector.shape_cast %264 : vector<1x8x32xf32> to vector<8x32xf32>
    %266 = vector.shape_cast %262 : vector<8x32xf32> to vector<1x8x32xf32>
    tpu.vector_store %arg8[%263, %c0_95, %c0_96], %266 {strides = array<i32>} : memref<8x8x32xf32, #tpu.memory_space<vmem>>, vector<1x8x32xf32>,
    %c4_i32 = arith.constant 4 : i32
    %267 = arith.index_cast %c4_i32 : i32 to index
    %c0_97 = arith.constant 0 : index
    %c0_98 = arith.constant 0 : index
    %268 = vector.load %arg9[%267, %c0_97, %c0_98] : memref<8x8x128xf32, #tpu.memory_space<vmem>>, vector<1x8x128xf32>
    %269 = vector.shape_cast %268 : vector<1x8x128xf32> to vector<8x128xf32>
    %270 = arith.truncf %238 : vector<8x32xf32> to vector<8x32xbf16>
    %cst_99 = arith.constant dense<0.000000e+00> : vector<8x128xf32>
    %271 = tpu.matmul %270, %6, %cst_99 {dimension_numbers = #tpu.dot_dimension_numbers<[1], [0], [0], [1], [0, 0, 1, 1], [], []>} : vector<8x32xbf16>, vector<32x128xbf16>, vector<8x128xf32> -> vector<8x128xf32>
    %272 = arith.addf %269, %271 : vector<8x128xf32>
    %273 = vector.extract_strided_slice %272 {offsets = [0, 0], sizes = [8, 32], strides = [1, 1]} : vector<8x128xf32> to vector<8x32xf32>
    %274 = arith.negf %273 : vector<8x32xf32>
    %275 = math.exp %274 : vector<8x32xf32>
    %cst_100 = arith.constant 1.000000e+00 : f32
    %276 = vector.broadcast %cst_100 : f32 to vector<8x32xf32>
    %277 = arith.addf %276, %275 : vector<8x32xf32>
    %278 = arith.divf %276, %277 : vector<8x32xf32>
    %279 = vector.extract_strided_slice %272 {offsets = [0, 32], sizes = [8, 32], strides = [1, 1]} : vector<8x128xf32> to vector<8x32xf32>
    %280 = arith.negf %279 : vector<8x32xf32>
    %281 = math.exp %280 : vector<8x32xf32>
    %cst_101 = arith.constant 1.000000e+00 : f32
    %282 = vector.broadcast %cst_101 : f32 to vector<8x32xf32>
    %283 = arith.addf %282, %281 : vector<8x32xf32>
    %284 = arith.divf %282, %283 : vector<8x32xf32>
    %285 = vector.extract_strided_slice %272 {offsets = [0, 64], sizes = [8, 32], strides = [1, 1]} : vector<8x128xf32> to vector<8x32xf32>
    %286 = math.tanh %285 : vector<8x32xf32>
    %287 = vector.extract_strided_slice %272 {offsets = [0, 96], sizes = [8, 32], strides = [1, 1]} : vector<8x128xf32> to vector<8x32xf32>
    %288 = arith.negf %287 : vector<8x32xf32>
    %289 = math.exp %288 : vector<8x32xf32>
    %cst_102 = arith.constant 1.000000e+00 : f32
    %290 = vector.broadcast %cst_102 : f32 to vector<8x32xf32>
    %291 = arith.addf %290, %289 : vector<8x32xf32>
    %292 = arith.divf %290, %291 : vector<8x32xf32>
    %293 = arith.mulf %284, %236 : vector<8x32xf32>
    %294 = arith.mulf %278, %286 : vector<8x32xf32>
    %295 = arith.addf %293, %294 : vector<8x32xf32>
    %296 = math.tanh %295 : vector<8x32xf32>
    %297 = arith.mulf %292, %296 : vector<8x32xf32>
    %298 = arith.index_cast %c4_i32 : i32 to index
    %c0_103 = arith.constant 0 : index
    %c0_104 = arith.constant 0 : index
    %299 = vector.load %arg8[%298, %c0_103, %c0_104] : memref<8x8x32xf32, #tpu.memory_space<vmem>>, vector<1x8x32xf32>
    %300 = vector.shape_cast %299 : vector<1x8x32xf32> to vector<8x32xf32>
    %301 = arith.addf %300, %297 : vector<8x32xf32>
    %cst_105 = arith.constant dense<0.000000e+00> : vector<8xf32>
    %302 = vector.multi_reduction <add>, %301, %cst_105 [1] : vector<8x32xf32> to vector<8xf32>
    %303 = vector.shape_cast %302 : vector<8xf32> to vector<8x1xf32>
    %cst_106 = arith.constant 3.200000e+01 : f32
    %304 = vector.broadcast %cst_106 : f32 to vector<8x1xf32>
    %305 = arith.divf %303, %304 : vector<8x1xf32>
    %306 = vector.broadcast %305 : vector<8x1xf32> to vector<8x32xf32>
    %307 = arith.subf %301, %306 : vector<8x32xf32>
    %308 = arith.mulf %307, %307 : vector<8x32xf32>
    %cst_107 = arith.constant dense<0.000000e+00> : vector<8xf32>
    %309 = vector.multi_reduction <add>, %308, %cst_107 [1] : vector<8x32xf32> to vector<8xf32>
    %310 = vector.shape_cast %309 : vector<8xf32> to vector<8x1xf32>
    %cst_108 = arith.constant 3.200000e+01 : f32
    %311 = vector.broadcast %cst_108 : f32 to vector<8x1xf32>
    %312 = arith.divf %310, %311 : vector<8x1xf32>
    %313 = vector.broadcast %305 : vector<8x1xf32> to vector<8x32xf32>
    %314 = arith.subf %301, %313 : vector<8x32xf32>
    %cst_109 = arith.constant 9.99999974E-6 : f32
    %315 = vector.broadcast %cst_109 : f32 to vector<8x1xf32>
    %316 = arith.addf %312, %315 : vector<8x1xf32>
    %317 = math.rsqrt %316 : vector<8x1xf32>
    %318 = vector.broadcast %317 : vector<8x1xf32> to vector<8x32xf32>
    %319 = arith.mulf %314, %318 : vector<8x32xf32>
    %320 = arith.mulf %319, %12 : vector<8x32xf32>
    %321 = arith.addf %320, %16 : vector<8x32xf32>
    %322 = arith.index_cast %c4_i32 : i32 to index
    %c0_110 = arith.constant 0 : index
    %c0_111 = arith.constant 0 : index
    %323 = vector.load %arg8[%322, %c0_110, %c0_111] : memref<8x8x32xf32, #tpu.memory_space<vmem>>, vector<1x8x32xf32>
    %324 = vector.shape_cast %323 : vector<1x8x32xf32> to vector<8x32xf32>
    %325 = vector.shape_cast %321 : vector<8x32xf32> to vector<1x8x32xf32>
    tpu.vector_store %arg8[%322, %c0_110, %c0_111], %325 {strides = array<i32>} : memref<8x8x32xf32, #tpu.memory_space<vmem>>, vector<1x8x32xf32>,
    %c5_i32 = arith.constant 5 : i32
    %326 = arith.index_cast %c5_i32 : i32 to index
    %c0_112 = arith.constant 0 : index
    %c0_113 = arith.constant 0 : index
    %327 = vector.load %arg9[%326, %c0_112, %c0_113] : memref<8x8x128xf32, #tpu.memory_space<vmem>>, vector<1x8x128xf32>
    %328 = vector.shape_cast %327 : vector<1x8x128xf32> to vector<8x128xf32>
    %329 = arith.truncf %297 : vector<8x32xf32> to vector<8x32xbf16>
    %cst_114 = arith.constant dense<0.000000e+00> : vector<8x128xf32>
    %330 = tpu.matmul %329, %6, %cst_114 {dimension_numbers = #tpu.dot_dimension_numbers<[1], [0], [0], [1], [0, 0, 1, 1], [], []>} : vector<8x32xbf16>, vector<32x128xbf16>, vector<8x128xf32> -> vector<8x128xf32>
    %331 = arith.addf %328, %330 : vector<8x128xf32>
    %332 = vector.extract_strided_slice %331 {offsets = [0, 0], sizes = [8, 32], strides = [1, 1]} : vector<8x128xf32> to vector<8x32xf32>
    %333 = arith.negf %332 : vector<8x32xf32>
    %334 = math.exp %333 : vector<8x32xf32>
    %cst_115 = arith.constant 1.000000e+00 : f32
    %335 = vector.broadcast %cst_115 : f32 to vector<8x32xf32>
    %336 = arith.addf %335, %334 : vector<8x32xf32>
    %337 = arith.divf %335, %336 : vector<8x32xf32>
    %338 = vector.extract_strided_slice %331 {offsets = [0, 32], sizes = [8, 32], strides = [1, 1]} : vector<8x128xf32> to vector<8x32xf32>
    %339 = arith.negf %338 : vector<8x32xf32>
    %340 = math.exp %339 : vector<8x32xf32>
    %cst_116 = arith.constant 1.000000e+00 : f32
    %341 = vector.broadcast %cst_116 : f32 to vector<8x32xf32>
    %342 = arith.addf %341, %340 : vector<8x32xf32>
    %343 = arith.divf %341, %342 : vector<8x32xf32>
    %344 = vector.extract_strided_slice %331 {offsets = [0, 64], sizes = [8, 32], strides = [1, 1]} : vector<8x128xf32> to vector<8x32xf32>
    %345 = math.tanh %344 : vector<8x32xf32>
    %346 = vector.extract_strided_slice %331 {offsets = [0, 96], sizes = [8, 32], strides = [1, 1]} : vector<8x128xf32> to vector<8x32xf32>
    %347 = arith.negf %346 : vector<8x32xf32>
    %348 = math.exp %347 : vector<8x32xf32>
    %cst_117 = arith.constant 1.000000e+00 : f32
    %349 = vector.broadcast %cst_117 : f32 to vector<8x32xf32>
    %350 = arith.addf %349, %348 : vector<8x32xf32>
    %351 = arith.divf %349, %350 : vector<8x32xf32>
    %352 = arith.mulf %343, %295 : vector<8x32xf32>
    %353 = arith.mulf %337, %345 : vector<8x32xf32>
    %354 = arith.addf %352, %353 : vector<8x32xf32>
    %355 = math.tanh %354 : vector<8x32xf32>
    %356 = arith.mulf %351, %355 : vector<8x32xf32>
    %357 = arith.index_cast %c5_i32 : i32 to index
    %c0_118 = arith.constant 0 : index
    %c0_119 = arith.constant 0 : index
    %358 = vector.load %arg8[%357, %c0_118, %c0_119] : memref<8x8x32xf32, #tpu.memory_space<vmem>>, vector<1x8x32xf32>
    %359 = vector.shape_cast %358 : vector<1x8x32xf32> to vector<8x32xf32>
    %360 = arith.addf %359, %356 : vector<8x32xf32>
    %cst_120 = arith.constant dense<0.000000e+00> : vector<8xf32>
    %361 = vector.multi_reduction <add>, %360, %cst_120 [1] : vector<8x32xf32> to vector<8xf32>
    %362 = vector.shape_cast %361 : vector<8xf32> to vector<8x1xf32>
    %cst_121 = arith.constant 3.200000e+01 : f32
    %363 = vector.broadcast %cst_121 : f32 to vector<8x1xf32>
    %364 = arith.divf %362, %363 : vector<8x1xf32>
    %365 = vector.broadcast %364 : vector<8x1xf32> to vector<8x32xf32>
    %366 = arith.subf %360, %365 : vector<8x32xf32>
    %367 = arith.mulf %366, %366 : vector<8x32xf32>
    %cst_122 = arith.constant dense<0.000000e+00> : vector<8xf32>
    %368 = vector.multi_reduction <add>, %367, %cst_122 [1] : vector<8x32xf32> to vector<8xf32>
    %369 = vector.shape_cast %368 : vector<8xf32> to vector<8x1xf32>
    %cst_123 = arith.constant 3.200000e+01 : f32
    %370 = vector.broadcast %cst_123 : f32 to vector<8x1xf32>
    %371 = arith.divf %369, %370 : vector<8x1xf32>
    %372 = vector.broadcast %364 : vector<8x1xf32> to vector<8x32xf32>
    %373 = arith.subf %360, %372 : vector<8x32xf32>
    %cst_124 = arith.constant 9.99999974E-6 : f32
    %374 = vector.broadcast %cst_124 : f32 to vector<8x1xf32>
    %375 = arith.addf %371, %374 : vector<8x1xf32>
    %376 = math.rsqrt %375 : vector<8x1xf32>
    %377 = vector.broadcast %376 : vector<8x1xf32> to vector<8x32xf32>
    %378 = arith.mulf %373, %377 : vector<8x32xf32>
    %379 = arith.mulf %378, %12 : vector<8x32xf32>
    %380 = arith.addf %379, %16 : vector<8x32xf32>
    %381 = arith.index_cast %c5_i32 : i32 to index
    %c0_125 = arith.constant 0 : index
    %c0_126 = arith.constant 0 : index
    %382 = vector.load %arg8[%381, %c0_125, %c0_126] : memref<8x8x32xf32, #tpu.memory_space<vmem>>, vector<1x8x32xf32>
    %383 = vector.shape_cast %382 : vector<1x8x32xf32> to vector<8x32xf32>
    %384 = vector.shape_cast %380 : vector<8x32xf32> to vector<1x8x32xf32>
    tpu.vector_store %arg8[%381, %c0_125, %c0_126], %384 {strides = array<i32>} : memref<8x8x32xf32, #tpu.memory_space<vmem>>, vector<1x8x32xf32>,
    %c6_i32 = arith.constant 6 : i32
    %385 = arith.index_cast %c6_i32 : i32 to index
    %c0_127 = arith.constant 0 : index
    %c0_128 = arith.constant 0 : index
    %386 = vector.load %arg9[%385, %c0_127, %c0_128] : memref<8x8x128xf32, #tpu.memory_space<vmem>>, vector<1x8x128xf32>
    %387 = vector.shape_cast %386 : vector<1x8x128xf32> to vector<8x128xf32>
    %388 = arith.truncf %356 : vector<8x32xf32> to vector<8x32xbf16>
    %cst_129 = arith.constant dense<0.000000e+00> : vector<8x128xf32>
    %389 = tpu.matmul %388, %6, %cst_129 {dimension_numbers = #tpu.dot_dimension_numbers<[1], [0], [0], [1], [0, 0, 1, 1], [], []>} : vector<8x32xbf16>, vector<32x128xbf16>, vector<8x128xf32> -> vector<8x128xf32>
    %390 = arith.addf %387, %389 : vector<8x128xf32>
    %391 = vector.extract_strided_slice %390 {offsets = [0, 0], sizes = [8, 32], strides = [1, 1]} : vector<8x128xf32> to vector<8x32xf32>
    %392 = arith.negf %391 : vector<8x32xf32>
    %393 = math.exp %392 : vector<8x32xf32>
    %cst_130 = arith.constant 1.000000e+00 : f32
    %394 = vector.broadcast %cst_130 : f32 to vector<8x32xf32>
    %395 = arith.addf %394, %393 : vector<8x32xf32>
    %396 = arith.divf %394, %395 : vector<8x32xf32>
    %397 = vector.extract_strided_slice %390 {offsets = [0, 32], sizes = [8, 32], strides = [1, 1]} : vector<8x128xf32> to vector<8x32xf32>
    %398 = arith.negf %397 : vector<8x32xf32>
    %399 = math.exp %398 : vector<8x32xf32>
    %cst_131 = arith.constant 1.000000e+00 : f32
    %400 = vector.broadcast %cst_131 : f32 to vector<8x32xf32>
    %401 = arith.addf %400, %399 : vector<8x32xf32>
    %402 = arith.divf %400, %401 : vector<8x32xf32>
    %403 = vector.extract_strided_slice %390 {offsets = [0, 64], sizes = [8, 32], strides = [1, 1]} : vector<8x128xf32> to vector<8x32xf32>
    %404 = math.tanh %403 : vector<8x32xf32>
    %405 = vector.extract_strided_slice %390 {offsets = [0, 96], sizes = [8, 32], strides = [1, 1]} : vector<8x128xf32> to vector<8x32xf32>
    %406 = arith.negf %405 : vector<8x32xf32>
    %407 = math.exp %406 : vector<8x32xf32>
    %cst_132 = arith.constant 1.000000e+00 : f32
    %408 = vector.broadcast %cst_132 : f32 to vector<8x32xf32>
    %409 = arith.addf %408, %407 : vector<8x32xf32>
    %410 = arith.divf %408, %409 : vector<8x32xf32>
    %411 = arith.mulf %402, %354 : vector<8x32xf32>
    %412 = arith.mulf %396, %404 : vector<8x32xf32>
    %413 = arith.addf %411, %412 : vector<8x32xf32>
    %414 = math.tanh %413 : vector<8x32xf32>
    %415 = arith.mulf %410, %414 : vector<8x32xf32>
    %416 = arith.index_cast %c6_i32 : i32 to index
    %c0_133 = arith.constant 0 : index
    %c0_134 = arith.constant 0 : index
    %417 = vector.load %arg8[%416, %c0_133, %c0_134] : memref<8x8x32xf32, #tpu.memory_space<vmem>>, vector<1x8x32xf32>
    %418 = vector.shape_cast %417 : vector<1x8x32xf32> to vector<8x32xf32>
    %419 = arith.addf %418, %415 : vector<8x32xf32>
    %cst_135 = arith.constant dense<0.000000e+00> : vector<8xf32>
    %420 = vector.multi_reduction <add>, %419, %cst_135 [1] : vector<8x32xf32> to vector<8xf32>
    %421 = vector.shape_cast %420 : vector<8xf32> to vector<8x1xf32>
    %cst_136 = arith.constant 3.200000e+01 : f32
    %422 = vector.broadcast %cst_136 : f32 to vector<8x1xf32>
    %423 = arith.divf %421, %422 : vector<8x1xf32>
    %424 = vector.broadcast %423 : vector<8x1xf32> to vector<8x32xf32>
    %425 = arith.subf %419, %424 : vector<8x32xf32>
    %426 = arith.mulf %425, %425 : vector<8x32xf32>
    %cst_137 = arith.constant dense<0.000000e+00> : vector<8xf32>
    %427 = vector.multi_reduction <add>, %426, %cst_137 [1] : vector<8x32xf32> to vector<8xf32>
    %428 = vector.shape_cast %427 : vector<8xf32> to vector<8x1xf32>
    %cst_138 = arith.constant 3.200000e+01 : f32
    %429 = vector.broadcast %cst_138 : f32 to vector<8x1xf32>
    %430 = arith.divf %428, %429 : vector<8x1xf32>
    %431 = vector.broadcast %423 : vector<8x1xf32> to vector<8x32xf32>
    %432 = arith.subf %419, %431 : vector<8x32xf32>
    %cst_139 = arith.constant 9.99999974E-6 : f32
    %433 = vector.broadcast %cst_139 : f32 to vector<8x1xf32>
    %434 = arith.addf %430, %433 : vector<8x1xf32>
    %435 = math.rsqrt %434 : vector<8x1xf32>
    %436 = vector.broadcast %435 : vector<8x1xf32> to vector<8x32xf32>
    %437 = arith.mulf %432, %436 : vector<8x32xf32>
    %438 = arith.mulf %437, %12 : vector<8x32xf32>
    %439 = arith.addf %438, %16 : vector<8x32xf32>
    %440 = arith.index_cast %c6_i32 : i32 to index
    %c0_140 = arith.constant 0 : index
    %c0_141 = arith.constant 0 : index
    %441 = vector.load %arg8[%440, %c0_140, %c0_141] : memref<8x8x32xf32, #tpu.memory_space<vmem>>, vector<1x8x32xf32>
    %442 = vector.shape_cast %441 : vector<1x8x32xf32> to vector<8x32xf32>
    %443 = vector.shape_cast %439 : vector<8x32xf32> to vector<1x8x32xf32>
    tpu.vector_store %arg8[%440, %c0_140, %c0_141], %443 {strides = array<i32>} : memref<8x8x32xf32, #tpu.memory_space<vmem>>, vector<1x8x32xf32>,
    %c7_i32 = arith.constant 7 : i32
    %444 = arith.index_cast %c7_i32 : i32 to index
    %c0_142 = arith.constant 0 : index
    %c0_143 = arith.constant 0 : index
    %445 = vector.load %arg9[%444, %c0_142, %c0_143] : memref<8x8x128xf32, #tpu.memory_space<vmem>>, vector<1x8x128xf32>
    %446 = vector.shape_cast %445 : vector<1x8x128xf32> to vector<8x128xf32>
    %447 = arith.truncf %415 : vector<8x32xf32> to vector<8x32xbf16>
    %cst_144 = arith.constant dense<0.000000e+00> : vector<8x128xf32>
    %448 = tpu.matmul %447, %6, %cst_144 {dimension_numbers = #tpu.dot_dimension_numbers<[1], [0], [0], [1], [0, 0, 1, 1], [], []>} : vector<8x32xbf16>, vector<32x128xbf16>, vector<8x128xf32> -> vector<8x128xf32>
    %449 = arith.addf %446, %448 : vector<8x128xf32>
    %450 = vector.extract_strided_slice %449 {offsets = [0, 0], sizes = [8, 32], strides = [1, 1]} : vector<8x128xf32> to vector<8x32xf32>
    %451 = arith.negf %450 : vector<8x32xf32>
    %452 = math.exp %451 : vector<8x32xf32>
    %cst_145 = arith.constant 1.000000e+00 : f32
    %453 = vector.broadcast %cst_145 : f32 to vector<8x32xf32>
    %454 = arith.addf %453, %452 : vector<8x32xf32>
    %455 = arith.divf %453, %454 : vector<8x32xf32>
    %456 = vector.extract_strided_slice %449 {offsets = [0, 32], sizes = [8, 32], strides = [1, 1]} : vector<8x128xf32> to vector<8x32xf32>
    %457 = arith.negf %456 : vector<8x32xf32>
    %458 = math.exp %457 : vector<8x32xf32>
    %cst_146 = arith.constant 1.000000e+00 : f32
    %459 = vector.broadcast %cst_146 : f32 to vector<8x32xf32>
    %460 = arith.addf %459, %458 : vector<8x32xf32>
    %461 = arith.divf %459, %460 : vector<8x32xf32>
    %462 = vector.extract_strided_slice %449 {offsets = [0, 64], sizes = [8, 32], strides = [1, 1]} : vector<8x128xf32> to vector<8x32xf32>
    %463 = math.tanh %462 : vector<8x32xf32>
    %464 = vector.extract_strided_slice %449 {offsets = [0, 96], sizes = [8, 32], strides = [1, 1]} : vector<8x128xf32> to vector<8x32xf32>
    %465 = arith.negf %464 : vector<8x32xf32>
    %466 = math.exp %465 : vector<8x32xf32>
    %cst_147 = arith.constant 1.000000e+00 : f32
    %467 = vector.broadcast %cst_147 : f32 to vector<8x32xf32>
    %468 = arith.addf %467, %466 : vector<8x32xf32>
    %469 = arith.divf %467, %468 : vector<8x32xf32>
    %470 = arith.mulf %461, %413 : vector<8x32xf32>
    %471 = arith.mulf %455, %463 : vector<8x32xf32>
    %472 = arith.addf %470, %471 : vector<8x32xf32>
    %473 = math.tanh %472 : vector<8x32xf32>
    %474 = arith.mulf %469, %473 : vector<8x32xf32>
    %475 = arith.index_cast %c7_i32 : i32 to index
    %c0_148 = arith.constant 0 : index
    %c0_149 = arith.constant 0 : index
    %476 = vector.load %arg8[%475, %c0_148, %c0_149] : memref<8x8x32xf32, #tpu.memory_space<vmem>>, vector<1x8x32xf32>
    %477 = vector.shape_cast %476 : vector<1x8x32xf32> to vector<8x32xf32>
    %478 = arith.addf %477, %474 : vector<8x32xf32>
    %cst_150 = arith.constant dense<0.000000e+00> : vector<8xf32>
    %479 = vector.multi_reduction <add>, %478, %cst_150 [1] : vector<8x32xf32> to vector<8xf32>
    %480 = vector.shape_cast %479 : vector<8xf32> to vector<8x1xf32>
    %cst_151 = arith.constant 3.200000e+01 : f32
    %481 = vector.broadcast %cst_151 : f32 to vector<8x1xf32>
    %482 = arith.divf %480, %481 : vector<8x1xf32>
    %483 = vector.broadcast %482 : vector<8x1xf32> to vector<8x32xf32>
    %484 = arith.subf %478, %483 : vector<8x32xf32>
    %485 = arith.mulf %484, %484 : vector<8x32xf32>
    %cst_152 = arith.constant dense<0.000000e+00> : vector<8xf32>
    %486 = vector.multi_reduction <add>, %485, %cst_152 [1] : vector<8x32xf32> to vector<8xf32>
    %487 = vector.shape_cast %486 : vector<8xf32> to vector<8x1xf32>
    %cst_153 = arith.constant 3.200000e+01 : f32
    %488 = vector.broadcast %cst_153 : f32 to vector<8x1xf32>
    %489 = arith.divf %487, %488 : vector<8x1xf32>
    %490 = vector.broadcast %482 : vector<8x1xf32> to vector<8x32xf32>
    %491 = arith.subf %478, %490 : vector<8x32xf32>
    %cst_154 = arith.constant 9.99999974E-6 : f32
    %492 = vector.broadcast %cst_154 : f32 to vector<8x1xf32>
    %493 = arith.addf %489, %492 : vector<8x1xf32>
    %494 = math.rsqrt %493 : vector<8x1xf32>
    %495 = vector.broadcast %494 : vector<8x1xf32> to vector<8x32xf32>
    %496 = arith.mulf %491, %495 : vector<8x32xf32>
    %497 = arith.mulf %496, %12 : vector<8x32xf32>
    %498 = arith.addf %497, %16 : vector<8x32xf32>
    %499 = arith.index_cast %c7_i32 : i32 to index
    %c0_155 = arith.constant 0 : index
    %c0_156 = arith.constant 0 : index
    %500 = vector.load %arg8[%499, %c0_155, %c0_156] : memref<8x8x32xf32, #tpu.memory_space<vmem>>, vector<1x8x32xf32>
    %501 = vector.shape_cast %500 : vector<1x8x32xf32> to vector<8x32xf32>
    %502 = vector.shape_cast %498 : vector<8x32xf32> to vector<1x8x32xf32>
    tpu.vector_store %arg8[%499, %c0_155, %c0_156], %502 {strides = array<i32>} : memref<8x8x32xf32, #tpu.memory_space<vmem>>, vector<1x8x32xf32>,
    %c8_i32 = arith.constant 8 : i32
    %c1 = arith.constant 1 : index
    %c0_157 = arith.constant 0 : index
    %c0_158 = arith.constant 0 : index
    %503 = vector.load %arg3[%c1, %c0_157, %c0_158] : memref<3x32x128xbf16, #tpu.memory_space<vmem>>, vector<1x32x128xbf16>
    %504 = vector.shape_cast %503 : vector<1x32x128xbf16> to vector<32x128xbf16>
    %c1_159 = arith.constant 1 : index
    %c0_160 = arith.constant 0 : index
    %c0_161 = arith.constant 0 : index
    %505 = vector.load %arg4[%c1_159, %c0_160, %c0_161] : memref<3x32x128xbf16, #tpu.memory_space<vmem>>, vector<1x32x128xbf16>
    %506 = vector.shape_cast %505 : vector<1x32x128xbf16> to vector<32x128xbf16>
    %c1_162 = arith.constant 1 : index
    %c0_163 = arith.constant 0 : index
    %c0_164 = arith.constant 0 : index
    %507 = vector.load %arg5[%c1_162, %c0_163, %c0_164] : memref<3x1x128xf32, #tpu.memory_space<vmem>>, vector<1x1x128xf32>
    %508 = vector.shape_cast %507 : vector<1x1x128xf32> to vector<1x128xf32>
    %c1_165 = arith.constant 1 : index
    %c0_166 = arith.constant 0 : index
    %c0_167 = arith.constant 0 : index
    %509 = vector.load %arg6[%c1_165, %c0_166, %c0_167] : memref<3x1x32xf32, #tpu.memory_space<vmem>>, vector<1x1x32xf32>
    %510 = vector.shape_cast %509 : vector<1x1x32xf32> to vector<1x32xf32>
    %511 = vector.shape_cast %510 : vector<1x32xf32> to vector<1x32xf32>
    %512 = vector.broadcast %511 : vector<1x32xf32> to vector<8x32xf32>
    %c1_168 = arith.constant 1 : index
    %c0_169 = arith.constant 0 : index
    %c0_170 = arith.constant 0 : index
    %513 = vector.load %arg7[%c1_168, %c0_169, %c0_170] : memref<3x1x32xf32, #tpu.memory_space<vmem>>, vector<1x1x32xf32>
    %514 = vector.shape_cast %513 : vector<1x1x32xf32> to vector<1x32xf32>
    %515 = vector.shape_cast %514 : vector<1x32xf32> to vector<1x32xf32>
    %516 = vector.broadcast %515 : vector<1x32xf32> to vector<8x32xf32>
    %c0_171 = arith.constant 0 : index
    %c0_172 = arith.constant 0 : index
    %c0_173 = arith.constant 0 : index
    %517 = vector.load %arg8[%c0_171, %c0_172, %c0_173] : memref<8x8x32xf32, #tpu.memory_space<vmem>>, vector<8x8x32xf32>
    %518 = vector.broadcast %0 : vector<8x8x1xf32> to vector<8x8x32xf32>
    %519 = arith.mulf %517, %518 : vector<8x8x32xf32>
    %c0_174 = arith.constant 0 : index
    %c0_175 = arith.constant 0 : index
    %c0_176 = arith.constant 0 : index
    %520 = vector.load %arg8[%c0_174, %c0_175, %c0_176] : memref<8x8x32xf32, #tpu.memory_space<vmem>>, vector<8x8x32xf32>
    tpu.vector_store %arg8[%c0_174, %c0_175, %c0_176], %519 {strides = array<i32>} : memref<8x8x32xf32, #tpu.memory_space<vmem>>, vector<8x8x32xf32>,
    %c0_177 = arith.constant 0 : index
    %c0_178 = arith.constant 0 : index
    %c0_179 = arith.constant 0 : index
    %521 = vector.load %arg8[%c0_177, %c0_178, %c0_179] : memref<8x8x32xf32, #tpu.memory_space<vmem>>, vector<8x8x32xf32>
    %522 = vector.shape_cast %521 : vector<8x8x32xf32> to vector<64x32xf32>
    %523 = arith.truncf %522 : vector<64x32xf32> to vector<64x32xbf16>
    %cst_180 = arith.constant dense<0.000000e+00> : vector<64x128xf32>
    %524 = tpu.matmul %523, %504, %cst_180 {dimension_numbers = #tpu.dot_dimension_numbers<[1], [0], [0], [1], [0, 0, 1, 1], [], []>} : vector<64x32xbf16>, vector<32x128xbf16>, vector<64x128xf32> -> vector<64x128xf32>
    %525 = vector.broadcast %508 : vector<1x128xf32> to vector<64x128xf32>
    %526 = arith.addf %524, %525 : vector<64x128xf32>
    %527 = vector.shape_cast %526 : vector<64x128xf32> to vector<8x8x128xf32>
    %c0_181 = arith.constant 0 : index
    %c0_182 = arith.constant 0 : index
    %c0_183 = arith.constant 0 : index
    %528 = vector.load %arg9[%c0_181, %c0_182, %c0_183] : memref<8x8x128xf32, #tpu.memory_space<vmem>>, vector<8x8x128xf32>
    tpu.vector_store %arg9[%c0_181, %c0_182, %c0_183], %527 {strides = array<i32>} : memref<8x8x128xf32, #tpu.memory_space<vmem>>, vector<8x8x128xf32>,
    %cst_184 = arith.constant 0.000000e+00 : f32
    %529 = vector.broadcast %cst_184 : f32 to vector<8x32xf32>
    %cst_185 = arith.constant 0.000000e+00 : f32
    %530 = vector.broadcast %cst_185 : f32 to vector<8x32xf32>
    %c0_i32_186 = arith.constant 0 : i32
    %531 = arith.index_cast %c0_i32_186 : i32 to index
    %c0_187 = arith.constant 0 : index
    %c0_188 = arith.constant 0 : index
    %532 = vector.load %arg9[%531, %c0_187, %c0_188] : memref<8x8x128xf32, #tpu.memory_space<vmem>>, vector<1x8x128xf32>
    %533 = vector.shape_cast %532 : vector<1x8x128xf32> to vector<8x128xf32>
    %534 = arith.truncf %529 : vector<8x32xf32> to vector<8x32xbf16>
    %cst_189 = arith.constant dense<0.000000e+00> : vector<8x128xf32>
    %535 = tpu.matmul %534, %506, %cst_189 {dimension_numbers = #tpu.dot_dimension_numbers<[1], [0], [0], [1], [0, 0, 1, 1], [], []>} : vector<8x32xbf16>, vector<32x128xbf16>, vector<8x128xf32> -> vector<8x128xf32>
    %536 = arith.addf %533, %535 : vector<8x128xf32>
    %537 = vector.extract_strided_slice %536 {offsets = [0, 0], sizes = [8, 32], strides = [1, 1]} : vector<8x128xf32> to vector<8x32xf32>
    %538 = arith.negf %537 : vector<8x32xf32>
    %539 = math.exp %538 : vector<8x32xf32>
    %cst_190 = arith.constant 1.000000e+00 : f32
    %540 = vector.broadcast %cst_190 : f32 to vector<8x32xf32>
    %541 = arith.addf %540, %539 : vector<8x32xf32>
    %542 = arith.divf %540, %541 : vector<8x32xf32>
    %543 = vector.extract_strided_slice %536 {offsets = [0, 32], sizes = [8, 32], strides = [1, 1]} : vector<8x128xf32> to vector<8x32xf32>
    %544 = arith.negf %543 : vector<8x32xf32>
    %545 = math.exp %544 : vector<8x32xf32>
    %cst_191 = arith.constant 1.000000e+00 : f32
    %546 = vector.broadcast %cst_191 : f32 to vector<8x32xf32>
    %547 = arith.addf %546, %545 : vector<8x32xf32>
    %548 = arith.divf %546, %547 : vector<8x32xf32>
    %549 = vector.extract_strided_slice %536 {offsets = [0, 64], sizes = [8, 32], strides = [1, 1]} : vector<8x128xf32> to vector<8x32xf32>
    %550 = math.tanh %549 : vector<8x32xf32>
    %551 = vector.extract_strided_slice %536 {offsets = [0, 96], sizes = [8, 32], strides = [1, 1]} : vector<8x128xf32> to vector<8x32xf32>
    %552 = arith.negf %551 : vector<8x32xf32>
    %553 = math.exp %552 : vector<8x32xf32>
    %cst_192 = arith.constant 1.000000e+00 : f32
    %554 = vector.broadcast %cst_192 : f32 to vector<8x32xf32>
    %555 = arith.addf %554, %553 : vector<8x32xf32>
    %556 = arith.divf %554, %555 : vector<8x32xf32>
    %557 = arith.mulf %548, %530 : vector<8x32xf32>
    %558 = arith.mulf %542, %550 : vector<8x32xf32>
    %559 = arith.addf %557, %558 : vector<8x32xf32>
    %560 = math.tanh %559 : vector<8x32xf32>
    %561 = arith.mulf %556, %560 : vector<8x32xf32>
    %562 = arith.index_cast %c0_i32_186 : i32 to index
    %c0_193 = arith.constant 0 : index
    %c0_194 = arith.constant 0 : index
    %563 = vector.load %arg8[%562, %c0_193, %c0_194] : memref<8x8x32xf32, #tpu.memory_space<vmem>>, vector<1x8x32xf32>
    %564 = vector.shape_cast %563 : vector<1x8x32xf32> to vector<8x32xf32>
    %565 = arith.addf %564, %561 : vector<8x32xf32>
    %cst_195 = arith.constant dense<0.000000e+00> : vector<8xf32>
    %566 = vector.multi_reduction <add>, %565, %cst_195 [1] : vector<8x32xf32> to vector<8xf32>
    %567 = vector.shape_cast %566 : vector<8xf32> to vector<8x1xf32>
    %cst_196 = arith.constant 3.200000e+01 : f32
    %568 = vector.broadcast %cst_196 : f32 to vector<8x1xf32>
    %569 = arith.divf %567, %568 : vector<8x1xf32>
    %570 = vector.broadcast %569 : vector<8x1xf32> to vector<8x32xf32>
    %571 = arith.subf %565, %570 : vector<8x32xf32>
    %572 = arith.mulf %571, %571 : vector<8x32xf32>
    %cst_197 = arith.constant dense<0.000000e+00> : vector<8xf32>
    %573 = vector.multi_reduction <add>, %572, %cst_197 [1] : vector<8x32xf32> to vector<8xf32>
    %574 = vector.shape_cast %573 : vector<8xf32> to vector<8x1xf32>
    %cst_198 = arith.constant 3.200000e+01 : f32
    %575 = vector.broadcast %cst_198 : f32 to vector<8x1xf32>
    %576 = arith.divf %574, %575 : vector<8x1xf32>
    %577 = vector.broadcast %569 : vector<8x1xf32> to vector<8x32xf32>
    %578 = arith.subf %565, %577 : vector<8x32xf32>
    %cst_199 = arith.constant 9.99999974E-6 : f32
    %579 = vector.broadcast %cst_199 : f32 to vector<8x1xf32>
    %580 = arith.addf %576, %579 : vector<8x1xf32>
    %581 = math.rsqrt %580 : vector<8x1xf32>
    %582 = vector.broadcast %581 : vector<8x1xf32> to vector<8x32xf32>
    %583 = arith.mulf %578, %582 : vector<8x32xf32>
    %584 = arith.mulf %583, %512 : vector<8x32xf32>
    %585 = arith.addf %584, %516 : vector<8x32xf32>
    %586 = arith.index_cast %c0_i32_186 : i32 to index
    %c0_200 = arith.constant 0 : index
    %c0_201 = arith.constant 0 : index
    %587 = vector.load %arg8[%586, %c0_200, %c0_201] : memref<8x8x32xf32, #tpu.memory_space<vmem>>, vector<1x8x32xf32>
    %588 = vector.shape_cast %587 : vector<1x8x32xf32> to vector<8x32xf32>
    %589 = vector.shape_cast %585 : vector<8x32xf32> to vector<1x8x32xf32>
    tpu.vector_store %arg8[%586, %c0_200, %c0_201], %589 {strides = array<i32>} : memref<8x8x32xf32, #tpu.memory_space<vmem>>, vector<1x8x32xf32>,
    %c1_i32_202 = arith.constant 1 : i32
    %590 = arith.index_cast %c1_i32_202 : i32 to index
    %c0_203 = arith.constant 0 : index
    %c0_204 = arith.constant 0 : index
    %591 = vector.load %arg9[%590, %c0_203, %c0_204] : memref<8x8x128xf32, #tpu.memory_space<vmem>>, vector<1x8x128xf32>
    %592 = vector.shape_cast %591 : vector<1x8x128xf32> to vector<8x128xf32>
    %593 = arith.truncf %561 : vector<8x32xf32> to vector<8x32xbf16>
    %cst_205 = arith.constant dense<0.000000e+00> : vector<8x128xf32>
    %594 = tpu.matmul %593, %506, %cst_205 {dimension_numbers = #tpu.dot_dimension_numbers<[1], [0], [0], [1], [0, 0, 1, 1], [], []>} : vector<8x32xbf16>, vector<32x128xbf16>, vector<8x128xf32> -> vector<8x128xf32>
    %595 = arith.addf %592, %594 : vector<8x128xf32>
    %596 = vector.extract_strided_slice %595 {offsets = [0, 0], sizes = [8, 32], strides = [1, 1]} : vector<8x128xf32> to vector<8x32xf32>
    %597 = arith.negf %596 : vector<8x32xf32>
    %598 = math.exp %597 : vector<8x32xf32>
    %cst_206 = arith.constant 1.000000e+00 : f32
    %599 = vector.broadcast %cst_206 : f32 to vector<8x32xf32>
    %600 = arith.addf %599, %598 : vector<8x32xf32>
    %601 = arith.divf %599, %600 : vector<8x32xf32>
    %602 = vector.extract_strided_slice %595 {offsets = [0, 32], sizes = [8, 32], strides = [1, 1]} : vector<8x128xf32> to vector<8x32xf32>
    %603 = arith.negf %602 : vector<8x32xf32>
    %604 = math.exp %603 : vector<8x32xf32>
    %cst_207 = arith.constant 1.000000e+00 : f32
    %605 = vector.broadcast %cst_207 : f32 to vector<8x32xf32>
    %606 = arith.addf %605, %604 : vector<8x32xf32>
    %607 = arith.divf %605, %606 : vector<8x32xf32>
    %608 = vector.extract_strided_slice %595 {offsets = [0, 64], sizes = [8, 32], strides = [1, 1]} : vector<8x128xf32> to vector<8x32xf32>
    %609 = math.tanh %608 : vector<8x32xf32>
    %610 = vector.extract_strided_slice %595 {offsets = [0, 96], sizes = [8, 32], strides = [1, 1]} : vector<8x128xf32> to vector<8x32xf32>
    %611 = arith.negf %610 : vector<8x32xf32>
    %612 = math.exp %611 : vector<8x32xf32>
    %cst_208 = arith.constant 1.000000e+00 : f32
    %613 = vector.broadcast %cst_208 : f32 to vector<8x32xf32>
    %614 = arith.addf %613, %612 : vector<8x32xf32>
    %615 = arith.divf %613, %614 : vector<8x32xf32>
    %616 = arith.mulf %607, %559 : vector<8x32xf32>
    %617 = arith.mulf %601, %609 : vector<8x32xf32>
    %618 = arith.addf %616, %617 : vector<8x32xf32>
    %619 = math.tanh %618 : vector<8x32xf32>
    %620 = arith.mulf %615, %619 : vector<8x32xf32>
    %621 = arith.index_cast %c1_i32_202 : i32 to index
    %c0_209 = arith.constant 0 : index
    %c0_210 = arith.constant 0 : index
    %622 = vector.load %arg8[%621, %c0_209, %c0_210] : memref<8x8x32xf32, #tpu.memory_space<vmem>>, vector<1x8x32xf32>
    %623 = vector.shape_cast %622 : vector<1x8x32xf32> to vector<8x32xf32>
    %624 = arith.addf %623, %620 : vector<8x32xf32>
    %cst_211 = arith.constant dense<0.000000e+00> : vector<8xf32>
    %625 = vector.multi_reduction <add>, %624, %cst_211 [1] : vector<8x32xf32> to vector<8xf32>
    %626 = vector.shape_cast %625 : vector<8xf32> to vector<8x1xf32>
    %cst_212 = arith.constant 3.200000e+01 : f32
    %627 = vector.broadcast %cst_212 : f32 to vector<8x1xf32>
    %628 = arith.divf %626, %627 : vector<8x1xf32>
    %629 = vector.broadcast %628 : vector<8x1xf32> to vector<8x32xf32>
    %630 = arith.subf %624, %629 : vector<8x32xf32>
    %631 = arith.mulf %630, %630 : vector<8x32xf32>
    %cst_213 = arith.constant dense<0.000000e+00> : vector<8xf32>
    %632 = vector.multi_reduction <add>, %631, %cst_213 [1] : vector<8x32xf32> to vector<8xf32>
    %633 = vector.shape_cast %632 : vector<8xf32> to vector<8x1xf32>
    %cst_214 = arith.constant 3.200000e+01 : f32
    %634 = vector.broadcast %cst_214 : f32 to vector<8x1xf32>
    %635 = arith.divf %633, %634 : vector<8x1xf32>
    %636 = vector.broadcast %628 : vector<8x1xf32> to vector<8x32xf32>
    %637 = arith.subf %624, %636 : vector<8x32xf32>
    %cst_215 = arith.constant 9.99999974E-6 : f32
    %638 = vector.broadcast %cst_215 : f32 to vector<8x1xf32>
    %639 = arith.addf %635, %638 : vector<8x1xf32>
    %640 = math.rsqrt %639 : vector<8x1xf32>
    %641 = vector.broadcast %640 : vector<8x1xf32> to vector<8x32xf32>
    %642 = arith.mulf %637, %641 : vector<8x32xf32>
    %643 = arith.mulf %642, %512 : vector<8x32xf32>
    %644 = arith.addf %643, %516 : vector<8x32xf32>
    %645 = arith.index_cast %c1_i32_202 : i32 to index
    %c0_216 = arith.constant 0 : index
    %c0_217 = arith.constant 0 : index
    %646 = vector.load %arg8[%645, %c0_216, %c0_217] : memref<8x8x32xf32, #tpu.memory_space<vmem>>, vector<1x8x32xf32>
    %647 = vector.shape_cast %646 : vector<1x8x32xf32> to vector<8x32xf32>
    %648 = vector.shape_cast %644 : vector<8x32xf32> to vector<1x8x32xf32>
    tpu.vector_store %arg8[%645, %c0_216, %c0_217], %648 {strides = array<i32>} : memref<8x8x32xf32, #tpu.memory_space<vmem>>, vector<1x8x32xf32>,
    %c2_i32_218 = arith.constant 2 : i32
    %649 = arith.index_cast %c2_i32_218 : i32 to index
    %c0_219 = arith.constant 0 : index
    %c0_220 = arith.constant 0 : index
    %650 = vector.load %arg9[%649, %c0_219, %c0_220] : memref<8x8x128xf32, #tpu.memory_space<vmem>>, vector<1x8x128xf32>
    %651 = vector.shape_cast %650 : vector<1x8x128xf32> to vector<8x128xf32>
    %652 = arith.truncf %620 : vector<8x32xf32> to vector<8x32xbf16>
    %cst_221 = arith.constant dense<0.000000e+00> : vector<8x128xf32>
    %653 = tpu.matmul %652, %506, %cst_221 {dimension_numbers = #tpu.dot_dimension_numbers<[1], [0], [0], [1], [0, 0, 1, 1], [], []>} : vector<8x32xbf16>, vector<32x128xbf16>, vector<8x128xf32> -> vector<8x128xf32>
    %654 = arith.addf %651, %653 : vector<8x128xf32>
    %655 = vector.extract_strided_slice %654 {offsets = [0, 0], sizes = [8, 32], strides = [1, 1]} : vector<8x128xf32> to vector<8x32xf32>
    %656 = arith.negf %655 : vector<8x32xf32>
    %657 = math.exp %656 : vector<8x32xf32>
    %cst_222 = arith.constant 1.000000e+00 : f32
    %658 = vector.broadcast %cst_222 : f32 to vector<8x32xf32>
    %659 = arith.addf %658, %657 : vector<8x32xf32>
    %660 = arith.divf %658, %659 : vector<8x32xf32>
    %661 = vector.extract_strided_slice %654 {offsets = [0, 32], sizes = [8, 32], strides = [1, 1]} : vector<8x128xf32> to vector<8x32xf32>
    %662 = arith.negf %661 : vector<8x32xf32>
    %663 = math.exp %662 : vector<8x32xf32>
    %cst_223 = arith.constant 1.000000e+00 : f32
    %664 = vector.broadcast %cst_223 : f32 to vector<8x32xf32>
    %665 = arith.addf %664, %663 : vector<8x32xf32>
    %666 = arith.divf %664, %665 : vector<8x32xf32>
    %667 = vector.extract_strided_slice %654 {offsets = [0, 64], sizes = [8, 32], strides = [1, 1]} : vector<8x128xf32> to vector<8x32xf32>
    %668 = math.tanh %667 : vector<8x32xf32>
    %669 = vector.extract_strided_slice %654 {offsets = [0, 96], sizes = [8, 32], strides = [1, 1]} : vector<8x128xf32> to vector<8x32xf32>
    %670 = arith.negf %669 : vector<8x32xf32>
    %671 = math.exp %670 : vector<8x32xf32>
    %cst_224 = arith.constant 1.000000e+00 : f32
    %672 = vector.broadcast %cst_224 : f32 to vector<8x32xf32>
    %673 = arith.addf %672, %671 : vector<8x32xf32>
    %674 = arith.divf %672, %673 : vector<8x32xf32>
    %675 = arith.mulf %666, %618 : vector<8x32xf32>
    %676 = arith.mulf %660, %668 : vector<8x32xf32>
    %677 = arith.addf %675, %676 : vector<8x32xf32>
    %678 = math.tanh %677 : vector<8x32xf32>
    %679 = arith.mulf %674, %678 : vector<8x32xf32>
    %680 = arith.index_cast %c2_i32_218 : i32 to index
    %c0_225 = arith.constant 0 : index
    %c0_226 = arith.constant 0 : index
    %681 = vector.load %arg8[%680, %c0_225, %c0_226] : memref<8x8x32xf32, #tpu.memory_space<vmem>>, vector<1x8x32xf32>
    %682 = vector.shape_cast %681 : vector<1x8x32xf32> to vector<8x32xf32>
    %683 = arith.addf %682, %679 : vector<8x32xf32>
    %cst_227 = arith.constant dense<0.000000e+00> : vector<8xf32>
    %684 = vector.multi_reduction <add>, %683, %cst_227 [1] : vector<8x32xf32> to vector<8xf32>
    %685 = vector.shape_cast %684 : vector<8xf32> to vector<8x1xf32>
    %cst_228 = arith.constant 3.200000e+01 : f32
    %686 = vector.broadcast %cst_228 : f32 to vector<8x1xf32>
    %687 = arith.divf %685, %686 : vector<8x1xf32>
    %688 = vector.broadcast %687 : vector<8x1xf32> to vector<8x32xf32>
    %689 = arith.subf %683, %688 : vector<8x32xf32>
    %690 = arith.mulf %689, %689 : vector<8x32xf32>
    %cst_229 = arith.constant dense<0.000000e+00> : vector<8xf32>
    %691 = vector.multi_reduction <add>, %690, %cst_229 [1] : vector<8x32xf32> to vector<8xf32>
    %692 = vector.shape_cast %691 : vector<8xf32> to vector<8x1xf32>
    %cst_230 = arith.constant 3.200000e+01 : f32
    %693 = vector.broadcast %cst_230 : f32 to vector<8x1xf32>
    %694 = arith.divf %692, %693 : vector<8x1xf32>
    %695 = vector.broadcast %687 : vector<8x1xf32> to vector<8x32xf32>
    %696 = arith.subf %683, %695 : vector<8x32xf32>
    %cst_231 = arith.constant 9.99999974E-6 : f32
    %697 = vector.broadcast %cst_231 : f32 to vector<8x1xf32>
    %698 = arith.addf %694, %697 : vector<8x1xf32>
    %699 = math.rsqrt %698 : vector<8x1xf32>
    %700 = vector.broadcast %699 : vector<8x1xf32> to vector<8x32xf32>
    %701 = arith.mulf %696, %700 : vector<8x32xf32>
    %702 = arith.mulf %701, %512 : vector<8x32xf32>
    %703 = arith.addf %702, %516 : vector<8x32xf32>
    %704 = arith.index_cast %c2_i32_218 : i32 to index
    %c0_232 = arith.constant 0 : index
    %c0_233 = arith.constant 0 : index
    %705 = vector.load %arg8[%704, %c0_232, %c0_233] : memref<8x8x32xf32, #tpu.memory_space<vmem>>, vector<1x8x32xf32>
    %706 = vector.shape_cast %705 : vector<1x8x32xf32> to vector<8x32xf32>
    %707 = vector.shape_cast %703 : vector<8x32xf32> to vector<1x8x32xf32>
    tpu.vector_store %arg8[%704, %c0_232, %c0_233], %707 {strides = array<i32>} : memref<8x8x32xf32, #tpu.memory_space<vmem>>, vector<1x8x32xf32>,
    %c3_i32_234 = arith.constant 3 : i32
    %708 = arith.index_cast %c3_i32_234 : i32 to index
    %c0_235 = arith.constant 0 : index
    %c0_236 = arith.constant 0 : index
    %709 = vector.load %arg9[%708, %c0_235, %c0_236] : memref<8x8x128xf32, #tpu.memory_space<vmem>>, vector<1x8x128xf32>
    %710 = vector.shape_cast %709 : vector<1x8x128xf32> to vector<8x128xf32>
    %711 = arith.truncf %679 : vector<8x32xf32> to vector<8x32xbf16>
    %cst_237 = arith.constant dense<0.000000e+00> : vector<8x128xf32>
    %712 = tpu.matmul %711, %506, %cst_237 {dimension_numbers = #tpu.dot_dimension_numbers<[1], [0], [0], [1], [0, 0, 1, 1], [], []>} : vector<8x32xbf16>, vector<32x128xbf16>, vector<8x128xf32> -> vector<8x128xf32>
    %713 = arith.addf %710, %712 : vector<8x128xf32>
    %714 = vector.extract_strided_slice %713 {offsets = [0, 0], sizes = [8, 32], strides = [1, 1]} : vector<8x128xf32> to vector<8x32xf32>
    %715 = arith.negf %714 : vector<8x32xf32>
    %716 = math.exp %715 : vector<8x32xf32>
    %cst_238 = arith.constant 1.000000e+00 : f32
    %717 = vector.broadcast %cst_238 : f32 to vector<8x32xf32>
    %718 = arith.addf %717, %716 : vector<8x32xf32>
    %719 = arith.divf %717, %718 : vector<8x32xf32>
    %720 = vector.extract_strided_slice %713 {offsets = [0, 32], sizes = [8, 32], strides = [1, 1]} : vector<8x128xf32> to vector<8x32xf32>
    %721 = arith.negf %720 : vector<8x32xf32>
    %722 = math.exp %721 : vector<8x32xf32>
    %cst_239 = arith.constant 1.000000e+00 : f32
    %723 = vector.broadcast %cst_239 : f32 to vector<8x32xf32>
    %724 = arith.addf %723, %722 : vector<8x32xf32>
    %725 = arith.divf %723, %724 : vector<8x32xf32>
    %726 = vector.extract_strided_slice %713 {offsets = [0, 64], sizes = [8, 32], strides = [1, 1]} : vector<8x128xf32> to vector<8x32xf32>
    %727 = math.tanh %726 : vector<8x32xf32>
    %728 = vector.extract_strided_slice %713 {offsets = [0, 96], sizes = [8, 32], strides = [1, 1]} : vector<8x128xf32> to vector<8x32xf32>
    %729 = arith.negf %728 : vector<8x32xf32>
    %730 = math.exp %729 : vector<8x32xf32>
    %cst_240 = arith.constant 1.000000e+00 : f32
    %731 = vector.broadcast %cst_240 : f32 to vector<8x32xf32>
    %732 = arith.addf %731, %730 : vector<8x32xf32>
    %733 = arith.divf %731, %732 : vector<8x32xf32>
    %734 = arith.mulf %725, %677 : vector<8x32xf32>
    %735 = arith.mulf %719, %727 : vector<8x32xf32>
    %736 = arith.addf %734, %735 : vector<8x32xf32>
    %737 = math.tanh %736 : vector<8x32xf32>
    %738 = arith.mulf %733, %737 : vector<8x32xf32>
    %739 = arith.index_cast %c3_i32_234 : i32 to index
    %c0_241 = arith.constant 0 : index
    %c0_242 = arith.constant 0 : index
    %740 = vector.load %arg8[%739, %c0_241, %c0_242] : memref<8x8x32xf32, #tpu.memory_space<vmem>>, vector<1x8x32xf32>
    %741 = vector.shape_cast %740 : vector<1x8x32xf32> to vector<8x32xf32>
    %742 = arith.addf %741, %738 : vector<8x32xf32>
    %cst_243 = arith.constant dense<0.000000e+00> : vector<8xf32>
    %743 = vector.multi_reduction <add>, %742, %cst_243 [1] : vector<8x32xf32> to vector<8xf32>
    %744 = vector.shape_cast %743 : vector<8xf32> to vector<8x1xf32>
    %cst_244 = arith.constant 3.200000e+01 : f32
    %745 = vector.broadcast %cst_244 : f32 to vector<8x1xf32>
    %746 = arith.divf %744, %745 : vector<8x1xf32>
    %747 = vector.broadcast %746 : vector<8x1xf32> to vector<8x32xf32>
    %748 = arith.subf %742, %747 : vector<8x32xf32>
    %749 = arith.mulf %748, %748 : vector<8x32xf32>
    %cst_245 = arith.constant dense<0.000000e+00> : vector<8xf32>
    %750 = vector.multi_reduction <add>, %749, %cst_245 [1] : vector<8x32xf32> to vector<8xf32>
    %751 = vector.shape_cast %750 : vector<8xf32> to vector<8x1xf32>
    %cst_246 = arith.constant 3.200000e+01 : f32
    %752 = vector.broadcast %cst_246 : f32 to vector<8x1xf32>
    %753 = arith.divf %751, %752 : vector<8x1xf32>
    %754 = vector.broadcast %746 : vector<8x1xf32> to vector<8x32xf32>
    %755 = arith.subf %742, %754 : vector<8x32xf32>
    %cst_247 = arith.constant 9.99999974E-6 : f32
    %756 = vector.broadcast %cst_247 : f32 to vector<8x1xf32>
    %757 = arith.addf %753, %756 : vector<8x1xf32>
    %758 = math.rsqrt %757 : vector<8x1xf32>
    %759 = vector.broadcast %758 : vector<8x1xf32> to vector<8x32xf32>
    %760 = arith.mulf %755, %759 : vector<8x32xf32>
    %761 = arith.mulf %760, %512 : vector<8x32xf32>
    %762 = arith.addf %761, %516 : vector<8x32xf32>
    %763 = arith.index_cast %c3_i32_234 : i32 to index
    %c0_248 = arith.constant 0 : index
    %c0_249 = arith.constant 0 : index
    %764 = vector.load %arg8[%763, %c0_248, %c0_249] : memref<8x8x32xf32, #tpu.memory_space<vmem>>, vector<1x8x32xf32>
    %765 = vector.shape_cast %764 : vector<1x8x32xf32> to vector<8x32xf32>
    %766 = vector.shape_cast %762 : vector<8x32xf32> to vector<1x8x32xf32>
    tpu.vector_store %arg8[%763, %c0_248, %c0_249], %766 {strides = array<i32>} : memref<8x8x32xf32, #tpu.memory_space<vmem>>, vector<1x8x32xf32>,
    %c4_i32_250 = arith.constant 4 : i32
    %767 = arith.index_cast %c4_i32_250 : i32 to index
    %c0_251 = arith.constant 0 : index
    %c0_252 = arith.constant 0 : index
    %768 = vector.load %arg9[%767, %c0_251, %c0_252] : memref<8x8x128xf32, #tpu.memory_space<vmem>>, vector<1x8x128xf32>
    %769 = vector.shape_cast %768 : vector<1x8x128xf32> to vector<8x128xf32>
    %770 = arith.truncf %738 : vector<8x32xf32> to vector<8x32xbf16>
    %cst_253 = arith.constant dense<0.000000e+00> : vector<8x128xf32>
    %771 = tpu.matmul %770, %506, %cst_253 {dimension_numbers = #tpu.dot_dimension_numbers<[1], [0], [0], [1], [0, 0, 1, 1], [], []>} : vector<8x32xbf16>, vector<32x128xbf16>, vector<8x128xf32> -> vector<8x128xf32>
    %772 = arith.addf %769, %771 : vector<8x128xf32>
    %773 = vector.extract_strided_slice %772 {offsets = [0, 0], sizes = [8, 32], strides = [1, 1]} : vector<8x128xf32> to vector<8x32xf32>
    %774 = arith.negf %773 : vector<8x32xf32>
    %775 = math.exp %774 : vector<8x32xf32>
    %cst_254 = arith.constant 1.000000e+00 : f32
    %776 = vector.broadcast %cst_254 : f32 to vector<8x32xf32>
    %777 = arith.addf %776, %775 : vector<8x32xf32>
    %778 = arith.divf %776, %777 : vector<8x32xf32>
    %779 = vector.extract_strided_slice %772 {offsets = [0, 32], sizes = [8, 32], strides = [1, 1]} : vector<8x128xf32> to vector<8x32xf32>
    %780 = arith.negf %779 : vector<8x32xf32>
    %781 = math.exp %780 : vector<8x32xf32>
    %cst_255 = arith.constant 1.000000e+00 : f32
    %782 = vector.broadcast %cst_255 : f32 to vector<8x32xf32>
    %783 = arith.addf %782, %781 : vector<8x32xf32>
    %784 = arith.divf %782, %783 : vector<8x32xf32>
    %785 = vector.extract_strided_slice %772 {offsets = [0, 64], sizes = [8, 32], strides = [1, 1]} : vector<8x128xf32> to vector<8x32xf32>
    %786 = math.tanh %785 : vector<8x32xf32>
    %787 = vector.extract_strided_slice %772 {offsets = [0, 96], sizes = [8, 32], strides = [1, 1]} : vector<8x128xf32> to vector<8x32xf32>
    %788 = arith.negf %787 : vector<8x32xf32>
    %789 = math.exp %788 : vector<8x32xf32>
    %cst_256 = arith.constant 1.000000e+00 : f32
    %790 = vector.broadcast %cst_256 : f32 to vector<8x32xf32>
    %791 = arith.addf %790, %789 : vector<8x32xf32>
    %792 = arith.divf %790, %791 : vector<8x32xf32>
    %793 = arith.mulf %784, %736 : vector<8x32xf32>
    %794 = arith.mulf %778, %786 : vector<8x32xf32>
    %795 = arith.addf %793, %794 : vector<8x32xf32>
    %796 = math.tanh %795 : vector<8x32xf32>
    %797 = arith.mulf %792, %796 : vector<8x32xf32>
    %798 = arith.index_cast %c4_i32_250 : i32 to index
    %c0_257 = arith.constant 0 : index
    %c0_258 = arith.constant 0 : index
    %799 = vector.load %arg8[%798, %c0_257, %c0_258] : memref<8x8x32xf32, #tpu.memory_space<vmem>>, vector<1x8x32xf32>
    %800 = vector.shape_cast %799 : vector<1x8x32xf32> to vector<8x32xf32>
    %801 = arith.addf %800, %797 : vector<8x32xf32>
    %cst_259 = arith.constant dense<0.000000e+00> : vector<8xf32>
    %802 = vector.multi_reduction <add>, %801, %cst_259 [1] : vector<8x32xf32> to vector<8xf32>
    %803 = vector.shape_cast %802 : vector<8xf32> to vector<8x1xf32>
    %cst_260 = arith.constant 3.200000e+01 : f32
    %804 = vector.broadcast %cst_260 : f32 to vector<8x1xf32>
    %805 = arith.divf %803, %804 : vector<8x1xf32>
    %806 = vector.broadcast %805 : vector<8x1xf32> to vector<8x32xf32>
    %807 = arith.subf %801, %806 : vector<8x32xf32>
    %808 = arith.mulf %807, %807 : vector<8x32xf32>
    %cst_261 = arith.constant dense<0.000000e+00> : vector<8xf32>
    %809 = vector.multi_reduction <add>, %808, %cst_261 [1] : vector<8x32xf32> to vector<8xf32>
    %810 = vector.shape_cast %809 : vector<8xf32> to vector<8x1xf32>
    %cst_262 = arith.constant 3.200000e+01 : f32
    %811 = vector.broadcast %cst_262 : f32 to vector<8x1xf32>
    %812 = arith.divf %810, %811 : vector<8x1xf32>
    %813 = vector.broadcast %805 : vector<8x1xf32> to vector<8x32xf32>
    %814 = arith.subf %801, %813 : vector<8x32xf32>
    %cst_263 = arith.constant 9.99999974E-6 : f32
    %815 = vector.broadcast %cst_263 : f32 to vector<8x1xf32>
    %816 = arith.addf %812, %815 : vector<8x1xf32>
    %817 = math.rsqrt %816 : vector<8x1xf32>
    %818 = vector.broadcast %817 : vector<8x1xf32> to vector<8x32xf32>
    %819 = arith.mulf %814, %818 : vector<8x32xf32>
    %820 = arith.mulf %819, %512 : vector<8x32xf32>
    %821 = arith.addf %820, %516 : vector<8x32xf32>
    %822 = arith.index_cast %c4_i32_250 : i32 to index
    %c0_264 = arith.constant 0 : index
    %c0_265 = arith.constant 0 : index
    %823 = vector.load %arg8[%822, %c0_264, %c0_265] : memref<8x8x32xf32, #tpu.memory_space<vmem>>, vector<1x8x32xf32>
    %824 = vector.shape_cast %823 : vector<1x8x32xf32> to vector<8x32xf32>
    %825 = vector.shape_cast %821 : vector<8x32xf32> to vector<1x8x32xf32>
    tpu.vector_store %arg8[%822, %c0_264, %c0_265], %825 {strides = array<i32>} : memref<8x8x32xf32, #tpu.memory_space<vmem>>, vector<1x8x32xf32>,
    %c5_i32_266 = arith.constant 5 : i32
    %826 = arith.index_cast %c5_i32_266 : i32 to index
    %c0_267 = arith.constant 0 : index
    %c0_268 = arith.constant 0 : index
    %827 = vector.load %arg9[%826, %c0_267, %c0_268] : memref<8x8x128xf32, #tpu.memory_space<vmem>>, vector<1x8x128xf32>
    %828 = vector.shape_cast %827 : vector<1x8x128xf32> to vector<8x128xf32>
    %829 = arith.truncf %797 : vector<8x32xf32> to vector<8x32xbf16>
    %cst_269 = arith.constant dense<0.000000e+00> : vector<8x128xf32>
    %830 = tpu.matmul %829, %506, %cst_269 {dimension_numbers = #tpu.dot_dimension_numbers<[1], [0], [0], [1], [0, 0, 1, 1], [], []>} : vector<8x32xbf16>, vector<32x128xbf16>, vector<8x128xf32> -> vector<8x128xf32>
    %831 = arith.addf %828, %830 : vector<8x128xf32>
    %832 = vector.extract_strided_slice %831 {offsets = [0, 0], sizes = [8, 32], strides = [1, 1]} : vector<8x128xf32> to vector<8x32xf32>
    %833 = arith.negf %832 : vector<8x32xf32>
    %834 = math.exp %833 : vector<8x32xf32>
    %cst_270 = arith.constant 1.000000e+00 : f32
    %835 = vector.broadcast %cst_270 : f32 to vector<8x32xf32>
    %836 = arith.addf %835, %834 : vector<8x32xf32>
    %837 = arith.divf %835, %836 : vector<8x32xf32>
    %838 = vector.extract_strided_slice %831 {offsets = [0, 32], sizes = [8, 32], strides = [1, 1]} : vector<8x128xf32> to vector<8x32xf32>
    %839 = arith.negf %838 : vector<8x32xf32>
    %840 = math.exp %839 : vector<8x32xf32>
    %cst_271 = arith.constant 1.000000e+00 : f32
    %841 = vector.broadcast %cst_271 : f32 to vector<8x32xf32>
    %842 = arith.addf %841, %840 : vector<8x32xf32>
    %843 = arith.divf %841, %842 : vector<8x32xf32>
    %844 = vector.extract_strided_slice %831 {offsets = [0, 64], sizes = [8, 32], strides = [1, 1]} : vector<8x128xf32> to vector<8x32xf32>
    %845 = math.tanh %844 : vector<8x32xf32>
    %846 = vector.extract_strided_slice %831 {offsets = [0, 96], sizes = [8, 32], strides = [1, 1]} : vector<8x128xf32> to vector<8x32xf32>
    %847 = arith.negf %846 : vector<8x32xf32>
    %848 = math.exp %847 : vector<8x32xf32>
    %cst_272 = arith.constant 1.000000e+00 : f32
    %849 = vector.broadcast %cst_272 : f32 to vector<8x32xf32>
    %850 = arith.addf %849, %848 : vector<8x32xf32>
    %851 = arith.divf %849, %850 : vector<8x32xf32>
    %852 = arith.mulf %843, %795 : vector<8x32xf32>
    %853 = arith.mulf %837, %845 : vector<8x32xf32>
    %854 = arith.addf %852, %853 : vector<8x32xf32>
    %855 = math.tanh %854 : vector<8x32xf32>
    %856 = arith.mulf %851, %855 : vector<8x32xf32>
    %857 = arith.index_cast %c5_i32_266 : i32 to index
    %c0_273 = arith.constant 0 : index
    %c0_274 = arith.constant 0 : index
    %858 = vector.load %arg8[%857, %c0_273, %c0_274] : memref<8x8x32xf32, #tpu.memory_space<vmem>>, vector<1x8x32xf32>
    %859 = vector.shape_cast %858 : vector<1x8x32xf32> to vector<8x32xf32>
    %860 = arith.addf %859, %856 : vector<8x32xf32>
    %cst_275 = arith.constant dense<0.000000e+00> : vector<8xf32>
    %861 = vector.multi_reduction <add>, %860, %cst_275 [1] : vector<8x32xf32> to vector<8xf32>
    %862 = vector.shape_cast %861 : vector<8xf32> to vector<8x1xf32>
    %cst_276 = arith.constant 3.200000e+01 : f32
    %863 = vector.broadcast %cst_276 : f32 to vector<8x1xf32>
    %864 = arith.divf %862, %863 : vector<8x1xf32>
    %865 = vector.broadcast %864 : vector<8x1xf32> to vector<8x32xf32>
    %866 = arith.subf %860, %865 : vector<8x32xf32>
    %867 = arith.mulf %866, %866 : vector<8x32xf32>
    %cst_277 = arith.constant dense<0.000000e+00> : vector<8xf32>
    %868 = vector.multi_reduction <add>, %867, %cst_277 [1] : vector<8x32xf32> to vector<8xf32>
    %869 = vector.shape_cast %868 : vector<8xf32> to vector<8x1xf32>
    %cst_278 = arith.constant 3.200000e+01 : f32
    %870 = vector.broadcast %cst_278 : f32 to vector<8x1xf32>
    %871 = arith.divf %869, %870 : vector<8x1xf32>
    %872 = vector.broadcast %864 : vector<8x1xf32> to vector<8x32xf32>
    %873 = arith.subf %860, %872 : vector<8x32xf32>
    %cst_279 = arith.constant 9.99999974E-6 : f32
    %874 = vector.broadcast %cst_279 : f32 to vector<8x1xf32>
    %875 = arith.addf %871, %874 : vector<8x1xf32>
    %876 = math.rsqrt %875 : vector<8x1xf32>
    %877 = vector.broadcast %876 : vector<8x1xf32> to vector<8x32xf32>
    %878 = arith.mulf %873, %877 : vector<8x32xf32>
    %879 = arith.mulf %878, %512 : vector<8x32xf32>
    %880 = arith.addf %879, %516 : vector<8x32xf32>
    %881 = arith.index_cast %c5_i32_266 : i32 to index
    %c0_280 = arith.constant 0 : index
    %c0_281 = arith.constant 0 : index
    %882 = vector.load %arg8[%881, %c0_280, %c0_281] : memref<8x8x32xf32, #tpu.memory_space<vmem>>, vector<1x8x32xf32>
    %883 = vector.shape_cast %882 : vector<1x8x32xf32> to vector<8x32xf32>
    %884 = vector.shape_cast %880 : vector<8x32xf32> to vector<1x8x32xf32>
    tpu.vector_store %arg8[%881, %c0_280, %c0_281], %884 {strides = array<i32>} : memref<8x8x32xf32, #tpu.memory_space<vmem>>, vector<1x8x32xf32>,
    %c6_i32_282 = arith.constant 6 : i32
    %885 = arith.index_cast %c6_i32_282 : i32 to index
    %c0_283 = arith.constant 0 : index
    %c0_284 = arith.constant 0 : index
    %886 = vector.load %arg9[%885, %c0_283, %c0_284] : memref<8x8x128xf32, #tpu.memory_space<vmem>>, vector<1x8x128xf32>
    %887 = vector.shape_cast %886 : vector<1x8x128xf32> to vector<8x128xf32>
    %888 = arith.truncf %856 : vector<8x32xf32> to vector<8x32xbf16>
    %cst_285 = arith.constant dense<0.000000e+00> : vector<8x128xf32>
    %889 = tpu.matmul %888, %506, %cst_285 {dimension_numbers = #tpu.dot_dimension_numbers<[1], [0], [0], [1], [0, 0, 1, 1], [], []>} : vector<8x32xbf16>, vector<32x128xbf16>, vector<8x128xf32> -> vector<8x128xf32>
    %890 = arith.addf %887, %889 : vector<8x128xf32>
    %891 = vector.extract_strided_slice %890 {offsets = [0, 0], sizes = [8, 32], strides = [1, 1]} : vector<8x128xf32> to vector<8x32xf32>
    %892 = arith.negf %891 : vector<8x32xf32>
    %893 = math.exp %892 : vector<8x32xf32>
    %cst_286 = arith.constant 1.000000e+00 : f32
    %894 = vector.broadcast %cst_286 : f32 to vector<8x32xf32>
    %895 = arith.addf %894, %893 : vector<8x32xf32>
    %896 = arith.divf %894, %895 : vector<8x32xf32>
    %897 = vector.extract_strided_slice %890 {offsets = [0, 32], sizes = [8, 32], strides = [1, 1]} : vector<8x128xf32> to vector<8x32xf32>
    %898 = arith.negf %897 : vector<8x32xf32>
    %899 = math.exp %898 : vector<8x32xf32>
    %cst_287 = arith.constant 1.000000e+00 : f32
    %900 = vector.broadcast %cst_287 : f32 to vector<8x32xf32>
    %901 = arith.addf %900, %899 : vector<8x32xf32>
    %902 = arith.divf %900, %901 : vector<8x32xf32>
    %903 = vector.extract_strided_slice %890 {offsets = [0, 64], sizes = [8, 32], strides = [1, 1]} : vector<8x128xf32> to vector<8x32xf32>
    %904 = math.tanh %903 : vector<8x32xf32>
    %905 = vector.extract_strided_slice %890 {offsets = [0, 96], sizes = [8, 32], strides = [1, 1]} : vector<8x128xf32> to vector<8x32xf32>
    %906 = arith.negf %905 : vector<8x32xf32>
    %907 = math.exp %906 : vector<8x32xf32>
    %cst_288 = arith.constant 1.000000e+00 : f32
    %908 = vector.broadcast %cst_288 : f32 to vector<8x32xf32>
    %909 = arith.addf %908, %907 : vector<8x32xf32>
    %910 = arith.divf %908, %909 : vector<8x32xf32>
    %911 = arith.mulf %902, %854 : vector<8x32xf32>
    %912 = arith.mulf %896, %904 : vector<8x32xf32>
    %913 = arith.addf %911, %912 : vector<8x32xf32>
    %914 = math.tanh %913 : vector<8x32xf32>
    %915 = arith.mulf %910, %914 : vector<8x32xf32>
    %916 = arith.index_cast %c6_i32_282 : i32 to index
    %c0_289 = arith.constant 0 : index
    %c0_290 = arith.constant 0 : index
    %917 = vector.load %arg8[%916, %c0_289, %c0_290] : memref<8x8x32xf32, #tpu.memory_space<vmem>>, vector<1x8x32xf32>
    %918 = vector.shape_cast %917 : vector<1x8x32xf32> to vector<8x32xf32>
    %919 = arith.addf %918, %915 : vector<8x32xf32>
    %cst_291 = arith.constant dense<0.000000e+00> : vector<8xf32>
    %920 = vector.multi_reduction <add>, %919, %cst_291 [1] : vector<8x32xf32> to vector<8xf32>
    %921 = vector.shape_cast %920 : vector<8xf32> to vector<8x1xf32>
    %cst_292 = arith.constant 3.200000e+01 : f32
    %922 = vector.broadcast %cst_292 : f32 to vector<8x1xf32>
    %923 = arith.divf %921, %922 : vector<8x1xf32>
    %924 = vector.broadcast %923 : vector<8x1xf32> to vector<8x32xf32>
    %925 = arith.subf %919, %924 : vector<8x32xf32>
    %926 = arith.mulf %925, %925 : vector<8x32xf32>
    %cst_293 = arith.constant dense<0.000000e+00> : vector<8xf32>
    %927 = vector.multi_reduction <add>, %926, %cst_293 [1] : vector<8x32xf32> to vector<8xf32>
    %928 = vector.shape_cast %927 : vector<8xf32> to vector<8x1xf32>
    %cst_294 = arith.constant 3.200000e+01 : f32
    %929 = vector.broadcast %cst_294 : f32 to vector<8x1xf32>
    %930 = arith.divf %928, %929 : vector<8x1xf32>
    %931 = vector.broadcast %923 : vector<8x1xf32> to vector<8x32xf32>
    %932 = arith.subf %919, %931 : vector<8x32xf32>
    %cst_295 = arith.constant 9.99999974E-6 : f32
    %933 = vector.broadcast %cst_295 : f32 to vector<8x1xf32>
    %934 = arith.addf %930, %933 : vector<8x1xf32>
    %935 = math.rsqrt %934 : vector<8x1xf32>
    %936 = vector.broadcast %935 : vector<8x1xf32> to vector<8x32xf32>
    %937 = arith.mulf %932, %936 : vector<8x32xf32>
    %938 = arith.mulf %937, %512 : vector<8x32xf32>
    %939 = arith.addf %938, %516 : vector<8x32xf32>
    %940 = arith.index_cast %c6_i32_282 : i32 to index
    %c0_296 = arith.constant 0 : index
    %c0_297 = arith.constant 0 : index
    %941 = vector.load %arg8[%940, %c0_296, %c0_297] : memref<8x8x32xf32, #tpu.memory_space<vmem>>, vector<1x8x32xf32>
    %942 = vector.shape_cast %941 : vector<1x8x32xf32> to vector<8x32xf32>
    %943 = vector.shape_cast %939 : vector<8x32xf32> to vector<1x8x32xf32>
    tpu.vector_store %arg8[%940, %c0_296, %c0_297], %943 {strides = array<i32>} : memref<8x8x32xf32, #tpu.memory_space<vmem>>, vector<1x8x32xf32>,
    %c7_i32_298 = arith.constant 7 : i32
    %944 = arith.index_cast %c7_i32_298 : i32 to index
    %c0_299 = arith.constant 0 : index
    %c0_300 = arith.constant 0 : index
    %945 = vector.load %arg9[%944, %c0_299, %c0_300] : memref<8x8x128xf32, #tpu.memory_space<vmem>>, vector<1x8x128xf32>
    %946 = vector.shape_cast %945 : vector<1x8x128xf32> to vector<8x128xf32>
    %947 = arith.truncf %915 : vector<8x32xf32> to vector<8x32xbf16>
    %cst_301 = arith.constant dense<0.000000e+00> : vector<8x128xf32>
    %948 = tpu.matmul %947, %506, %cst_301 {dimension_numbers = #tpu.dot_dimension_numbers<[1], [0], [0], [1], [0, 0, 1, 1], [], []>} : vector<8x32xbf16>, vector<32x128xbf16>, vector<8x128xf32> -> vector<8x128xf32>
    %949 = arith.addf %946, %948 : vector<8x128xf32>
    %950 = vector.extract_strided_slice %949 {offsets = [0, 0], sizes = [8, 32], strides = [1, 1]} : vector<8x128xf32> to vector<8x32xf32>
    %951 = arith.negf %950 : vector<8x32xf32>
    %952 = math.exp %951 : vector<8x32xf32>
    %cst_302 = arith.constant 1.000000e+00 : f32
    %953 = vector.broadcast %cst_302 : f32 to vector<8x32xf32>
    %954 = arith.addf %953, %952 : vector<8x32xf32>
    %955 = arith.divf %953, %954 : vector<8x32xf32>
    %956 = vector.extract_strided_slice %949 {offsets = [0, 32], sizes = [8, 32], strides = [1, 1]} : vector<8x128xf32> to vector<8x32xf32>
    %957 = arith.negf %956 : vector<8x32xf32>
    %958 = math.exp %957 : vector<8x32xf32>
    %cst_303 = arith.constant 1.000000e+00 : f32
    %959 = vector.broadcast %cst_303 : f32 to vector<8x32xf32>
    %960 = arith.addf %959, %958 : vector<8x32xf32>
    %961 = arith.divf %959, %960 : vector<8x32xf32>
    %962 = vector.extract_strided_slice %949 {offsets = [0, 64], sizes = [8, 32], strides = [1, 1]} : vector<8x128xf32> to vector<8x32xf32>
    %963 = math.tanh %962 : vector<8x32xf32>
    %964 = vector.extract_strided_slice %949 {offsets = [0, 96], sizes = [8, 32], strides = [1, 1]} : vector<8x128xf32> to vector<8x32xf32>
    %965 = arith.negf %964 : vector<8x32xf32>
    %966 = math.exp %965 : vector<8x32xf32>
    %cst_304 = arith.constant 1.000000e+00 : f32
    %967 = vector.broadcast %cst_304 : f32 to vector<8x32xf32>
    %968 = arith.addf %967, %966 : vector<8x32xf32>
    %969 = arith.divf %967, %968 : vector<8x32xf32>
    %970 = arith.mulf %961, %913 : vector<8x32xf32>
    %971 = arith.mulf %955, %963 : vector<8x32xf32>
    %972 = arith.addf %970, %971 : vector<8x32xf32>
    %973 = math.tanh %972 : vector<8x32xf32>
    %974 = arith.mulf %969, %973 : vector<8x32xf32>
    %975 = arith.index_cast %c7_i32_298 : i32 to index
    %c0_305 = arith.constant 0 : index
    %c0_306 = arith.constant 0 : index
    %976 = vector.load %arg8[%975, %c0_305, %c0_306] : memref<8x8x32xf32, #tpu.memory_space<vmem>>, vector<1x8x32xf32>
    %977 = vector.shape_cast %976 : vector<1x8x32xf32> to vector<8x32xf32>
    %978 = arith.addf %977, %974 : vector<8x32xf32>
    %cst_307 = arith.constant dense<0.000000e+00> : vector<8xf32>
    %979 = vector.multi_reduction <add>, %978, %cst_307 [1] : vector<8x32xf32> to vector<8xf32>
    %980 = vector.shape_cast %979 : vector<8xf32> to vector<8x1xf32>
    %cst_308 = arith.constant 3.200000e+01 : f32
    %981 = vector.broadcast %cst_308 : f32 to vector<8x1xf32>
    %982 = arith.divf %980, %981 : vector<8x1xf32>
    %983 = vector.broadcast %982 : vector<8x1xf32> to vector<8x32xf32>
    %984 = arith.subf %978, %983 : vector<8x32xf32>
    %985 = arith.mulf %984, %984 : vector<8x32xf32>
    %cst_309 = arith.constant dense<0.000000e+00> : vector<8xf32>
    %986 = vector.multi_reduction <add>, %985, %cst_309 [1] : vector<8x32xf32> to vector<8xf32>
    %987 = vector.shape_cast %986 : vector<8xf32> to vector<8x1xf32>
    %cst_310 = arith.constant 3.200000e+01 : f32
    %988 = vector.broadcast %cst_310 : f32 to vector<8x1xf32>
    %989 = arith.divf %987, %988 : vector<8x1xf32>
    %990 = vector.broadcast %982 : vector<8x1xf32> to vector<8x32xf32>
    %991 = arith.subf %978, %990 : vector<8x32xf32>
    %cst_311 = arith.constant 9.99999974E-6 : f32
    %992 = vector.broadcast %cst_311 : f32 to vector<8x1xf32>
    %993 = arith.addf %989, %992 : vector<8x1xf32>
    %994 = math.rsqrt %993 : vector<8x1xf32>
    %995 = vector.broadcast %994 : vector<8x1xf32> to vector<8x32xf32>
    %996 = arith.mulf %991, %995 : vector<8x32xf32>
    %997 = arith.mulf %996, %512 : vector<8x32xf32>
    %998 = arith.addf %997, %516 : vector<8x32xf32>
    %999 = arith.index_cast %c7_i32_298 : i32 to index
    %c0_312 = arith.constant 0 : index
    %c0_313 = arith.constant 0 : index
    %1000 = vector.load %arg8[%999, %c0_312, %c0_313] : memref<8x8x32xf32, #tpu.memory_space<vmem>>, vector<1x8x32xf32>
    %1001 = vector.shape_cast %1000 : vector<1x8x32xf32> to vector<8x32xf32>
    %1002 = vector.shape_cast %998 : vector<8x32xf32> to vector<1x8x32xf32>
    tpu.vector_store %arg8[%999, %c0_312, %c0_313], %1002 {strides = array<i32>} : memref<8x8x32xf32, #tpu.memory_space<vmem>>, vector<1x8x32xf32>,
    %c8_i32_314 = arith.constant 8 : i32
    %c2 = arith.constant 2 : index
    %c0_315 = arith.constant 0 : index
    %c0_316 = arith.constant 0 : index
    %1003 = vector.load %arg3[%c2, %c0_315, %c0_316] : memref<3x32x128xbf16, #tpu.memory_space<vmem>>, vector<1x32x128xbf16>
    %1004 = vector.shape_cast %1003 : vector<1x32x128xbf16> to vector<32x128xbf16>
    %c2_317 = arith.constant 2 : index
    %c0_318 = arith.constant 0 : index
    %c0_319 = arith.constant 0 : index
    %1005 = vector.load %arg4[%c2_317, %c0_318, %c0_319] : memref<3x32x128xbf16, #tpu.memory_space<vmem>>, vector<1x32x128xbf16>
    %1006 = vector.shape_cast %1005 : vector<1x32x128xbf16> to vector<32x128xbf16>
    %c2_320 = arith.constant 2 : index
    %c0_321 = arith.constant 0 : index
    %c0_322 = arith.constant 0 : index
    %1007 = vector.load %arg5[%c2_320, %c0_321, %c0_322] : memref<3x1x128xf32, #tpu.memory_space<vmem>>, vector<1x1x128xf32>
    %1008 = vector.shape_cast %1007 : vector<1x1x128xf32> to vector<1x128xf32>
    %c2_323 = arith.constant 2 : index
    %c0_324 = arith.constant 0 : index
    %c0_325 = arith.constant 0 : index
    %1009 = vector.load %arg6[%c2_323, %c0_324, %c0_325] : memref<3x1x32xf32, #tpu.memory_space<vmem>>, vector<1x1x32xf32>
    %1010 = vector.shape_cast %1009 : vector<1x1x32xf32> to vector<1x32xf32>
    %1011 = vector.shape_cast %1010 : vector<1x32xf32> to vector<1x32xf32>
    %1012 = vector.broadcast %1011 : vector<1x32xf32> to vector<8x32xf32>
    %c2_326 = arith.constant 2 : index
    %c0_327 = arith.constant 0 : index
    %c0_328 = arith.constant 0 : index
    %1013 = vector.load %arg7[%c2_326, %c0_327, %c0_328] : memref<3x1x32xf32, #tpu.memory_space<vmem>>, vector<1x1x32xf32>
    %1014 = vector.shape_cast %1013 : vector<1x1x32xf32> to vector<1x32xf32>
    %1015 = vector.shape_cast %1014 : vector<1x32xf32> to vector<1x32xf32>
    %1016 = vector.broadcast %1015 : vector<1x32xf32> to vector<8x32xf32>
    %c0_329 = arith.constant 0 : index
    %c0_330 = arith.constant 0 : index
    %c0_331 = arith.constant 0 : index
    %1017 = vector.load %arg8[%c0_329, %c0_330, %c0_331] : memref<8x8x32xf32, #tpu.memory_space<vmem>>, vector<8x8x32xf32>
    %1018 = vector.broadcast %0 : vector<8x8x1xf32> to vector<8x8x32xf32>
    %1019 = arith.mulf %1017, %1018 : vector<8x8x32xf32>
    %c0_332 = arith.constant 0 : index
    %c0_333 = arith.constant 0 : index
    %c0_334 = arith.constant 0 : index
    %1020 = vector.load %arg8[%c0_332, %c0_333, %c0_334] : memref<8x8x32xf32, #tpu.memory_space<vmem>>, vector<8x8x32xf32>
    tpu.vector_store %arg8[%c0_332, %c0_333, %c0_334], %1019 {strides = array<i32>} : memref<8x8x32xf32, #tpu.memory_space<vmem>>, vector<8x8x32xf32>,
    %c0_335 = arith.constant 0 : index
    %c0_336 = arith.constant 0 : index
    %c0_337 = arith.constant 0 : index
    %1021 = vector.load %arg8[%c0_335, %c0_336, %c0_337] : memref<8x8x32xf32, #tpu.memory_space<vmem>>, vector<8x8x32xf32>
    %1022 = vector.shape_cast %1021 : vector<8x8x32xf32> to vector<64x32xf32>
    %1023 = arith.truncf %1022 : vector<64x32xf32> to vector<64x32xbf16>
    %cst_338 = arith.constant dense<0.000000e+00> : vector<64x128xf32>
    %1024 = tpu.matmul %1023, %1004, %cst_338 {dimension_numbers = #tpu.dot_dimension_numbers<[1], [0], [0], [1], [0, 0, 1, 1], [], []>} : vector<64x32xbf16>, vector<32x128xbf16>, vector<64x128xf32> -> vector<64x128xf32>
    %1025 = vector.broadcast %1008 : vector<1x128xf32> to vector<64x128xf32>
    %1026 = arith.addf %1024, %1025 : vector<64x128xf32>
    %1027 = vector.shape_cast %1026 : vector<64x128xf32> to vector<8x8x128xf32>
    %c0_339 = arith.constant 0 : index
    %c0_340 = arith.constant 0 : index
    %c0_341 = arith.constant 0 : index
    %1028 = vector.load %arg9[%c0_339, %c0_340, %c0_341] : memref<8x8x128xf32, #tpu.memory_space<vmem>>, vector<8x8x128xf32>
    tpu.vector_store %arg9[%c0_339, %c0_340, %c0_341], %1027 {strides = array<i32>} : memref<8x8x128xf32, #tpu.memory_space<vmem>>, vector<8x8x128xf32>,
    %cst_342 = arith.constant 0.000000e+00 : f32
    %1029 = vector.broadcast %cst_342 : f32 to vector<8x32xf32>
    %cst_343 = arith.constant 0.000000e+00 : f32
    %1030 = vector.broadcast %cst_343 : f32 to vector<8x32xf32>
    %c0_i32_344 = arith.constant 0 : i32
    %1031 = arith.index_cast %c0_i32_344 : i32 to index
    %c0_345 = arith.constant 0 : index
    %c0_346 = arith.constant 0 : index
    %1032 = vector.load %arg9[%1031, %c0_345, %c0_346] : memref<8x8x128xf32, #tpu.memory_space<vmem>>, vector<1x8x128xf32>
    %1033 = vector.shape_cast %1032 : vector<1x8x128xf32> to vector<8x128xf32>
    %1034 = arith.truncf %1029 : vector<8x32xf32> to vector<8x32xbf16>
    %cst_347 = arith.constant dense<0.000000e+00> : vector<8x128xf32>
    %1035 = tpu.matmul %1034, %1006, %cst_347 {dimension_numbers = #tpu.dot_dimension_numbers<[1], [0], [0], [1], [0, 0, 1, 1], [], []>} : vector<8x32xbf16>, vector<32x128xbf16>, vector<8x128xf32> -> vector<8x128xf32>
    %1036 = arith.addf %1033, %1035 : vector<8x128xf32>
    %1037 = vector.extract_strided_slice %1036 {offsets = [0, 0], sizes = [8, 32], strides = [1, 1]} : vector<8x128xf32> to vector<8x32xf32>
    %1038 = arith.negf %1037 : vector<8x32xf32>
    %1039 = math.exp %1038 : vector<8x32xf32>
    %cst_348 = arith.constant 1.000000e+00 : f32
    %1040 = vector.broadcast %cst_348 : f32 to vector<8x32xf32>
    %1041 = arith.addf %1040, %1039 : vector<8x32xf32>
    %1042 = arith.divf %1040, %1041 : vector<8x32xf32>
    %1043 = vector.extract_strided_slice %1036 {offsets = [0, 32], sizes = [8, 32], strides = [1, 1]} : vector<8x128xf32> to vector<8x32xf32>
    %1044 = arith.negf %1043 : vector<8x32xf32>
    %1045 = math.exp %1044 : vector<8x32xf32>
    %cst_349 = arith.constant 1.000000e+00 : f32
    %1046 = vector.broadcast %cst_349 : f32 to vector<8x32xf32>
    %1047 = arith.addf %1046, %1045 : vector<8x32xf32>
    %1048 = arith.divf %1046, %1047 : vector<8x32xf32>
    %1049 = vector.extract_strided_slice %1036 {offsets = [0, 64], sizes = [8, 32], strides = [1, 1]} : vector<8x128xf32> to vector<8x32xf32>
    %1050 = math.tanh %1049 : vector<8x32xf32>
    %1051 = vector.extract_strided_slice %1036 {offsets = [0, 96], sizes = [8, 32], strides = [1, 1]} : vector<8x128xf32> to vector<8x32xf32>
    %1052 = arith.negf %1051 : vector<8x32xf32>
    %1053 = math.exp %1052 : vector<8x32xf32>
    %cst_350 = arith.constant 1.000000e+00 : f32
    %1054 = vector.broadcast %cst_350 : f32 to vector<8x32xf32>
    %1055 = arith.addf %1054, %1053 : vector<8x32xf32>
    %1056 = arith.divf %1054, %1055 : vector<8x32xf32>
    %1057 = arith.mulf %1048, %1030 : vector<8x32xf32>
    %1058 = arith.mulf %1042, %1050 : vector<8x32xf32>
    %1059 = arith.addf %1057, %1058 : vector<8x32xf32>
    %1060 = math.tanh %1059 : vector<8x32xf32>
    %1061 = arith.mulf %1056, %1060 : vector<8x32xf32>
    %1062 = arith.index_cast %c0_i32_344 : i32 to index
    %c0_351 = arith.constant 0 : index
    %c0_352 = arith.constant 0 : index
    %1063 = vector.load %arg8[%1062, %c0_351, %c0_352] : memref<8x8x32xf32, #tpu.memory_space<vmem>>, vector<1x8x32xf32>
    %1064 = vector.shape_cast %1063 : vector<1x8x32xf32> to vector<8x32xf32>
    %1065 = arith.addf %1064, %1061 : vector<8x32xf32>
    %cst_353 = arith.constant dense<0.000000e+00> : vector<8xf32>
    %1066 = vector.multi_reduction <add>, %1065, %cst_353 [1] : vector<8x32xf32> to vector<8xf32>
    %1067 = vector.shape_cast %1066 : vector<8xf32> to vector<8x1xf32>
    %cst_354 = arith.constant 3.200000e+01 : f32
    %1068 = vector.broadcast %cst_354 : f32 to vector<8x1xf32>
    %1069 = arith.divf %1067, %1068 : vector<8x1xf32>
    %1070 = vector.broadcast %1069 : vector<8x1xf32> to vector<8x32xf32>
    %1071 = arith.subf %1065, %1070 : vector<8x32xf32>
    %1072 = arith.mulf %1071, %1071 : vector<8x32xf32>
    %cst_355 = arith.constant dense<0.000000e+00> : vector<8xf32>
    %1073 = vector.multi_reduction <add>, %1072, %cst_355 [1] : vector<8x32xf32> to vector<8xf32>
    %1074 = vector.shape_cast %1073 : vector<8xf32> to vector<8x1xf32>
    %cst_356 = arith.constant 3.200000e+01 : f32
    %1075 = vector.broadcast %cst_356 : f32 to vector<8x1xf32>
    %1076 = arith.divf %1074, %1075 : vector<8x1xf32>
    %1077 = vector.broadcast %1069 : vector<8x1xf32> to vector<8x32xf32>
    %1078 = arith.subf %1065, %1077 : vector<8x32xf32>
    %cst_357 = arith.constant 9.99999974E-6 : f32
    %1079 = vector.broadcast %cst_357 : f32 to vector<8x1xf32>
    %1080 = arith.addf %1076, %1079 : vector<8x1xf32>
    %1081 = math.rsqrt %1080 : vector<8x1xf32>
    %1082 = vector.broadcast %1081 : vector<8x1xf32> to vector<8x32xf32>
    %1083 = arith.mulf %1078, %1082 : vector<8x32xf32>
    %1084 = arith.mulf %1083, %1012 : vector<8x32xf32>
    %1085 = arith.addf %1084, %1016 : vector<8x32xf32>
    %1086 = arith.index_cast %c0_i32_344 : i32 to index
    %c0_358 = arith.constant 0 : index
    %c0_359 = arith.constant 0 : index
    %1087 = vector.load %arg8[%1086, %c0_358, %c0_359] : memref<8x8x32xf32, #tpu.memory_space<vmem>>, vector<1x8x32xf32>
    %1088 = vector.shape_cast %1087 : vector<1x8x32xf32> to vector<8x32xf32>
    %1089 = vector.shape_cast %1085 : vector<8x32xf32> to vector<1x8x32xf32>
    tpu.vector_store %arg8[%1086, %c0_358, %c0_359], %1089 {strides = array<i32>} : memref<8x8x32xf32, #tpu.memory_space<vmem>>, vector<1x8x32xf32>,
    %c1_i32_360 = arith.constant 1 : i32
    %1090 = arith.index_cast %c1_i32_360 : i32 to index
    %c0_361 = arith.constant 0 : index
    %c0_362 = arith.constant 0 : index
    %1091 = vector.load %arg9[%1090, %c0_361, %c0_362] : memref<8x8x128xf32, #tpu.memory_space<vmem>>, vector<1x8x128xf32>
    %1092 = vector.shape_cast %1091 : vector<1x8x128xf32> to vector<8x128xf32>
    %1093 = arith.truncf %1061 : vector<8x32xf32> to vector<8x32xbf16>
    %cst_363 = arith.constant dense<0.000000e+00> : vector<8x128xf32>
    %1094 = tpu.matmul %1093, %1006, %cst_363 {dimension_numbers = #tpu.dot_dimension_numbers<[1], [0], [0], [1], [0, 0, 1, 1], [], []>} : vector<8x32xbf16>, vector<32x128xbf16>, vector<8x128xf32> -> vector<8x128xf32>
    %1095 = arith.addf %1092, %1094 : vector<8x128xf32>
    %1096 = vector.extract_strided_slice %1095 {offsets = [0, 0], sizes = [8, 32], strides = [1, 1]} : vector<8x128xf32> to vector<8x32xf32>
    %1097 = arith.negf %1096 : vector<8x32xf32>
    %1098 = math.exp %1097 : vector<8x32xf32>
    %cst_364 = arith.constant 1.000000e+00 : f32
    %1099 = vector.broadcast %cst_364 : f32 to vector<8x32xf32>
    %1100 = arith.addf %1099, %1098 : vector<8x32xf32>
    %1101 = arith.divf %1099, %1100 : vector<8x32xf32>
    %1102 = vector.extract_strided_slice %1095 {offsets = [0, 32], sizes = [8, 32], strides = [1, 1]} : vector<8x128xf32> to vector<8x32xf32>
    %1103 = arith.negf %1102 : vector<8x32xf32>
    %1104 = math.exp %1103 : vector<8x32xf32>
    %cst_365 = arith.constant 1.000000e+00 : f32
    %1105 = vector.broadcast %cst_365 : f32 to vector<8x32xf32>
    %1106 = arith.addf %1105, %1104 : vector<8x32xf32>
    %1107 = arith.divf %1105, %1106 : vector<8x32xf32>
    %1108 = vector.extract_strided_slice %1095 {offsets = [0, 64], sizes = [8, 32], strides = [1, 1]} : vector<8x128xf32> to vector<8x32xf32>
    %1109 = math.tanh %1108 : vector<8x32xf32>
    %1110 = vector.extract_strided_slice %1095 {offsets = [0, 96], sizes = [8, 32], strides = [1, 1]} : vector<8x128xf32> to vector<8x32xf32>
    %1111 = arith.negf %1110 : vector<8x32xf32>
    %1112 = math.exp %1111 : vector<8x32xf32>
    %cst_366 = arith.constant 1.000000e+00 : f32
    %1113 = vector.broadcast %cst_366 : f32 to vector<8x32xf32>
    %1114 = arith.addf %1113, %1112 : vector<8x32xf32>
    %1115 = arith.divf %1113, %1114 : vector<8x32xf32>
    %1116 = arith.mulf %1107, %1059 : vector<8x32xf32>
    %1117 = arith.mulf %1101, %1109 : vector<8x32xf32>
    %1118 = arith.addf %1116, %1117 : vector<8x32xf32>
    %1119 = math.tanh %1118 : vector<8x32xf32>
    %1120 = arith.mulf %1115, %1119 : vector<8x32xf32>
    %1121 = arith.index_cast %c1_i32_360 : i32 to index
    %c0_367 = arith.constant 0 : index
    %c0_368 = arith.constant 0 : index
    %1122 = vector.load %arg8[%1121, %c0_367, %c0_368] : memref<8x8x32xf32, #tpu.memory_space<vmem>>, vector<1x8x32xf32>
    %1123 = vector.shape_cast %1122 : vector<1x8x32xf32> to vector<8x32xf32>
    %1124 = arith.addf %1123, %1120 : vector<8x32xf32>
    %cst_369 = arith.constant dense<0.000000e+00> : vector<8xf32>
    %1125 = vector.multi_reduction <add>, %1124, %cst_369 [1] : vector<8x32xf32> to vector<8xf32>
    %1126 = vector.shape_cast %1125 : vector<8xf32> to vector<8x1xf32>
    %cst_370 = arith.constant 3.200000e+01 : f32
    %1127 = vector.broadcast %cst_370 : f32 to vector<8x1xf32>
    %1128 = arith.divf %1126, %1127 : vector<8x1xf32>
    %1129 = vector.broadcast %1128 : vector<8x1xf32> to vector<8x32xf32>
    %1130 = arith.subf %1124, %1129 : vector<8x32xf32>
    %1131 = arith.mulf %1130, %1130 : vector<8x32xf32>
    %cst_371 = arith.constant dense<0.000000e+00> : vector<8xf32>
    %1132 = vector.multi_reduction <add>, %1131, %cst_371 [1] : vector<8x32xf32> to vector<8xf32>
    %1133 = vector.shape_cast %1132 : vector<8xf32> to vector<8x1xf32>
    %cst_372 = arith.constant 3.200000e+01 : f32
    %1134 = vector.broadcast %cst_372 : f32 to vector<8x1xf32>
    %1135 = arith.divf %1133, %1134 : vector<8x1xf32>
    %1136 = vector.broadcast %1128 : vector<8x1xf32> to vector<8x32xf32>
    %1137 = arith.subf %1124, %1136 : vector<8x32xf32>
    %cst_373 = arith.constant 9.99999974E-6 : f32
    %1138 = vector.broadcast %cst_373 : f32 to vector<8x1xf32>
    %1139 = arith.addf %1135, %1138 : vector<8x1xf32>
    %1140 = math.rsqrt %1139 : vector<8x1xf32>
    %1141 = vector.broadcast %1140 : vector<8x1xf32> to vector<8x32xf32>
    %1142 = arith.mulf %1137, %1141 : vector<8x32xf32>
    %1143 = arith.mulf %1142, %1012 : vector<8x32xf32>
    %1144 = arith.addf %1143, %1016 : vector<8x32xf32>
    %1145 = arith.index_cast %c1_i32_360 : i32 to index
    %c0_374 = arith.constant 0 : index
    %c0_375 = arith.constant 0 : index
    %1146 = vector.load %arg8[%1145, %c0_374, %c0_375] : memref<8x8x32xf32, #tpu.memory_space<vmem>>, vector<1x8x32xf32>
    %1147 = vector.shape_cast %1146 : vector<1x8x32xf32> to vector<8x32xf32>
    %1148 = vector.shape_cast %1144 : vector<8x32xf32> to vector<1x8x32xf32>
    tpu.vector_store %arg8[%1145, %c0_374, %c0_375], %1148 {strides = array<i32>} : memref<8x8x32xf32, #tpu.memory_space<vmem>>, vector<1x8x32xf32>,
    %c2_i32_376 = arith.constant 2 : i32
    %1149 = arith.index_cast %c2_i32_376 : i32 to index
    %c0_377 = arith.constant 0 : index
    %c0_378 = arith.constant 0 : index
    %1150 = vector.load %arg9[%1149, %c0_377, %c0_378] : memref<8x8x128xf32, #tpu.memory_space<vmem>>, vector<1x8x128xf32>
    %1151 = vector.shape_cast %1150 : vector<1x8x128xf32> to vector<8x128xf32>
    %1152 = arith.truncf %1120 : vector<8x32xf32> to vector<8x32xbf16>
    %cst_379 = arith.constant dense<0.000000e+00> : vector<8x128xf32>
    %1153 = tpu.matmul %1152, %1006, %cst_379 {dimension_numbers = #tpu.dot_dimension_numbers<[1], [0], [0], [1], [0, 0, 1, 1], [], []>} : vector<8x32xbf16>, vector<32x128xbf16>, vector<8x128xf32> -> vector<8x128xf32>
    %1154 = arith.addf %1151, %1153 : vector<8x128xf32>
    %1155 = vector.extract_strided_slice %1154 {offsets = [0, 0], sizes = [8, 32], strides = [1, 1]} : vector<8x128xf32> to vector<8x32xf32>
    %1156 = arith.negf %1155 : vector<8x32xf32>
    %1157 = math.exp %1156 : vector<8x32xf32>
    %cst_380 = arith.constant 1.000000e+00 : f32
    %1158 = vector.broadcast %cst_380 : f32 to vector<8x32xf32>
    %1159 = arith.addf %1158, %1157 : vector<8x32xf32>
    %1160 = arith.divf %1158, %1159 : vector<8x32xf32>
    %1161 = vector.extract_strided_slice %1154 {offsets = [0, 32], sizes = [8, 32], strides = [1, 1]} : vector<8x128xf32> to vector<8x32xf32>
    %1162 = arith.negf %1161 : vector<8x32xf32>
    %1163 = math.exp %1162 : vector<8x32xf32>
    %cst_381 = arith.constant 1.000000e+00 : f32
    %1164 = vector.broadcast %cst_381 : f32 to vector<8x32xf32>
    %1165 = arith.addf %1164, %1163 : vector<8x32xf32>
    %1166 = arith.divf %1164, %1165 : vector<8x32xf32>
    %1167 = vector.extract_strided_slice %1154 {offsets = [0, 64], sizes = [8, 32], strides = [1, 1]} : vector<8x128xf32> to vector<8x32xf32>
    %1168 = math.tanh %1167 : vector<8x32xf32>
    %1169 = vector.extract_strided_slice %1154 {offsets = [0, 96], sizes = [8, 32], strides = [1, 1]} : vector<8x128xf32> to vector<8x32xf32>
    %1170 = arith.negf %1169 : vector<8x32xf32>
    %1171 = math.exp %1170 : vector<8x32xf32>
    %cst_382 = arith.constant 1.000000e+00 : f32
    %1172 = vector.broadcast %cst_382 : f32 to vector<8x32xf32>
    %1173 = arith.addf %1172, %1171 : vector<8x32xf32>
    %1174 = arith.divf %1172, %1173 : vector<8x32xf32>
    %1175 = arith.mulf %1166, %1118 : vector<8x32xf32>
    %1176 = arith.mulf %1160, %1168 : vector<8x32xf32>
    %1177 = arith.addf %1175, %1176 : vector<8x32xf32>
    %1178 = math.tanh %1177 : vector<8x32xf32>
    %1179 = arith.mulf %1174, %1178 : vector<8x32xf32>
    %1180 = arith.index_cast %c2_i32_376 : i32 to index
    %c0_383 = arith.constant 0 : index
    %c0_384 = arith.constant 0 : index
    %1181 = vector.load %arg8[%1180, %c0_383, %c0_384] : memref<8x8x32xf32, #tpu.memory_space<vmem>>, vector<1x8x32xf32>
    %1182 = vector.shape_cast %1181 : vector<1x8x32xf32> to vector<8x32xf32>
    %1183 = arith.addf %1182, %1179 : vector<8x32xf32>
    %cst_385 = arith.constant dense<0.000000e+00> : vector<8xf32>
    %1184 = vector.multi_reduction <add>, %1183, %cst_385 [1] : vector<8x32xf32> to vector<8xf32>
    %1185 = vector.shape_cast %1184 : vector<8xf32> to vector<8x1xf32>
    %cst_386 = arith.constant 3.200000e+01 : f32
    %1186 = vector.broadcast %cst_386 : f32 to vector<8x1xf32>
    %1187 = arith.divf %1185, %1186 : vector<8x1xf32>
    %1188 = vector.broadcast %1187 : vector<8x1xf32> to vector<8x32xf32>
    %1189 = arith.subf %1183, %1188 : vector<8x32xf32>
    %1190 = arith.mulf %1189, %1189 : vector<8x32xf32>
    %cst_387 = arith.constant dense<0.000000e+00> : vector<8xf32>
    %1191 = vector.multi_reduction <add>, %1190, %cst_387 [1] : vector<8x32xf32> to vector<8xf32>
    %1192 = vector.shape_cast %1191 : vector<8xf32> to vector<8x1xf32>
    %cst_388 = arith.constant 3.200000e+01 : f32
    %1193 = vector.broadcast %cst_388 : f32 to vector<8x1xf32>
    %1194 = arith.divf %1192, %1193 : vector<8x1xf32>
    %1195 = vector.broadcast %1187 : vector<8x1xf32> to vector<8x32xf32>
    %1196 = arith.subf %1183, %1195 : vector<8x32xf32>
    %cst_389 = arith.constant 9.99999974E-6 : f32
    %1197 = vector.broadcast %cst_389 : f32 to vector<8x1xf32>
    %1198 = arith.addf %1194, %1197 : vector<8x1xf32>
    %1199 = math.rsqrt %1198 : vector<8x1xf32>
    %1200 = vector.broadcast %1199 : vector<8x1xf32> to vector<8x32xf32>
    %1201 = arith.mulf %1196, %1200 : vector<8x32xf32>
    %1202 = arith.mulf %1201, %1012 : vector<8x32xf32>
    %1203 = arith.addf %1202, %1016 : vector<8x32xf32>
    %1204 = arith.index_cast %c2_i32_376 : i32 to index
    %c0_390 = arith.constant 0 : index
    %c0_391 = arith.constant 0 : index
    %1205 = vector.load %arg8[%1204, %c0_390, %c0_391] : memref<8x8x32xf32, #tpu.memory_space<vmem>>, vector<1x8x32xf32>
    %1206 = vector.shape_cast %1205 : vector<1x8x32xf32> to vector<8x32xf32>
    %1207 = vector.shape_cast %1203 : vector<8x32xf32> to vector<1x8x32xf32>
    tpu.vector_store %arg8[%1204, %c0_390, %c0_391], %1207 {strides = array<i32>} : memref<8x8x32xf32, #tpu.memory_space<vmem>>, vector<1x8x32xf32>,
    %c3_i32_392 = arith.constant 3 : i32
    %1208 = arith.index_cast %c3_i32_392 : i32 to index
    %c0_393 = arith.constant 0 : index
    %c0_394 = arith.constant 0 : index
    %1209 = vector.load %arg9[%1208, %c0_393, %c0_394] : memref<8x8x128xf32, #tpu.memory_space<vmem>>, vector<1x8x128xf32>
    %1210 = vector.shape_cast %1209 : vector<1x8x128xf32> to vector<8x128xf32>
    %1211 = arith.truncf %1179 : vector<8x32xf32> to vector<8x32xbf16>
    %cst_395 = arith.constant dense<0.000000e+00> : vector<8x128xf32>
    %1212 = tpu.matmul %1211, %1006, %cst_395 {dimension_numbers = #tpu.dot_dimension_numbers<[1], [0], [0], [1], [0, 0, 1, 1], [], []>} : vector<8x32xbf16>, vector<32x128xbf16>, vector<8x128xf32> -> vector<8x128xf32>
    %1213 = arith.addf %1210, %1212 : vector<8x128xf32>
    %1214 = vector.extract_strided_slice %1213 {offsets = [0, 0], sizes = [8, 32], strides = [1, 1]} : vector<8x128xf32> to vector<8x32xf32>
    %1215 = arith.negf %1214 : vector<8x32xf32>
    %1216 = math.exp %1215 : vector<8x32xf32>
    %cst_396 = arith.constant 1.000000e+00 : f32
    %1217 = vector.broadcast %cst_396 : f32 to vector<8x32xf32>
    %1218 = arith.addf %1217, %1216 : vector<8x32xf32>
    %1219 = arith.divf %1217, %1218 : vector<8x32xf32>
    %1220 = vector.extract_strided_slice %1213 {offsets = [0, 32], sizes = [8, 32], strides = [1, 1]} : vector<8x128xf32> to vector<8x32xf32>
    %1221 = arith.negf %1220 : vector<8x32xf32>
    %1222 = math.exp %1221 : vector<8x32xf32>
    %cst_397 = arith.constant 1.000000e+00 : f32
    %1223 = vector.broadcast %cst_397 : f32 to vector<8x32xf32>
    %1224 = arith.addf %1223, %1222 : vector<8x32xf32>
    %1225 = arith.divf %1223, %1224 : vector<8x32xf32>
    %1226 = vector.extract_strided_slice %1213 {offsets = [0, 64], sizes = [8, 32], strides = [1, 1]} : vector<8x128xf32> to vector<8x32xf32>
    %1227 = math.tanh %1226 : vector<8x32xf32>
    %1228 = vector.extract_strided_slice %1213 {offsets = [0, 96], sizes = [8, 32], strides = [1, 1]} : vector<8x128xf32> to vector<8x32xf32>
    %1229 = arith.negf %1228 : vector<8x32xf32>
    %1230 = math.exp %1229 : vector<8x32xf32>
    %cst_398 = arith.constant 1.000000e+00 : f32
    %1231 = vector.broadcast %cst_398 : f32 to vector<8x32xf32>
    %1232 = arith.addf %1231, %1230 : vector<8x32xf32>
    %1233 = arith.divf %1231, %1232 : vector<8x32xf32>
    %1234 = arith.mulf %1225, %1177 : vector<8x32xf32>
    %1235 = arith.mulf %1219, %1227 : vector<8x32xf32>
    %1236 = arith.addf %1234, %1235 : vector<8x32xf32>
    %1237 = math.tanh %1236 : vector<8x32xf32>
    %1238 = arith.mulf %1233, %1237 : vector<8x32xf32>
    %1239 = arith.index_cast %c3_i32_392 : i32 to index
    %c0_399 = arith.constant 0 : index
    %c0_400 = arith.constant 0 : index
    %1240 = vector.load %arg8[%1239, %c0_399, %c0_400] : memref<8x8x32xf32, #tpu.memory_space<vmem>>, vector<1x8x32xf32>
    %1241 = vector.shape_cast %1240 : vector<1x8x32xf32> to vector<8x32xf32>
    %1242 = arith.addf %1241, %1238 : vector<8x32xf32>
    %cst_401 = arith.constant dense<0.000000e+00> : vector<8xf32>
    %1243 = vector.multi_reduction <add>, %1242, %cst_401 [1] : vector<8x32xf32> to vector<8xf32>
    %1244 = vector.shape_cast %1243 : vector<8xf32> to vector<8x1xf32>
    %cst_402 = arith.constant 3.200000e+01 : f32
    %1245 = vector.broadcast %cst_402 : f32 to vector<8x1xf32>
    %1246 = arith.divf %1244, %1245 : vector<8x1xf32>
    %1247 = vector.broadcast %1246 : vector<8x1xf32> to vector<8x32xf32>
    %1248 = arith.subf %1242, %1247 : vector<8x32xf32>
    %1249 = arith.mulf %1248, %1248 : vector<8x32xf32>
    %cst_403 = arith.constant dense<0.000000e+00> : vector<8xf32>
    %1250 = vector.multi_reduction <add>, %1249, %cst_403 [1] : vector<8x32xf32> to vector<8xf32>
    %1251 = vector.shape_cast %1250 : vector<8xf32> to vector<8x1xf32>
    %cst_404 = arith.constant 3.200000e+01 : f32
    %1252 = vector.broadcast %cst_404 : f32 to vector<8x1xf32>
    %1253 = arith.divf %1251, %1252 : vector<8x1xf32>
    %1254 = vector.broadcast %1246 : vector<8x1xf32> to vector<8x32xf32>
    %1255 = arith.subf %1242, %1254 : vector<8x32xf32>
    %cst_405 = arith.constant 9.99999974E-6 : f32
    %1256 = vector.broadcast %cst_405 : f32 to vector<8x1xf32>
    %1257 = arith.addf %1253, %1256 : vector<8x1xf32>
    %1258 = math.rsqrt %1257 : vector<8x1xf32>
    %1259 = vector.broadcast %1258 : vector<8x1xf32> to vector<8x32xf32>
    %1260 = arith.mulf %1255, %1259 : vector<8x32xf32>
    %1261 = arith.mulf %1260, %1012 : vector<8x32xf32>
    %1262 = arith.addf %1261, %1016 : vector<8x32xf32>
    %1263 = arith.index_cast %c3_i32_392 : i32 to index
    %c0_406 = arith.constant 0 : index
    %c0_407 = arith.constant 0 : index
    %1264 = vector.load %arg8[%1263, %c0_406, %c0_407] : memref<8x8x32xf32, #tpu.memory_space<vmem>>, vector<1x8x32xf32>
    %1265 = vector.shape_cast %1264 : vector<1x8x32xf32> to vector<8x32xf32>
    %1266 = vector.shape_cast %1262 : vector<8x32xf32> to vector<1x8x32xf32>
    tpu.vector_store %arg8[%1263, %c0_406, %c0_407], %1266 {strides = array<i32>} : memref<8x8x32xf32, #tpu.memory_space<vmem>>, vector<1x8x32xf32>,
    %c4_i32_408 = arith.constant 4 : i32
    %1267 = arith.index_cast %c4_i32_408 : i32 to index
    %c0_409 = arith.constant 0 : index
    %c0_410 = arith.constant 0 : index
    %1268 = vector.load %arg9[%1267, %c0_409, %c0_410] : memref<8x8x128xf32, #tpu.memory_space<vmem>>, vector<1x8x128xf32>
    %1269 = vector.shape_cast %1268 : vector<1x8x128xf32> to vector<8x128xf32>
    %1270 = arith.truncf %1238 : vector<8x32xf32> to vector<8x32xbf16>
    %cst_411 = arith.constant dense<0.000000e+00> : vector<8x128xf32>
    %1271 = tpu.matmul %1270, %1006, %cst_411 {dimension_numbers = #tpu.dot_dimension_numbers<[1], [0], [0], [1], [0, 0, 1, 1], [], []>} : vector<8x32xbf16>, vector<32x128xbf16>, vector<8x128xf32> -> vector<8x128xf32>
    %1272 = arith.addf %1269, %1271 : vector<8x128xf32>
    %1273 = vector.extract_strided_slice %1272 {offsets = [0, 0], sizes = [8, 32], strides = [1, 1]} : vector<8x128xf32> to vector<8x32xf32>
    %1274 = arith.negf %1273 : vector<8x32xf32>
    %1275 = math.exp %1274 : vector<8x32xf32>
    %cst_412 = arith.constant 1.000000e+00 : f32
    %1276 = vector.broadcast %cst_412 : f32 to vector<8x32xf32>
    %1277 = arith.addf %1276, %1275 : vector<8x32xf32>
    %1278 = arith.divf %1276, %1277 : vector<8x32xf32>
    %1279 = vector.extract_strided_slice %1272 {offsets = [0, 32], sizes = [8, 32], strides = [1, 1]} : vector<8x128xf32> to vector<8x32xf32>
    %1280 = arith.negf %1279 : vector<8x32xf32>
    %1281 = math.exp %1280 : vector<8x32xf32>
    %cst_413 = arith.constant 1.000000e+00 : f32
    %1282 = vector.broadcast %cst_413 : f32 to vector<8x32xf32>
    %1283 = arith.addf %1282, %1281 : vector<8x32xf32>
    %1284 = arith.divf %1282, %1283 : vector<8x32xf32>
    %1285 = vector.extract_strided_slice %1272 {offsets = [0, 64], sizes = [8, 32], strides = [1, 1]} : vector<8x128xf32> to vector<8x32xf32>
    %1286 = math.tanh %1285 : vector<8x32xf32>
    %1287 = vector.extract_strided_slice %1272 {offsets = [0, 96], sizes = [8, 32], strides = [1, 1]} : vector<8x128xf32> to vector<8x32xf32>
    %1288 = arith.negf %1287 : vector<8x32xf32>
    %1289 = math.exp %1288 : vector<8x32xf32>
    %cst_414 = arith.constant 1.000000e+00 : f32
    %1290 = vector.broadcast %cst_414 : f32 to vector<8x32xf32>
    %1291 = arith.addf %1290, %1289 : vector<8x32xf32>
    %1292 = arith.divf %1290, %1291 : vector<8x32xf32>
    %1293 = arith.mulf %1284, %1236 : vector<8x32xf32>
    %1294 = arith.mulf %1278, %1286 : vector<8x32xf32>
    %1295 = arith.addf %1293, %1294 : vector<8x32xf32>
    %1296 = math.tanh %1295 : vector<8x32xf32>
    %1297 = arith.mulf %1292, %1296 : vector<8x32xf32>
    %1298 = arith.index_cast %c4_i32_408 : i32 to index
    %c0_415 = arith.constant 0 : index
    %c0_416 = arith.constant 0 : index
    %1299 = vector.load %arg8[%1298, %c0_415, %c0_416] : memref<8x8x32xf32, #tpu.memory_space<vmem>>, vector<1x8x32xf32>
    %1300 = vector.shape_cast %1299 : vector<1x8x32xf32> to vector<8x32xf32>
    %1301 = arith.addf %1300, %1297 : vector<8x32xf32>
    %cst_417 = arith.constant dense<0.000000e+00> : vector<8xf32>
    %1302 = vector.multi_reduction <add>, %1301, %cst_417 [1] : vector<8x32xf32> to vector<8xf32>
    %1303 = vector.shape_cast %1302 : vector<8xf32> to vector<8x1xf32>
    %cst_418 = arith.constant 3.200000e+01 : f32
    %1304 = vector.broadcast %cst_418 : f32 to vector<8x1xf32>
    %1305 = arith.divf %1303, %1304 : vector<8x1xf32>
    %1306 = vector.broadcast %1305 : vector<8x1xf32> to vector<8x32xf32>
    %1307 = arith.subf %1301, %1306 : vector<8x32xf32>
    %1308 = arith.mulf %1307, %1307 : vector<8x32xf32>
    %cst_419 = arith.constant dense<0.000000e+00> : vector<8xf32>
    %1309 = vector.multi_reduction <add>, %1308, %cst_419 [1] : vector<8x32xf32> to vector<8xf32>
    %1310 = vector.shape_cast %1309 : vector<8xf32> to vector<8x1xf32>
    %cst_420 = arith.constant 3.200000e+01 : f32
    %1311 = vector.broadcast %cst_420 : f32 to vector<8x1xf32>
    %1312 = arith.divf %1310, %1311 : vector<8x1xf32>
    %1313 = vector.broadcast %1305 : vector<8x1xf32> to vector<8x32xf32>
    %1314 = arith.subf %1301, %1313 : vector<8x32xf32>
    %cst_421 = arith.constant 9.99999974E-6 : f32
    %1315 = vector.broadcast %cst_421 : f32 to vector<8x1xf32>
    %1316 = arith.addf %1312, %1315 : vector<8x1xf32>
    %1317 = math.rsqrt %1316 : vector<8x1xf32>
    %1318 = vector.broadcast %1317 : vector<8x1xf32> to vector<8x32xf32>
    %1319 = arith.mulf %1314, %1318 : vector<8x32xf32>
    %1320 = arith.mulf %1319, %1012 : vector<8x32xf32>
    %1321 = arith.addf %1320, %1016 : vector<8x32xf32>
    %1322 = arith.index_cast %c4_i32_408 : i32 to index
    %c0_422 = arith.constant 0 : index
    %c0_423 = arith.constant 0 : index
    %1323 = vector.load %arg8[%1322, %c0_422, %c0_423] : memref<8x8x32xf32, #tpu.memory_space<vmem>>, vector<1x8x32xf32>
    %1324 = vector.shape_cast %1323 : vector<1x8x32xf32> to vector<8x32xf32>
    %1325 = vector.shape_cast %1321 : vector<8x32xf32> to vector<1x8x32xf32>
    tpu.vector_store %arg8[%1322, %c0_422, %c0_423], %1325 {strides = array<i32>} : memref<8x8x32xf32, #tpu.memory_space<vmem>>, vector<1x8x32xf32>,
    %c5_i32_424 = arith.constant 5 : i32
    %1326 = arith.index_cast %c5_i32_424 : i32 to index
    %c0_425 = arith.constant 0 : index
    %c0_426 = arith.constant 0 : index
    %1327 = vector.load %arg9[%1326, %c0_425, %c0_426] : memref<8x8x128xf32, #tpu.memory_space<vmem>>, vector<1x8x128xf32>
    %1328 = vector.shape_cast %1327 : vector<1x8x128xf32> to vector<8x128xf32>
    %1329 = arith.truncf %1297 : vector<8x32xf32> to vector<8x32xbf16>
    %cst_427 = arith.constant dense<0.000000e+00> : vector<8x128xf32>
    %1330 = tpu.matmul %1329, %1006, %cst_427 {dimension_numbers = #tpu.dot_dimension_numbers<[1], [0], [0], [1], [0, 0, 1, 1], [], []>} : vector<8x32xbf16>, vector<32x128xbf16>, vector<8x128xf32> -> vector<8x128xf32>
    %1331 = arith.addf %1328, %1330 : vector<8x128xf32>
    %1332 = vector.extract_strided_slice %1331 {offsets = [0, 0], sizes = [8, 32], strides = [1, 1]} : vector<8x128xf32> to vector<8x32xf32>
    %1333 = arith.negf %1332 : vector<8x32xf32>
    %1334 = math.exp %1333 : vector<8x32xf32>
    %cst_428 = arith.constant 1.000000e+00 : f32
    %1335 = vector.broadcast %cst_428 : f32 to vector<8x32xf32>
    %1336 = arith.addf %1335, %1334 : vector<8x32xf32>
    %1337 = arith.divf %1335, %1336 : vector<8x32xf32>
    %1338 = vector.extract_strided_slice %1331 {offsets = [0, 32], sizes = [8, 32], strides = [1, 1]} : vector<8x128xf32> to vector<8x32xf32>
    %1339 = arith.negf %1338 : vector<8x32xf32>
    %1340 = math.exp %1339 : vector<8x32xf32>
    %cst_429 = arith.constant 1.000000e+00 : f32
    %1341 = vector.broadcast %cst_429 : f32 to vector<8x32xf32>
    %1342 = arith.addf %1341, %1340 : vector<8x32xf32>
    %1343 = arith.divf %1341, %1342 : vector<8x32xf32>
    %1344 = vector.extract_strided_slice %1331 {offsets = [0, 64], sizes = [8, 32], strides = [1, 1]} : vector<8x128xf32> to vector<8x32xf32>
    %1345 = math.tanh %1344 : vector<8x32xf32>
    %1346 = vector.extract_strided_slice %1331 {offsets = [0, 96], sizes = [8, 32], strides = [1, 1]} : vector<8x128xf32> to vector<8x32xf32>
    %1347 = arith.negf %1346 : vector<8x32xf32>
    %1348 = math.exp %1347 : vector<8x32xf32>
    %cst_430 = arith.constant 1.000000e+00 : f32
    %1349 = vector.broadcast %cst_430 : f32 to vector<8x32xf32>
    %1350 = arith.addf %1349, %1348 : vector<8x32xf32>
    %1351 = arith.divf %1349, %1350 : vector<8x32xf32>
    %1352 = arith.mulf %1343, %1295 : vector<8x32xf32>
    %1353 = arith.mulf %1337, %1345 : vector<8x32xf32>
    %1354 = arith.addf %1352, %1353 : vector<8x32xf32>
    %1355 = math.tanh %1354 : vector<8x32xf32>
    %1356 = arith.mulf %1351, %1355 : vector<8x32xf32>
    %1357 = arith.index_cast %c5_i32_424 : i32 to index
    %c0_431 = arith.constant 0 : index
    %c0_432 = arith.constant 0 : index
    %1358 = vector.load %arg8[%1357, %c0_431, %c0_432] : memref<8x8x32xf32, #tpu.memory_space<vmem>>, vector<1x8x32xf32>
    %1359 = vector.shape_cast %1358 : vector<1x8x32xf32> to vector<8x32xf32>
    %1360 = arith.addf %1359, %1356 : vector<8x32xf32>
    %cst_433 = arith.constant dense<0.000000e+00> : vector<8xf32>
    %1361 = vector.multi_reduction <add>, %1360, %cst_433 [1] : vector<8x32xf32> to vector<8xf32>
    %1362 = vector.shape_cast %1361 : vector<8xf32> to vector<8x1xf32>
    %cst_434 = arith.constant 3.200000e+01 : f32
    %1363 = vector.broadcast %cst_434 : f32 to vector<8x1xf32>
    %1364 = arith.divf %1362, %1363 : vector<8x1xf32>
    %1365 = vector.broadcast %1364 : vector<8x1xf32> to vector<8x32xf32>
    %1366 = arith.subf %1360, %1365 : vector<8x32xf32>
    %1367 = arith.mulf %1366, %1366 : vector<8x32xf32>
    %cst_435 = arith.constant dense<0.000000e+00> : vector<8xf32>
    %1368 = vector.multi_reduction <add>, %1367, %cst_435 [1] : vector<8x32xf32> to vector<8xf32>
    %1369 = vector.shape_cast %1368 : vector<8xf32> to vector<8x1xf32>
    %cst_436 = arith.constant 3.200000e+01 : f32
    %1370 = vector.broadcast %cst_436 : f32 to vector<8x1xf32>
    %1371 = arith.divf %1369, %1370 : vector<8x1xf32>
    %1372 = vector.broadcast %1364 : vector<8x1xf32> to vector<8x32xf32>
    %1373 = arith.subf %1360, %1372 : vector<8x32xf32>
    %cst_437 = arith.constant 9.99999974E-6 : f32
    %1374 = vector.broadcast %cst_437 : f32 to vector<8x1xf32>
    %1375 = arith.addf %1371, %1374 : vector<8x1xf32>
    %1376 = math.rsqrt %1375 : vector<8x1xf32>
    %1377 = vector.broadcast %1376 : vector<8x1xf32> to vector<8x32xf32>
    %1378 = arith.mulf %1373, %1377 : vector<8x32xf32>
    %1379 = arith.mulf %1378, %1012 : vector<8x32xf32>
    %1380 = arith.addf %1379, %1016 : vector<8x32xf32>
    %1381 = arith.index_cast %c5_i32_424 : i32 to index
    %c0_438 = arith.constant 0 : index
    %c0_439 = arith.constant 0 : index
    %1382 = vector.load %arg8[%1381, %c0_438, %c0_439] : memref<8x8x32xf32, #tpu.memory_space<vmem>>, vector<1x8x32xf32>
    %1383 = vector.shape_cast %1382 : vector<1x8x32xf32> to vector<8x32xf32>
    %1384 = vector.shape_cast %1380 : vector<8x32xf32> to vector<1x8x32xf32>
    tpu.vector_store %arg8[%1381, %c0_438, %c0_439], %1384 {strides = array<i32>} : memref<8x8x32xf32, #tpu.memory_space<vmem>>, vector<1x8x32xf32>,
    %c6_i32_440 = arith.constant 6 : i32
    %1385 = arith.index_cast %c6_i32_440 : i32 to index
    %c0_441 = arith.constant 0 : index
    %c0_442 = arith.constant 0 : index
    %1386 = vector.load %arg9[%1385, %c0_441, %c0_442] : memref<8x8x128xf32, #tpu.memory_space<vmem>>, vector<1x8x128xf32>
    %1387 = vector.shape_cast %1386 : vector<1x8x128xf32> to vector<8x128xf32>
    %1388 = arith.truncf %1356 : vector<8x32xf32> to vector<8x32xbf16>
    %cst_443 = arith.constant dense<0.000000e+00> : vector<8x128xf32>
    %1389 = tpu.matmul %1388, %1006, %cst_443 {dimension_numbers = #tpu.dot_dimension_numbers<[1], [0], [0], [1], [0, 0, 1, 1], [], []>} : vector<8x32xbf16>, vector<32x128xbf16>, vector<8x128xf32> -> vector<8x128xf32>
    %1390 = arith.addf %1387, %1389 : vector<8x128xf32>
    %1391 = vector.extract_strided_slice %1390 {offsets = [0, 0], sizes = [8, 32], strides = [1, 1]} : vector<8x128xf32> to vector<8x32xf32>
    %1392 = arith.negf %1391 : vector<8x32xf32>
    %1393 = math.exp %1392 : vector<8x32xf32>
    %cst_444 = arith.constant 1.000000e+00 : f32
    %1394 = vector.broadcast %cst_444 : f32 to vector<8x32xf32>
    %1395 = arith.addf %1394, %1393 : vector<8x32xf32>
    %1396 = arith.divf %1394, %1395 : vector<8x32xf32>
    %1397 = vector.extract_strided_slice %1390 {offsets = [0, 32], sizes = [8, 32], strides = [1, 1]} : vector<8x128xf32> to vector<8x32xf32>
    %1398 = arith.negf %1397 : vector<8x32xf32>
    %1399 = math.exp %1398 : vector<8x32xf32>
    %cst_445 = arith.constant 1.000000e+00 : f32
    %1400 = vector.broadcast %cst_445 : f32 to vector<8x32xf32>
    %1401 = arith.addf %1400, %1399 : vector<8x32xf32>
    %1402 = arith.divf %1400, %1401 : vector<8x32xf32>
    %1403 = vector.extract_strided_slice %1390 {offsets = [0, 64], sizes = [8, 32], strides = [1, 1]} : vector<8x128xf32> to vector<8x32xf32>
    %1404 = math.tanh %1403 : vector<8x32xf32>
    %1405 = vector.extract_strided_slice %1390 {offsets = [0, 96], sizes = [8, 32], strides = [1, 1]} : vector<8x128xf32> to vector<8x32xf32>
    %1406 = arith.negf %1405 : vector<8x32xf32>
    %1407 = math.exp %1406 : vector<8x32xf32>
    %cst_446 = arith.constant 1.000000e+00 : f32
    %1408 = vector.broadcast %cst_446 : f32 to vector<8x32xf32>
    %1409 = arith.addf %1408, %1407 : vector<8x32xf32>
    %1410 = arith.divf %1408, %1409 : vector<8x32xf32>
    %1411 = arith.mulf %1402, %1354 : vector<8x32xf32>
    %1412 = arith.mulf %1396, %1404 : vector<8x32xf32>
    %1413 = arith.addf %1411, %1412 : vector<8x32xf32>
    %1414 = math.tanh %1413 : vector<8x32xf32>
    %1415 = arith.mulf %1410, %1414 : vector<8x32xf32>
    %1416 = arith.index_cast %c6_i32_440 : i32 to index
    %c0_447 = arith.constant 0 : index
    %c0_448 = arith.constant 0 : index
    %1417 = vector.load %arg8[%1416, %c0_447, %c0_448] : memref<8x8x32xf32, #tpu.memory_space<vmem>>, vector<1x8x32xf32>
    %1418 = vector.shape_cast %1417 : vector<1x8x32xf32> to vector<8x32xf32>
    %1419 = arith.addf %1418, %1415 : vector<8x32xf32>
    %cst_449 = arith.constant dense<0.000000e+00> : vector<8xf32>
    %1420 = vector.multi_reduction <add>, %1419, %cst_449 [1] : vector<8x32xf32> to vector<8xf32>
    %1421 = vector.shape_cast %1420 : vector<8xf32> to vector<8x1xf32>
    %cst_450 = arith.constant 3.200000e+01 : f32
    %1422 = vector.broadcast %cst_450 : f32 to vector<8x1xf32>
    %1423 = arith.divf %1421, %1422 : vector<8x1xf32>
    %1424 = vector.broadcast %1423 : vector<8x1xf32> to vector<8x32xf32>
    %1425 = arith.subf %1419, %1424 : vector<8x32xf32>
    %1426 = arith.mulf %1425, %1425 : vector<8x32xf32>
    %cst_451 = arith.constant dense<0.000000e+00> : vector<8xf32>
    %1427 = vector.multi_reduction <add>, %1426, %cst_451 [1] : vector<8x32xf32> to vector<8xf32>
    %1428 = vector.shape_cast %1427 : vector<8xf32> to vector<8x1xf32>
    %cst_452 = arith.constant 3.200000e+01 : f32
    %1429 = vector.broadcast %cst_452 : f32 to vector<8x1xf32>
    %1430 = arith.divf %1428, %1429 : vector<8x1xf32>
    %1431 = vector.broadcast %1423 : vector<8x1xf32> to vector<8x32xf32>
    %1432 = arith.subf %1419, %1431 : vector<8x32xf32>
    %cst_453 = arith.constant 9.99999974E-6 : f32
    %1433 = vector.broadcast %cst_453 : f32 to vector<8x1xf32>
    %1434 = arith.addf %1430, %1433 : vector<8x1xf32>
    %1435 = math.rsqrt %1434 : vector<8x1xf32>
    %1436 = vector.broadcast %1435 : vector<8x1xf32> to vector<8x32xf32>
    %1437 = arith.mulf %1432, %1436 : vector<8x32xf32>
    %1438 = arith.mulf %1437, %1012 : vector<8x32xf32>
    %1439 = arith.addf %1438, %1016 : vector<8x32xf32>
    %1440 = arith.index_cast %c6_i32_440 : i32 to index
    %c0_454 = arith.constant 0 : index
    %c0_455 = arith.constant 0 : index
    %1441 = vector.load %arg8[%1440, %c0_454, %c0_455] : memref<8x8x32xf32, #tpu.memory_space<vmem>>, vector<1x8x32xf32>
    %1442 = vector.shape_cast %1441 : vector<1x8x32xf32> to vector<8x32xf32>
    %1443 = vector.shape_cast %1439 : vector<8x32xf32> to vector<1x8x32xf32>
    tpu.vector_store %arg8[%1440, %c0_454, %c0_455], %1443 {strides = array<i32>} : memref<8x8x32xf32, #tpu.memory_space<vmem>>, vector<1x8x32xf32>,
    %c7_i32_456 = arith.constant 7 : i32
    %1444 = arith.index_cast %c7_i32_456 : i32 to index
    %c0_457 = arith.constant 0 : index
    %c0_458 = arith.constant 0 : index
    %1445 = vector.load %arg9[%1444, %c0_457, %c0_458] : memref<8x8x128xf32, #tpu.memory_space<vmem>>, vector<1x8x128xf32>
    %1446 = vector.shape_cast %1445 : vector<1x8x128xf32> to vector<8x128xf32>
    %1447 = arith.truncf %1415 : vector<8x32xf32> to vector<8x32xbf16>
    %cst_459 = arith.constant dense<0.000000e+00> : vector<8x128xf32>
    %1448 = tpu.matmul %1447, %1006, %cst_459 {dimension_numbers = #tpu.dot_dimension_numbers<[1], [0], [0], [1], [0, 0, 1, 1], [], []>} : vector<8x32xbf16>, vector<32x128xbf16>, vector<8x128xf32> -> vector<8x128xf32>
    %1449 = arith.addf %1446, %1448 : vector<8x128xf32>
    %1450 = vector.extract_strided_slice %1449 {offsets = [0, 0], sizes = [8, 32], strides = [1, 1]} : vector<8x128xf32> to vector<8x32xf32>
    %1451 = arith.negf %1450 : vector<8x32xf32>
    %1452 = math.exp %1451 : vector<8x32xf32>
    %cst_460 = arith.constant 1.000000e+00 : f32
    %1453 = vector.broadcast %cst_460 : f32 to vector<8x32xf32>
    %1454 = arith.addf %1453, %1452 : vector<8x32xf32>
    %1455 = arith.divf %1453, %1454 : vector<8x32xf32>
    %1456 = vector.extract_strided_slice %1449 {offsets = [0, 32], sizes = [8, 32], strides = [1, 1]} : vector<8x128xf32> to vector<8x32xf32>
    %1457 = arith.negf %1456 : vector<8x32xf32>
    %1458 = math.exp %1457 : vector<8x32xf32>
    %cst_461 = arith.constant 1.000000e+00 : f32
    %1459 = vector.broadcast %cst_461 : f32 to vector<8x32xf32>
    %1460 = arith.addf %1459, %1458 : vector<8x32xf32>
    %1461 = arith.divf %1459, %1460 : vector<8x32xf32>
    %1462 = vector.extract_strided_slice %1449 {offsets = [0, 64], sizes = [8, 32], strides = [1, 1]} : vector<8x128xf32> to vector<8x32xf32>
    %1463 = math.tanh %1462 : vector<8x32xf32>
    %1464 = vector.extract_strided_slice %1449 {offsets = [0, 96], sizes = [8, 32], strides = [1, 1]} : vector<8x128xf32> to vector<8x32xf32>
    %1465 = arith.negf %1464 : vector<8x32xf32>
    %1466 = math.exp %1465 : vector<8x32xf32>
    %cst_462 = arith.constant 1.000000e+00 : f32
    %1467 = vector.broadcast %cst_462 : f32 to vector<8x32xf32>
    %1468 = arith.addf %1467, %1466 : vector<8x32xf32>
    %1469 = arith.divf %1467, %1468 : vector<8x32xf32>
    %1470 = arith.mulf %1461, %1413 : vector<8x32xf32>
    %1471 = arith.mulf %1455, %1463 : vector<8x32xf32>
    %1472 = arith.addf %1470, %1471 : vector<8x32xf32>
    %1473 = math.tanh %1472 : vector<8x32xf32>
    %1474 = arith.mulf %1469, %1473 : vector<8x32xf32>
    %1475 = arith.index_cast %c7_i32_456 : i32 to index
    %c0_463 = arith.constant 0 : index
    %c0_464 = arith.constant 0 : index
    %1476 = vector.load %arg8[%1475, %c0_463, %c0_464] : memref<8x8x32xf32, #tpu.memory_space<vmem>>, vector<1x8x32xf32>
    %1477 = vector.shape_cast %1476 : vector<1x8x32xf32> to vector<8x32xf32>
    %1478 = arith.addf %1477, %1474 : vector<8x32xf32>
    %cst_465 = arith.constant dense<0.000000e+00> : vector<8xf32>
    %1479 = vector.multi_reduction <add>, %1478, %cst_465 [1] : vector<8x32xf32> to vector<8xf32>
    %1480 = vector.shape_cast %1479 : vector<8xf32> to vector<8x1xf32>
    %cst_466 = arith.constant 3.200000e+01 : f32
    %1481 = vector.broadcast %cst_466 : f32 to vector<8x1xf32>
    %1482 = arith.divf %1480, %1481 : vector<8x1xf32>
    %1483 = vector.broadcast %1482 : vector<8x1xf32> to vector<8x32xf32>
    %1484 = arith.subf %1478, %1483 : vector<8x32xf32>
    %1485 = arith.mulf %1484, %1484 : vector<8x32xf32>
    %cst_467 = arith.constant dense<0.000000e+00> : vector<8xf32>
    %1486 = vector.multi_reduction <add>, %1485, %cst_467 [1] : vector<8x32xf32> to vector<8xf32>
    %1487 = vector.shape_cast %1486 : vector<8xf32> to vector<8x1xf32>
    %cst_468 = arith.constant 3.200000e+01 : f32
    %1488 = vector.broadcast %cst_468 : f32 to vector<8x1xf32>
    %1489 = arith.divf %1487, %1488 : vector<8x1xf32>
    %1490 = vector.broadcast %1482 : vector<8x1xf32> to vector<8x32xf32>
    %1491 = arith.subf %1478, %1490 : vector<8x32xf32>
    %cst_469 = arith.constant 9.99999974E-6 : f32
    %1492 = vector.broadcast %cst_469 : f32 to vector<8x1xf32>
    %1493 = arith.addf %1489, %1492 : vector<8x1xf32>
    %1494 = math.rsqrt %1493 : vector<8x1xf32>
    %1495 = vector.broadcast %1494 : vector<8x1xf32> to vector<8x32xf32>
    %1496 = arith.mulf %1491, %1495 : vector<8x32xf32>
    %1497 = arith.mulf %1496, %1012 : vector<8x32xf32>
    %1498 = arith.addf %1497, %1016 : vector<8x32xf32>
    %1499 = arith.index_cast %c7_i32_456 : i32 to index
    %c0_470 = arith.constant 0 : index
    %c0_471 = arith.constant 0 : index
    %1500 = vector.load %arg8[%1499, %c0_470, %c0_471] : memref<8x8x32xf32, #tpu.memory_space<vmem>>, vector<1x8x32xf32>
    %1501 = vector.shape_cast %1500 : vector<1x8x32xf32> to vector<8x32xf32>
    %1502 = vector.shape_cast %1498 : vector<8x32xf32> to vector<1x8x32xf32>
    tpu.vector_store %arg8[%1499, %c0_470, %c0_471], %1502 {strides = array<i32>} : memref<8x8x32xf32, #tpu.memory_space<vmem>>, vector<1x8x32xf32>,
    %c8_i32_472 = arith.constant 8 : i32
    return
  }
  func.func @transform_0(%arg0: i32) -> (i32, i32, i32) {
    %c0_i32 = arith.constant 0 : i32
    %c0_i32_0 = arith.constant 0 : i32
    %c0_i32_1 = arith.constant 0 : i32
    return %c0_i32, %arg0, %c0_i32_0 : i32, i32, i32
  }
  func.func @transform_1(%arg0: i32) -> (i32, i32, i32) {
    %c0_i32 = arith.constant 0 : i32
    %c0_i32_0 = arith.constant 0 : i32
    %c0_i32_1 = arith.constant 0 : i32
    return %c0_i32, %arg0, %c0_i32_0 : i32, i32, i32
  }
  func.func @transform_2(%arg0: i32) -> (i32, i32, i32) {
    %c0_i32 = arith.constant 0 : i32
    %c0_i32_0 = arith.constant 0 : i32
    %c0_i32_1 = arith.constant 0 : i32
    %c0_i32_2 = arith.constant 0 : i32
    return %c0_i32, %c0_i32_0, %c0_i32_1 : i32, i32, i32
  }
  func.func @transform_3(%arg0: i32) -> (i32, i32, i32) {
    %c0_i32 = arith.constant 0 : i32
    %c0_i32_0 = arith.constant 0 : i32
    %c0_i32_1 = arith.constant 0 : i32
    %c0_i32_2 = arith.constant 0 : i32
    return %c0_i32, %c0_i32_0, %c0_i32_1 : i32, i32, i32
  }
  func.func @transform_4(%arg0: i32) -> (i32, i32, i32) {
    %c0_i32 = arith.constant 0 : i32
    %c0_i32_0 = arith.constant 0 : i32
    %c0_i32_1 = arith.constant 0 : i32
    %c0_i32_2 = arith.constant 0 : i32
    return %c0_i32, %c0_i32_0, %c0_i32_1 : i32, i32, i32
  }
  func.func @transform_5(%arg0: i32) -> (i32, i32, i32) {
    %c0_i32 = arith.constant 0 : i32
    %c0_i32_0 = arith.constant 0 : i32
    %c0_i32_1 = arith.constant 0 : i32
    %c0_i32_2 = arith.constant 0 : i32
    return %c0_i32, %c0_i32_0, %c0_i32_1 : i32, i32, i32
  }
  func.func @transform_6(%arg0: i32) -> (i32, i32, i32) {
    %c0_i32 = arith.constant 0 : i32
    %c0_i32_0 = arith.constant 0 : i32
    %c0_i32_1 = arith.constant 0 : i32
    %c0_i32_2 = arith.constant 0 : i32
    return %c0_i32, %c0_i32_0, %c0_i32_1 : i32, i32, i32
  }
  func.func @transform_7(%arg0: i32) -> (i32, i32, i32) {
    %c0_i32 = arith.constant 0 : i32
    %c0_i32_0 = arith.constant 0 : i32
    %c0_i32_1 = arith.constant 0 : i32
    return %c0_i32, %arg0, %c0_i32_0 : i32, i32, i32
  }
}

</mosaic_0001>

<llo_original>
// kernel: tpu_custom_call.1
$region0: #{tpu_custom_call.1}
  #allocation0 [shape = 'u32[]', space=smem, size = 0x4, offset = 0x4, fixed_abs, tag = 'smem constant byte address 0x4 - core index']
  #allocation1 [shape = 'u32[72,128]{1,0:T(1,128)}', space=vmem, size = 0x9000, scoped, tag = 'internal scratch']
  #allocation2 [shape = 'f32[8,8,128]{2,1,0:T(8,128)}', space=vmem, size = 0x8000, scoped, tag = 'scratch operand']
  %s0 = inlined_call_operand.vmem [shape: f32[8,16,1], index: 0, kind: input, shape index: {}]
  %s1 = inlined_call_operand.vmem [shape: f32[8,16,32], index: 1, kind: input, shape index: {}]
  %s2 = inlined_call_operand.hbm [shape: bf16[3,32,128], index: 2, kind: input, shape index: {}]
  %s3 = inlined_call_operand.hbm [shape: bf16[3,32,128], index: 3, kind: input, shape index: {}]
  %s4 = inlined_call_operand.vmem [shape: f32[3,1,128], index: 4, kind: input, shape index: {}]
  %s5 = inlined_call_operand.vmem [shape: f32[3,1,32], index: 5, kind: input, shape index: {}]
  %s6 = inlined_call_operand.vmem [shape: f32[3,1,32], index: 6, kind: input, shape index: {}]
  %s7 = inlined_call_operand.hbm [shape: f32[8,16,32], index: 7, kind: output, shape index: {}]
  %s8 = sld [smem:[#allocation0]]
  $region145: #{tpu_custom_call.1} parent=0
    _
  %s10 = ssub.s32 1, %s8
  %s11 = scalar_select 0, %s10, %s8
  $region1: #{tpu_custom_call.1} parent=0
    #allocation3 [shape = 'u8[65536]{0}', space=vmem, size = 0x10000, scoped, tag = 'input window, operand 0']
    #allocation4 [shape = 'u8[65536]{0}', space=vmem, size = 0x10000, scoped, tag = 'input window, operand 1']
    #allocation5 [shape = 'u8[24576]{0}', space=vmem, size = 0x6000, scoped, tag = 'input window, operand 2, single buffered']
    #allocation6 [shape = 's32[2]{0}', space=sflag, size = 0x8, scoped, tag = 'scoped memory for tpu_custom_call.1']
    #allocation7 [shape = 's32[2]{0}', space=sflag, size = 0x8, scoped, tag = 'scoped memory for tpu_custom_call.1']
    #allocation8 [shape = 'u8[24576]{0}', space=vmem, size = 0x6000, scoped, tag = 'input window, operand 3, single buffered']
    #allocation9 [shape = 's32[1]{0}', space=sflag, size = 0x4, scoped, tag = 'scoped memory for tpu_custom_call.1']
    #allocation10 [shape = 'u8[65536]{0}', space=vmem, size = 0x10000, scoped, tag = 'output window, operand 0']
    %12 = vsyncpa [#allocation6], 0
    %13 = vsyncpa [#allocation9], 0
    %14 = vsyncpa [#allocation7], 0
    %s15 = scalar_lea.sflag [#allocation7], 1
    %16 = vsyncpa %s15, 0
    loop: start=0, step=1, limit=4
    $region2: #{tpu_custom_call.1} parent=1 // loop_pre_header
      _
    $region3: #{tpu_custom_call.1} parent=1 // loop_header
      %s18 = sphi 0, %s22
      %p19 = scmp.ge.s32.totalorder %s18, 4
      %s28 = sphi 0, %s30
      %s31 = sphi 0, %s28
      %s32 = sphi 0, %s31
      %s48 = sphi 0, %s32
      %s54 = sphi 0, %s56
      %s57 = sphi 0, %s54
      %s58 = sphi 0, %s57
      %s74 = sphi 0, %s58
      %s78 = sphi 0, %s78
      %s80 = sphi 0, %s78
      %s81 = sphi 0, %s80
      %s95 = sphi 0, %s81
      %s99 = sphi 0, %s99
      %s101 = sphi 0, %s99
      %s102 = sphi 0, %s101
      %s116 = sphi 0, %s102
      %s120 = sphi 0, %s120
      %s122 = sphi 0, %s120
      %s123 = sphi 0, %s122
      %s137 = sphi 0, %s123
      %s141 = sphi 0, %s141
      %s143 = sphi 0, %s141
      %s144 = sphi 0, %s143
      %s158 = sphi 0, %s144
      %s162 = sphi 0, %s162
      %s164 = sphi 0, %s162
      %s165 = sphi 0, %s164
      %s179 = sphi 0, %s165
      %s185 = sphi 0, %s187
      %s188 = sphi 0, %s185
      %s189 = sphi 0, %s188
      %s205 = sphi 0, %s189
    $region4: #{tpu_custom_call.1} parent=1 // loop_header_branch
      %21 = sbr.rel (%p19) target = $region8
    $region5: #{tpu_custom_call.1} parent=1 // loop_body
      %s23 = ssub.s32 %s18, 1
      %s24 = ssub.s32 %s18, 2
      %s25 = sadd.s32 %s18, 1
      %s26 = ssub.s32 %s18, %s25
      %p27 = scmp.eq.s32.totalorder %s26, 0
      %s29 = sadd.s32 %s28, 1
      %s30 = scalar_select %p27, %s28, %s29
      %p33 = pneg %p27
      %p34 = scmp.eq.s32.totalorder %s18, 1
      %p35 = por %p33, %p34
      %p36 = scmp.ne.s32.totalorder %s28, %s31
      %p37 = scmp.eq.s32.totalorder %s18, 0
      %p38 = por %p36, %p37
      %p39 = scmp.ne.s32.totalorder %s28, %s31
      %p40 = scmp.eq.s32.totalorder %s23, 1
      %p41 = por %p39, %p40
      %p42 = scmp.ne.s32.totalorder %s31, %s32
      %p43 = scmp.eq.s32.totalorder %s23, 0
      %p44 = por %p42, %p43
      %p45 = scmp.ne.s32.totalorder %s31, %s32
      %p46 = scmp.eq.s32.totalorder %s24, 1
      %p47 = por %p45, %p46
      %p49 = scmp.ne.s32.totalorder %s32, %s48
      %p50 = scmp.eq.s32.totalorder %s24, 0
      %p51 = por %p49, %p50
      %s52 = ssub.s32 %s18, %s25
      %p53 = scmp.eq.s32.totalorder %s52, 0
      %s55 = sadd.s32 %s54, 1
      %s56 = scalar_select %p53, %s54, %s55
      %p59 = pneg %p53
      %p60 = scmp.eq.s32.totalorder %s18, 1
      %p61 = por %p59, %p60
      %p62 = scmp.ne.s32.totalorder %s54, %s57
      %p63 = scmp.eq.s32.totalorder %s18, 0
      %p64 = por %p62, %p63
      %p65 = scmp.ne.s32.totalorder %s54, %s57
      %p66 = scmp.eq.s32.totalorder %s23, 1
      %p67 = por %p65, %p66
      %p68 = scmp.ne.s32.totalorder %s57, %s58
      %p69 = scmp.eq.s32.totalorder %s23, 0
      %p70 = por %p68, %p69
      %p71 = scmp.ne.s32.totalorder %s57, %s58
      %p72 = scmp.eq.s32.totalorder %s24, 1
      %p73 = por %p71, %p72
      %p75 = scmp.ne.s32.totalorder %s58, %s74
      %p76 = scmp.eq.s32.totalorder %s24, 0
      %p77 = por %p75, %p76
      %s79 = sadd.s32 %s78, 1
      %p82 = scmp.eq.s32.totalorder %s18, 1
      %p83 = scmp.ne.s32.totalorder %s78, %s80
      %p84 = scmp.eq.s32.totalorder %s18, 0
      %p85 = por %p83, %p84
      %p86 = scmp.ne.s32.totalorder %s78, %s80
      %p87 = scmp.eq.s32.totalorder %s23, 1
      %p88 = por %p86, %p87
      %p89 = scmp.ne.s32.totalorder %s80, %s81
      %p90 = scmp.eq.s32.totalorder %s23, 0
      %p91 = por %p89, %p90
      %p92 = scmp.ne.s32.totalorder %s80, %s81
      %p93 = scmp.eq.s32.totalorder %s24, 1
      %p94 = por %p92, %p93
      %p96 = scmp.ne.s32.totalorder %s81, %s95
      %p97 = scmp.eq.s32.totalorder %s24, 0
      %p98 = por %p96, %p97
      %s100 = sadd.s32 %s99, 1
      %p103 = scmp.eq.s32.totalorder %s18, 1
      %p104 = scmp.ne.s32.totalorder %s99, %s101
      %p105 = scmp.eq.s32.totalorder %s18, 0
      %p106 = por %p104, %p105
      %p107 = scmp.ne.s32.totalorder %s99, %s101
      %p108 = scmp.eq.s32.totalorder %s23, 1
      %p109 = por %p107, %p108
      %p110 = scmp.ne.s32.totalorder %s101, %s102
      %p111 = scmp.eq.s32.totalorder %s23, 0
      %p112 = por %p110, %p111
      %p113 = scmp.ne.s32.totalorder %s101, %s102
      %p114 = scmp.eq.s32.totalorder %s24, 1
      %p115 = por %p113, %p114
      %p117 = scmp.ne.s32.totalorder %s102, %s116
      %p118 = scmp.eq.s32.totalorder %s24, 0
      %p119 = por %p117, %p118
      %s121 = sadd.s32 %s120, 1
      %p124 = scmp.eq.s32.totalorder %s18, 1
      %p125 = scmp.ne.s32.totalorder %s120, %s122
      %p126 = scmp.eq.s32.totalorder %s18, 0
      %p127 = por %p125, %p126
      %p128 = scmp.ne.s32.totalorder %s120, %s122
      %p129 = scmp.eq.s32.totalorder %s23, 1
      %p130 = por %p128, %p129
      %p131 = scmp.ne.s32.totalorder %s122, %s123
      %p132 = scmp.eq.s32.totalorder %s23, 0
      %p133 = por %p131, %p132
      %p134 = scmp.ne.s32.totalorder %s122, %s123
      %p135 = scmp.eq.s32.totalorder %s24, 1
      %p136 = por %p134, %p135
      %p138 = scmp.ne.s32.totalorder %s123, %s137
      %p139 = scmp.eq.s32.totalorder %s24, 0
      %p140 = por %p138, %p139
      %s142 = sadd.s32 %s141, 1
      %p145 = scmp.eq.s32.totalorder %s18, 1
      %p146 = scmp.ne.s32.totalorder %s141, %s143
      %p147 = scmp.eq.s32.totalorder %s18, 0
      %p148 = por %p146, %p147
      %p149 = scmp.ne.s32.totalorder %s141, %s143
      %p150 = scmp.eq.s32.totalorder %s23, 1
      %p151 = por %p149, %p150
      %p152 = scmp.ne.s32.totalorder %s143, %s144
      %p153 = scmp.eq.s32.totalorder %s23, 0
      %p154 = por %p152, %p153
      %p155 = scmp.ne.s32.totalorder %s143, %s144
      %p156 = scmp.eq.s32.totalorder %s24, 1
      %p157 = por %p155, %p156
      %p159 = scmp.ne.s32.totalorder %s144, %s158
      %p160 = scmp.eq.s32.totalorder %s24, 0
      %p161 = por %p159, %p160
      %s163 = sadd.s32 %s162, 1
      %p166 = scmp.eq.s32.totalorder %s18, 1
      %p167 = scmp.ne.s32.totalorder %s162, %s164
      %p168 = scmp.eq.s32.totalorder %s18, 0
      %p169 = por %p167, %p168
      %p170 = scmp.ne.s32.totalorder %s162, %s164
      %p171 = scmp.eq.s32.totalorder %s23, 1
      %p172 = por %p170, %p171
      %p173 = scmp.ne.s32.totalorder %s164, %s165
      %p174 = scmp.eq.s32.totalorder %s23, 0
      %p175 = por %p173, %p174
      %p176 = scmp.ne.s32.totalorder %s164, %s165
      %p177 = scmp.eq.s32.totalorder %s24, 1
      %p178 = por %p176, %p177
      %p180 = scmp.ne.s32.totalorder %s165, %s179
      %p181 = scmp.eq.s32.totalorder %s24, 0
      %p182 = por %p180, %p181
      %s183 = ssub.s32 %s18, %s25
      %p184 = scmp.eq.s32.totalorder %s183, 0
      %s186 = sadd.s32 %s185, 1
      %s187 = scalar_select %p184, %s185, %s186
      %p190 = pneg %p184
      %p191 = scmp.eq.s32.totalorder %s18, 1
      %p192 = por %p190, %p191
      %p193 = scmp.ne.s32.totalorder %s185, %s188
      %p194 = scmp.eq.s32.totalorder %s18, 0
      %p195 = por %p193, %p194
      %p196 = scmp.ne.s32.totalorder %s185, %s188
      %p197 = scmp.eq.s32.totalorder %s23, 1
      %p198 = por %p196, %p197
      %p199 = scmp.ne.s32.totalorder %s188, %s189
      %p200 = scmp.eq.s32.totalorder %s23, 0
      %p201 = por %p199, %p200
      %p202 = scmp.ne.s32.totalorder %s188, %s189
      %p203 = scmp.eq.s32.totalorder %s24, 1
      %p204 = por %p202, %p203
      %p206 = scmp.ne.s32.totalorder %s189, %s205
      %p207 = scmp.eq.s32.totalorder %s24, 0
      %p208 = por %p206, %p207
      %p209 = scmp.le.s32.totalorder 1, %s18
      %p210 = scmp.lt.s32.totalorder %s18, 3
      %p211 = pnand %p209, %p210
      %p212 = pneg %p211
      // Predicated region
      $region9: #{tpu_custom_call.1} parent=5 // pred_check
        _
      $region10: #{tpu_custom_call.1} parent=5 // pred_check_branch
        %214 = sbr.rel (%p211) target = $region12
      $region11: #{tpu_custom_call.1} parent=5 // pred_region
        %s215 = ssub.s32 %s18, 1
        // Predicated region
        $region13: #{tpu_custom_call.1} parent=11 // pred_check
          %p216 = pneg %p91
        $region14: #{tpu_custom_call.1} parent=11 // pred_check_branch
          %218 = sbr.rel (%p216) target = $region16
        $region15: #{tpu_custom_call.1} parent=11 // pred_region
          %220 = vsyncadd [#allocation6], 0
          %s221 = sshll.u32 %s2, 4
          %s222 = int_to_ptr.hbm [resolvable:$true] %s221
          %s223 = sshll.u32 [#allocation5], 4
          %s224 = int_to_ptr.vmem [resolvable:$true] %s223
          %229 = dma.hbm_to_vmem [thread:$0]  %s222, 768, %s224, [#allocation6], 64, 64, 4
        $region16: #{tpu_custom_call.1} parent=11 // pred_fallthru
          _
        // Predicated region
        $region17: #{tpu_custom_call.1} parent=11 // pred_check
          %p230 = pneg %p112
        $region18: #{tpu_custom_call.1} parent=11 // pred_check_branch
          %232 = sbr.rel (%p230) target = $region20
        $region19: #{tpu_custom_call.1} parent=11 // pred_region
          %234 = vsyncadd [#allocation9], 0
          %s235 = sshll.u32 %s3, 4
          %s236 = int_to_ptr.hbm [resolvable:$true] %s235
          %s237 = sshll.u32 [#allocation8], 4
          %s238 = int_to_ptr.vmem [resolvable:$true] %s237
          %243 = dma.hbm_to_vmem [thread:$0]  %s236, 768, %s238, [#allocation9], 64, 64, 4
        $region20: #{tpu_custom_call.1} parent=11 // pred_fallthru
          _
        // Predicated region
        $region21: #{tpu_custom_call.1} parent=11 // pred_check
          %p244 = pneg %p133
        $region22: #{tpu_custom_call.1} parent=11 // pred_check_branch
          %246 = sbr.rel (%p244) target = $region24
        $region23: #{tpu_custom_call.1} parent=11 // pred_region
          _
        $region24: #{tpu_custom_call.1} parent=11 // pred_fallthru
          _
        // Predicated region
        $region25: #{tpu_custom_call.1} parent=11 // pred_check
          %p247 = pneg %p154
        $region26: #{tpu_custom_call.1} parent=11 // pred_check_branch
          %249 = sbr.rel (%p247) target = $region28
        $region27: #{tpu_custom_call.1} parent=11 // pred_region
          _
        $region28: #{tpu_custom_call.1} parent=11 // pred_fallthru
          _
        // Predicated region
        $region29: #{tpu_custom_call.1} parent=11 // pred_check
          %p250 = pneg %p175
        $region30: #{tpu_custom_call.1} parent=11 // pred_check_branch
          %252 = sbr.rel (%p250) target = $region32
        $region31: #{tpu_custom_call.1} parent=11 // pred_region
          _
        $region32: #{tpu_custom_call.1} parent=11 // pred_fallthru
          _
      $region12: #{tpu_custom_call.1} parent=5 // pred_fallthru
        _
      %p253 = scmp.lt.s32.totalorder %s18, 2
      // Predicated region
      $region33: #{tpu_custom_call.1} parent=5 // pred_check
        %p254 = pneg %p253
      $region34: #{tpu_custom_call.1} parent=5 // pred_check_branch
        %256 = sbr.rel (%p254) target = $region36
      $region35: #{tpu_custom_call.1} parent=5 // pred_region
        // Predicated region
        $region37: #{tpu_custom_call.1} parent=35 // pred_check
          %p257 = pneg %p38
        $region38: #{tpu_custom_call.1} parent=35 // pred_check_branch
          %259 = sbr.rel (%p257) target = $region40
        $region39: #{tpu_custom_call.1} parent=35 // pred_region
          %s260 = sand.u32 %s28, 1
          %s261 = sand.u32 %s28, 1
          %s262 = smul.addr %s261, 64
          %s263 = scalar_lea.vmem [#allocation3], %s262
          %s264 = smul.addr %s18, 8
          %s265 = scalar_lea.vmem %s0, %s264
          // Predicated region
          $region41: #{tpu_custom_call.1} parent=39 // pred_check
            _
          $region42: #{tpu_custom_call.1} parent=39 // pred_check_branch
            %267 = sbr.rel (0) target = $region44
          $region43: #{tpu_custom_call.1} parent=39 // pred_region
            // Predicated region
            $region45: #{tpu_custom_call.1} parent=43 // pred_check
              _
            $region46: #{tpu_custom_call.1} parent=43 // pred_check_branch
              %269 = sbr.rel (0) target = $region48
            $region47: #{tpu_custom_call.1} parent=43 // pred_region
              // Predicated region
              $region60: #{tpu_custom_call.1} parent=47 // pred_check
                _
              $region61: #{tpu_custom_call.1} parent=47 // pred_check_branch
                %299 = sbr.rel (0) target = $region63
              $region62: #{tpu_custom_call.1} parent=47 // pred_region
                loop: start=0, step=1, limit=1
                $region64: #{tpu_custom_call.1} parent=62 // loop_pre_header
                  _
                $region65: #{tpu_custom_call.1} parent=62 // loop_header
                  %s301 = sphi 0, %s305
                  %p302 = scmp.ge.s32.totalorder %s301, 1
                  %s306 = sphi %s265, %s265
                  %s307 = sphi %s263, %s263
                $region66: #{tpu_custom_call.1} parent=62 // loop_header_branch
                  %304 = sbr.rel (%p302) target = $region70
                $region67: #{tpu_custom_call.1} parent=62 // loop_body
                  %v308 = vld [vmem:[%s306] sm:$0xff]
                  %309 = vst [vmem:[%s307] sm:$0xff] %v308
                  %v310 = vld [vmem:[%s306 + $0x10] sm:$0xff]
                  %311 = vst [vmem:[%s307 + $0x8] sm:$0xff] %v310
                  %v312 = vld [vmem:[%s306 + $0x20] sm:$0xff]
                  %313 = vst [vmem:[%s307 + $0x10] sm:$0xff] %v312
                  %v314 = vld [vmem:[%s306 + $0x30] sm:$0xff]
                  %315 = vst [vmem:[%s307 + $0x18] sm:$0xff] %v314
                  %v316 = vld [vmem:[%s306 + $0x40] sm:$0xff]
                  %317 = vst [vmem:[%s307 + $0x20] sm:$0xff] %v316
                  %v318 = vld [vmem:[%s306 + $0x50] sm:$0xff]
                  %319 = vst [vmem:[%s307 + $0x28] sm:$0xff] %v318
                  %v320 = vld [vmem:[%s306 + $0x60] sm:$0xff]
                  %321 = vst [vmem:[%s307 + $0x30] sm:$0xff] %v320
                  %v322 = vld [vmem:[%s306 + $0x70] sm:$0xff]
                  %323 = vst [vmem:[%s307 + $0x38] sm:$0xff] %v322
                $region68: #{tpu_custom_call.1} parent=62 // loop_footer
                  %s305 = sadd.s32 1, %s301
                $region69: #{tpu_custom_call.1} parent=62 // loop_footer_branch
                  %300 = sbr.rel target = $region65
                $region70: #{tpu_custom_call.1} parent=62 // loop_exit
                  _
              $region63: #{tpu_custom_call.1} parent=47 // pred_fallthru
                _
              // Predicated region
              $region71: #{tpu_custom_call.1} parent=47 // pred_check
                _
              $region72: #{tpu_custom_call.1} parent=47 // pred_check_branch
                %325 = sbr.rel target = $region74
              $region73: #{tpu_custom_call.1} parent=47 // pred_region
                _
              $region74: #{tpu_custom_call.1} parent=47 // pred_fallthru
                _
            $region48: #{tpu_custom_call.1} parent=43 // pred_fallthru
              _
            // Predicated region
            $region49: #{tpu_custom_call.1} parent=43 // pred_check
              _
            $region50: #{tpu_custom_call.1} parent=43 // pred_check_branch
              %271 = sbr.rel target = $region52
            $region51: #{tpu_custom_call.1} parent=43 // pred_region
              %s273 = ssub.s32 256, 1
              loop: start=0, step=1, limit=1
              $region53: #{tpu_custom_call.1} parent=51 // loop_pre_header
                _
              $region54: #{tpu_custom_call.1} parent=51 // loop_header
                %s275 = sphi 0, %s279
                %p276 = scmp.ge.s32.totalorder %s275, 1
                %s280 = sphi %s265, %s265
                %s281 = sphi %s263, %s263
              $region55: #{tpu_custom_call.1} parent=51 // loop_header_branch
                %278 = sbr.rel (%p276) target = $region59
              $region56: #{tpu_custom_call.1} parent=51 // loop_body
                %v282 = vld [vmem:[%s280] sm:%s273]
                %283 = vst [vmem:[%s281] sm:%s273] %v282
                %v284 = vld [vmem:[%s280 + $0x10] sm:%s273]
                %285 = vst [vmem:[%s281 + $0x8] sm:%s273] %v284
                %v286 = vld [vmem:[%s280 + $0x20] sm:%s273]
                %287 = vst [vmem:[%s281 + $0x10] sm:%s273] %v286
                %v288 = vld [vmem:[%s280 + $0x30] sm:%s273]
                %289 = vst [vmem:[%s281 + $0x18] sm:%s273] %v288
                %v290 = vld [vmem:[%s280 + $0x40] sm:%s273]
                %291 = vst [vmem:[%s281 + $0x20] sm:%s273] %v290
                %v292 = vld [vmem:[%s280 + $0x50] sm:%s273]
                %293 = vst [vmem:[%s281 + $0x28] sm:%s273] %v292
                %v294 = vld [vmem:[%s280 + $0x60] sm:%s273]
                %295 = vst [vmem:[%s281 + $0x30] sm:%s273] %v294
                %v296 = vld [vmem:[%s280 + $0x70] sm:%s273]
                %297 = vst [vmem:[%s281 + $0x38] sm:%s273] %v296
              $region57: #{tpu_custom_call.1} parent=51 // loop_footer
                %s279 = sadd.s32 1, %s275
              $region58: #{tpu_custom_call.1} parent=51 // loop_footer_branch
                %274 = sbr.rel target = $region54
              $region59: #{tpu_custom_call.1} parent=51 // loop_exit
                _
            $region52: #{tpu_custom_call.1} parent=43 // pred_fallthru
              _
          $region44: #{tpu_custom_call.1} parent=39 // pred_fallthru
            _
          %326 = vnop
        $region40: #{tpu_custom_call.1} parent=35 // pred_fallthru
          _
        // Predicated region
        $region75: #{tpu_custom_call.1} parent=35 // pred_check
          %p327 = pneg %p64
        $region76: #{tpu_custom_call.1} parent=35 // pred_check_branch
          %329 = sbr.rel (%p327) target = $region78
        $region77: #{tpu_custom_call.1} parent=35 // pred_region
          %s330 = sand.u32 %s54, 1
          %s331 = sand.u32 %s54, 1
          %s332 = smul.addr %s331, 64
          %s333 = scalar_lea.vmem [#allocation4], %s332
          %s334 = smul.addr %s18, 8
          %s335 = scalar_lea.vmem %s1, %s334
          // Predicated region
          $region79: #{tpu_custom_call.1} parent=77 // pred_check
            _
          $region80: #{tpu_custom_call.1} parent=77 // pred_check_branch
            %337 = sbr.rel (0) target = $region82
          $region81: #{tpu_custom_call.1} parent=77 // pred_region
            // Predicated region
            $region83: #{tpu_custom_call.1} parent=81 // pred_check
              _
            $region84: #{tpu_custom_call.1} parent=81 // pred_check_branch
              %339 = sbr.rel (0) target = $region86
            $region85: #{tpu_custom_call.1} parent=81 // pred_region
              // Predicated region
              $region98: #{tpu_custom_call.1} parent=85 // pred_check
                _
              $region99: #{tpu_custom_call.1} parent=85 // pred_check_branch
                %369 = sbr.rel (0) target = $region101
              $region100: #{tpu_custom_call.1} parent=85 // pred_region
                loop: start=0, step=1, limit=1
                $region102: #{tpu_custom_call.1} parent=100 // loop_pre_header
                  _
                $region103: #{tpu_custom_call.1} parent=100 // loop_header
                  %s371 = sphi 0, %s375
                  %p372 = scmp.ge.s32.totalorder %s371, 1
                  %s376 = sphi %s335, %s335
                  %s377 = sphi %s333, %s333
                $region104: #{tpu_custom_call.1} parent=100 // loop_header_branch
                  %374 = sbr.rel (%p372) target = $region108
                $region105: #{tpu_custom_call.1} parent=100 // loop_body
                  %v378 = vld [vmem:[%s376] sm:$0xff]
                  %379 = vst [vmem:[%s377] sm:$0xff] %v378
                  %v380 = vld [vmem:[%s376 + $0x10] sm:$0xff]
                  %381 = vst [vmem:[%s377 + $0x8] sm:$0xff] %v380
                  %v382 = vld [vmem:[%s376 + $0x20] sm:$0xff]
                  %383 = vst [vmem:[%s377 + $0x10] sm:$0xff] %v382
                  %v384 = vld [vmem:[%s376 + $0x30] sm:$0xff]
                  %385 = vst [vmem:[%s377 + $0x18] sm:$0xff] %v384
                  %v386 = vld [vmem:[%s376 + $0x40] sm:$0xff]
                  %387 = vst [vmem:[%s377 + $0x20] sm:$0xff] %v386
                  %v388 = vld [vmem:[%s376 + $0x50] sm:$0xff]
                  %389 = vst [vmem:[%s377 + $0x28] sm:$0xff] %v388
                  %v390 = vld [vmem:[%s376 + $0x60] sm:$0xff]
                  %391 = vst [vmem:[%s377 + $0x30] sm:$0xff] %v390
                  %v392 = vld [vmem:[%s376 + $0x70] sm:$0xff]
                  %393 = vst [vmem:[%s377 + $0x38] sm:$0xff] %v392
                $region106: #{tpu_custom_call.1} parent=100 // loop_footer
                  %s375 = sadd.s32 1, %s371
                $region107: #{tpu_custom_call.1} parent=100 // loop_footer_branch
                  %370 = sbr.rel target = $region103
                $region108: #{tpu_custom_call.1} parent=100 // loop_exit
                  _
              $region101: #{tpu_custom_call.1} parent=85 // pred_fallthru
                _
              // Predicated region
              $region109: #{tpu_custom_call.1} parent=85 // pred_check
                _
              $region110: #{tpu_custom_call.1} parent=85 // pred_check_branch
                %395 = sbr.rel target = $region112
              $region111: #{tpu_custom_call.1} parent=85 // pred_region
                _
              $region112: #{tpu_custom_call.1} parent=85 // pred_fallthru
                _
            $region86: #{tpu_custom_call.1} parent=81 // pred_fallthru
              _
            // Predicated region
            $region87: #{tpu_custom_call.1} parent=81 // pred_check
              _
            $region88: #{tpu_custom_call.1} parent=81 // pred_check_branch
              %341 = sbr.rel target = $region90
            $region89: #{tpu_custom_call.1} parent=81 // pred_region
              %s343 = ssub.s32 256, 1
              loop: start=0, step=1, limit=1
              $region91: #{tpu_custom_call.1} parent=89 // loop_pre_header
                _
              $region92: #{tpu_custom_call.1} parent=89 // loop_header
                %s345 = sphi 0, %s349
                %p346 = scmp.ge.s32.totalorder %s345, 1
                %s350 = sphi %s335, %s335
                %s351 = sphi %s333, %s333
              $region93: #{tpu_custom_call.1} parent=89 // loop_header_branch
                %348 = sbr.rel (%p346) target = $region97
              $region94: #{tpu_custom_call.1} parent=89 // loop_body
                %v352 = vld [vmem:[%s350] sm:%s343]
                %353 = vst [vmem:[%s351] sm:%s343] %v352
                %v354 = vld [vmem:[%s350 + $0x10] sm:%s343]
                %355 = vst [vmem:[%s351 + $0x8] sm:%s343] %v354
                %v356 = vld [vmem:[%s350 + $0x20] sm:%s343]
                %357 = vst [vmem:[%s351 + $0x10] sm:%s343] %v356
                %v358 = vld [vmem:[%s350 + $0x30] sm:%s343]
                %359 = vst [vmem:[%s351 + $0x18] sm:%s343] %v358
                %v360 = vld [vmem:[%s350 + $0x40] sm:%s343]
                %361 = vst [vmem:[%s351 + $0x20] sm:%s343] %v360
                %v362 = vld [vmem:[%s350 + $0x50] sm:%s343]
                %363 = vst [vmem:[%s351 + $0x28] sm:%s343] %v362
                %v364 = vld [vmem:[%s350 + $0x60] sm:%s343]
                %365 = vst [vmem:[%s351 + $0x30] sm:%s343] %v364
                %v366 = vld [vmem:[%s350 + $0x70] sm:%s343]
                %367 = vst [vmem:[%s351 + $0x38] sm:%s343] %v366
              $region95: #{tpu_custom_call.1} parent=89 // loop_footer
                %s349 = sadd.s32 1, %s345
              $region96: #{tpu_custom_call.1} parent=89 // loop_footer_branch
                %344 = sbr.rel target = $region92
              $region97: #{tpu_custom_call.1} parent=89 // loop_exit
                _
            $region90: #{tpu_custom_call.1} parent=81 // pred_fallthru
              _
          $region82: #{tpu_custom_call.1} parent=77 // pred_fallthru
            _
          %396 = vnop
        $region78: #{tpu_custom_call.1} parent=35 // pred_fallthru
          _
      $region36: #{tpu_custom_call.1} parent=5 // pred_fallthru
        _
      %p397 = scmp.le.s32.totalorder 1, %s18
      %p398 = scmp.lt.s32.totalorder %s18, 3
      %p399 = pnand %p397, %p398
      %p400 = pneg %p399
      // Predicated region
      $region113: #{tpu_custom_call.1} parent=5 // pred_check
        _
      $region114: #{tpu_custom_call.1} parent=5 // pred_check_branch
        %402 = sbr.rel (%p399) target = $region116
      $region115: #{tpu_custom_call.1} parent=5 // pred_region
        %s403 = ssub.s32 %s18, 1
        %s404 = sand.u32 %s31, 1
        %s405 = sand.u32 %s31, 1
        %s406 = smul.addr %s405, 64
        %s407 = scalar_lea.vmem [#allocation3], %s406
        // Predicated region
        $region117: #{tpu_custom_call.1} parent=115 // pred_check
          %p408 = pneg %p44
        $region118: #{tpu_custom_call.1} parent=115 // pred_check_branch
          %410 = sbr.rel (%p408) target = $region120
        $region119: #{tpu_custom_call.1} parent=115 // pred_region
          _
        $region120: #{tpu_custom_call.1} parent=115 // pred_fallthru
          _
        %s411 = sand.u32 %s57, 1
        %s412 = sand.u32 %s57, 1
        %s413 = smul.addr %s412, 64
        %s414 = scalar_lea.vmem [#allocation4], %s413
        // Predicated region
        $region121: #{tpu_custom_call.1} parent=115 // pred_check
          %p415 = pneg %p70
        $region122: #{tpu_custom_call.1} parent=115 // pred_check_branch
          %417 = sbr.rel (%p415) target = $region124
        $region123: #{tpu_custom_call.1} parent=115 // pred_region
          _
        $region124: #{tpu_custom_call.1} parent=115 // pred_fallthru
          _
        // Predicated region
        $region125: #{tpu_custom_call.1} parent=115 // pred_check
          %p418 = pneg %p91
        $region126: #{tpu_custom_call.1} parent=115 // pred_check_branch
          %420 = sbr.rel (%p418) target = $region128
        $region127: #{tpu_custom_call.1} parent=115 // pred_region
          %422 = dma.done [#allocation6], 768
        $region128: #{tpu_custom_call.1} parent=115 // pred_fallthru
          _
        // Predicated region
        $region129: #{tpu_custom_call.1} parent=115 // pred_check
          %p423 = pneg %p112
        $region130: #{tpu_custom_call.1} parent=115 // pred_check_branch
          %425 = sbr.rel (%p423) target = $region132
        $region131: #{tpu_custom_call.1} parent=115 // pred_region
          %427 = dma.done [#allocation9], 768
        $region132: #{tpu_custom_call.1} parent=115 // pred_fallthru
          _
        %s428 = sand.u32 %s31, 1
        %s429 = sand.u32 %s31, 1
        %s430 = smul.addr %s429, 64
        %s431 = scalar_lea.vmem [#allocation3], %s430
        %p432 = pneg %p44
        %p433 = pneg %p41
        %s434 = sand.u32 %s57, 1
        %s435 = sand.u32 %s57, 1
        %s436 = smul.addr %s435, 64
        %s437 = scalar_lea.vmem [#allocation4], %s436
        %p438 = pneg %p70
        %p439 = pneg %p67
        %p440 = pneg %p91
        %p441 = pneg %p88
        %p442 = pneg %p112
        %p443 = pneg %p109
        %p444 = pneg %p133
        %p445 = pneg %p130
        %p446 = pneg %p154
        %p447 = pneg %p151
        %p448 = pneg %p175
        %p449 = pneg %p172
        %p450 = pneg %p201
        %p451 = pneg %p198
        %s452 = sand.u32 %s188, 1
        %s453 = scalar_lea.sflag [#allocation7], %s452
        %s454 = sand.u32 %s188, 1
        %s455 = smul.addr %s454, 64
        %s456 = scalar_lea.vmem [#allocation10], %s455
        %v458 = vld [vmem:[%s407] sm:$0xff]
        %v459 = vld [vmem:[%s407 + $0x8] sm:$0xff]
        %v460 = vld [vmem:[%s407 + $0x10] sm:$0xff]
        %v461 = vld [vmem:[%s407 + $0x18] sm:$0xff]
        %v462 = vld [vmem:[%s407 + $0x20] sm:$0xff]
        %v463 = vld [vmem:[%s407 + $0x28] sm:$0xff]
        %v464 = vld [vmem:[%s407 + $0x30] sm:$0xff]
        %v465 = vld [vmem:[%s407 + $0x38] sm:$0xff]
        %v466 = vld [vmem:[%s414] sm:$0xff]
        %v467 = vld [vmem:[%s414 + $0x8] sm:$0xff]
        %v468 = vld [vmem:[%s414 + $0x10] sm:$0xff]
        %v469 = vld [vmem:[%s414 + $0x18] sm:$0xff]
        %v470 = vld [vmem:[%s414 + $0x20] sm:$0xff]
        %v471 = vld [vmem:[%s414 + $0x28] sm:$0xff]
        %v472 = vld [vmem:[%s414 + $0x30] sm:$0xff]
        %v473 = vld [vmem:[%s414 + $0x38] sm:$0xff]
        %vm474 = vcmask 261120
        %475 = vst.msk [vmem:[%s456] sm:$0xff] %vm474, %v466
        %476 = vst.msk [vmem:[%s456 + $0x8] sm:$0xff] %vm474, %v467
        %477 = vst.msk [vmem:[%s456 + $0x10] sm:$0xff] %vm474, %v468
        %478 = vst.msk [vmem:[%s456 + $0x18] sm:$0xff] %vm474, %v469
        %479 = vst.msk [vmem:[%s456 + $0x20] sm:$0xff] %vm474, %v470
        %480 = vst.msk [vmem:[%s456 + $0x28] sm:$0xff] %vm474, %v471
        %481 = vst.msk [vmem:[%s456 + $0x30] sm:$0xff] %vm474, %v472
        %482 = vst.msk [vmem:[%s456 + $0x38] sm:$0xff] %vm474, %v473
        %v483 = vld [vmem:[#allocation5] sm:$0xf]
        %v484 = vld [vmem:[#allocation5 + $0x4] sm:$0xf]
        %v485 = vld [vmem:[#allocation5 + $0x8] sm:$0xf]
        %v486 = vld [vmem:[#allocation5 + $0xc] sm:$0xf]
        %v487 = vld [vmem:[#allocation8] sm:$0xf]
        %v488 = vld [vmem:[#allocation8 + $0x4] sm:$0xf]
        %v489 = vld [vmem:[#allocation8 + $0x8] sm:$0xf]
        %v490 = vld [vmem:[#allocation8 + $0xc] sm:$0xf]
        %v491 = vld [vmem:[%s4] sm:$0x1]
        %v492 = vld [vmem:[%s5] sm:$0x1]
        %v494 = vperm.slane %v492, 0
        %v496 = vld [vmem:[%s6] sm:$0x1]
        %v498 = vperm.slane %v496, 0
        %v500 = vld [vmem:[%s456] sm:$0xff]
        %v501 = vld [vmem:[%s456 + $0x8] sm:$0xff]
        %v502 = vld [vmem:[%s456 + $0x10] sm:$0xff]
        %v503 = vld [vmem:[%s456 + $0x18] sm:$0xff]
        %v504 = vld [vmem:[%s456 + $0x20] sm:$0xff]
        %v505 = vld [vmem:[%s456 + $0x28] sm:$0xff]
        %v506 = vld [vmem:[%s456 + $0x30] sm:$0xff]
        %v507 = vld [vmem:[%s456 + $0x38] sm:$0xff]
        %509 = vset.pattern.permute.xlu0 0
        %510 = vperm.xlu0 %509, %v458
        %v511 = vpop.permute.xlu0 %510
        %514 = vset.pattern.permute.xlu0 0
        %515 = vperm.xlu0 %514, %v459
        %v516 = vpop.permute.xlu0 %515
        %519 = vset.pattern.permute.xlu0 0
        %520 = vperm.xlu0 %519, %v460
        %v521 = vpop.permute.xlu0 %520
        %524 = vset.pattern.permute.xlu0 0
        %525 = vperm.xlu0 %524, %v461
        %v526 = vpop.permute.xlu0 %525
        %529 = vset.pattern.permute.xlu0 0
        %530 = vperm.xlu0 %529, %v462
        %v531 = vpop.permute.xlu0 %530
        %534 = vset.pattern.permute.xlu0 0
        %535 = vperm.xlu0 %534, %v463
        %v536 = vpop.permute.xlu0 %535
        %539 = vset.pattern.permute.xlu0 0
        %540 = vperm.xlu0 %539, %v464
        %v541 = vpop.permute.xlu0 %540
        %544 = vset.pattern.permute.xlu0 0
        %545 = vperm.xlu0 %544, %v465
        %v546 = vpop.permute.xlu0 %545
        %v548 = vmul.f32 %v500, %v511
        %v549 = vmul.f32 %v501, %v516
        %v550 = vmul.f32 %v502, %v521
        %v551 = vmul.f32 %v503, %v526
        %v552 = vmul.f32 %v504, %v531
        %v553 = vmul.f32 %v505, %v536
        %v554 = vmul.f32 %v506, %v541
        %v555 = vmul.f32 %v507, %v546
        %556 = vst.msk [vmem:[%s456] sm:$0xff] %vm474, %v548
        %557 = vst.msk [vmem:[%s456 + $0x8] sm:$0xff] %vm474, %v549
        %558 = vst.msk [vmem:[%s456 + $0x10] sm:$0xff] %vm474, %v550
        %559 = vst.msk [vmem:[%s456 + $0x18] sm:$0xff] %vm474, %v551
        %560 = vst.msk [vmem:[%s456 + $0x20] sm:$0xff] %vm474, %v552
        %561 = vst.msk [vmem:[%s456 + $0x28] sm:$0xff] %vm474, %v553
        %562 = vst.msk [vmem:[%s456 + $0x30] sm:$0xff] %vm474, %v554
        %563 = vst.msk [vmem:[%s456 + $0x38] sm:$0xff] %vm474, %v555
        %v564 = vld [vmem:[%s456] sm:$0xff]
        %v565 = vld [vmem:[%s456 + $0x8] sm:$0xff]
        %v566 = vld [vmem:[%s456 + $0x10] sm:$0xff]
        %v567 = vld [vmem:[%s456 + $0x18] sm:$0xff]
        %v568 = vld [vmem:[%s456 + $0x20] sm:$0xff]
        %v569 = vld [vmem:[%s456 + $0x28] sm:$0xff]
        %v570 = vld [vmem:[%s456 + $0x30] sm:$0xff]
        %v571 = vld [vmem:[%s456 + $0x38] sm:$0xff]
        %v572 = vpack.c.bf16 %v565, %v564
        %v573 = vpack.c.bf16 %v567, %v566
        %v574 = vpack.c.bf16 %v569, %v568
        %v575 = vpack.c.bf16 %v571, %v570
        %v577 = vperm.slane %v491, 0
        %v583 = vunpack.c.l.b16 %v483
        %v584 = vunpack.c.l.b16 %v484
        %v585 = vunpack.c.l.b16 %v485
        %v586 = vunpack.c.l.b16 %v486
        %v587 = vpack.c.b16 %v584, %v583
        %v588 = vpack.c.b16 %v586, %v585
        %v592 = vsel %vm474, %v572, 0
        %v595 = vsel %vm474, %v573, 0
        %v598 = vsel %vm474, %v574, 0
        %v601 = vsel %vm474, %v575, 0
        %603 = vmatpush.bf16.msra.mxu0 0
        %604 = vmatpush.bf16.msra.mxu0 0
        %605 = vmatpush.bf16.msra.mxu0 0
        %606 = vmatpush.bf16.msra.mxu0 0
        %607 = vmatpush.bf16.msra.mxu0 0
        %608 = vmatpush.bf16.msra.mxu0 0
        %609 = vmatpush.bf16.msra.mxu0 %v588
        %610 = vmatpush.bf16.msra.mxu0 %v587
        %611 = vmatmul.bf16.gmra.mxu0 %v592
        %v612 = vpop.f32.mrf.mxu0
        %v613 = vadd.f32 %v577, %v612
        %v614 = vpop.f32.mrf.mxu0
        %v615 = vadd.f32 %v577, %v614
        %616 = vmatmul.bf16.gmra.mxu0 %v595
        %v617 = vpop.f32.mrf.mxu0
        %v618 = vadd.f32 %v577, %v617
        %v619 = vpop.f32.mrf.mxu0
        %v620 = vadd.f32 %v577, %v619
        %621 = vmatmul.bf16.gmra.mxu0 %v598
        %v622 = vpop.f32.mrf.mxu0
        %v623 = vadd.f32 %v577, %v622
        %v624 = vpop.f32.mrf.mxu0
        %v625 = vadd.f32 %v577, %v624
        %626 = vmatmul.bf16.gmra.mxu0 %v601
        %v627 = vpop.f32.mrf.mxu0
        %v628 = vadd.f32 %v577, %v627
        %v629 = vpop.f32.mrf.mxu0
        %v630 = vadd.f32 %v577, %v629
        %631 = vdwg.mxu0
        %632 = vst [vmem:[#allocation2] sm:$0xff] %v613
        %633 = vst [vmem:[#allocation2 + $0x8] sm:$0xff] %v615
        %634 = vst [vmem:[#allocation2 + $0x10] sm:$0xff] %v618
        %635 = vst [vmem:[#allocation2 + $0x18] sm:$0xff] %v620
        %636 = vst [vmem:[#allocation2 + $0x20] sm:$0xff] %v623
        %637 = vst [vmem:[#allocation2 + $0x28] sm:$0xff] %v625
        %638 = vst [vmem:[#allocation2 + $0x30] sm:$0xff] %v628
        %639 = vst [vmem:[#allocation2 + $0x38] sm:$0xff] %v630
        %v640 = vld [vmem:[#allocation2] sm:$0xff]
        %v645 = vunpack.c.l.b16 %v487
        %v646 = vunpack.c.l.b16 %v488
        %v647 = vunpack.c.l.b16 %v489
        %v648 = vunpack.c.l.b16 %v490
        %v649 = vpack.c.b16 %v646, %v645
        %v650 = vpack.c.b16 %v648, %v647
        %v654 = vsel %vm474, 0, 0
        %656 = vmatpush.bf16.msra.mxu0 0
        %657 = vmatpush.bf16.msra.mxu0 0
        %658 = vmatpush.bf16.msra.mxu0 0
        %659 = vmatpush.bf16.msra.mxu0 0
        %660 = vmatpush.bf16.msra.mxu0 0
        %661 = vmatpush.bf16.msra.mxu0 0
        %662 = vmatpush.bf16.msra.mxu0 %v650
        %663 = vmatpush.bf16.msra.mxu0 %v649
        %664 = vmatmul.bf16.gmra.mxu0 %v654
        %v665 = vpop.f32.mrf.mxu0
        %v666 = vadd.f32 0.0, %v665
        %v667 = vpop.f32.mrf.mxu0
        %668 = vdwg.mxu0
        %v669 = vadd.f32 %v640, %v666
        %v670 = vxor.u32 %v669, 2147483648
        %v671 = vmul.f32 %v670, 1.442695
        %v672 = vpow.pop %v671
        %v673 = vadd.f32 %v672, 1.0
        %v674 = vrcp.pop %v673
        %v675 = vmul.f32 %v673, %v674
        %v676 = vsub.f32 1.0, %v675
        %v677 = vmul.f32 %v674, %v676
        %v678 = vadd.f32 %v674, %v677
        %vm679 = vweird.f32 %v673
        %vm680 = vweird.f32 %v674
        %vm681 = vmor %vm679, %vm680
        %v682 = vsel %vm681, %v674, %v678
        %v683 = vand.u32 2147483647, %v673
        %vm684 = vcmp.eq.f32.partialorder %v683, 8.507059e+37
        %v685 = vand.u32 %v673, 2147483648
        %v686 = vor.u32 1.1754944e-38, %v685
        %v687 = vsel %vm684, %v686, %v682
        %v688 = vmul.f32 1.0, %v687
        %v689 = vtanh.pop %v669
        %v690 = vmul.f32 %v688, 0.0
        %692 = vrot.lane.b32.xlu0 %v689, 64
        %v693 = vpop.permute.xlu0 %692
        %v695 = vmul.f32 %v688, %v693
        %697 = vrot.lane.b32.xlu0 %v695, 32
        %v698 = vpop.permute.xlu0 %697
        %v700 = vadd.f32 %v690, %v698
        %v701 = vtanh.pop %v700
        %703 = vrot.lane.b32.xlu0 %v701, 64
        %v704 = vpop.permute.xlu0 %703
        %v706 = vmul.f32 %v688, %v704
        %v707 = vld [vmem:[%s456] sm:$0xff]
        %709 = vrot.lane.b32.xlu0 %v706, 32
        %v710 = vpop.permute.xlu0 %709
        %v712 = vadd.f32 %v707, %v710
        %v713 = vsel %vm474, %v712, 0.0
        %714 = vadd.xlane.f32.xlu0 %v713
        %v715 = vpop.xlane.xlu0 %714
        %v716 = vrcp.pop 32.0
        %v717 = vmul.f32 32.0, %v716
        %v718 = vsub.f32 1.0, %v717
        %v719 = vmul.f32 %v716, %v718
        %v720 = vadd.f32 %v716, %v719
        %vm721 = vweird.f32 %v716
        %v722 = vsel %vm721, %v716, %v720
        %v723 = vmul.f32 %v715, %v722
        %v724 = vsub.f32 %v712, %v723
        %v725 = vmul.f32 %v724, %v724
        %v726 = vsel %vm474, %v725, 0.0
        %727 = vadd.xlane.f32.xlu0 %v726
        %v728 = vpop.xlane.xlu0 %727
        %v729 = vmul.f32 %v728, %v722
        %v730 = vadd.f32 %v729, 1e-05
        %v731 = vrsqrt.pop %v730
        %v732 = vmul.f32 %v731, %v730
        %v733 = vmul.f32 %v732, %v731
        %v734 = vmul.f32 0.5, %v733
        %v735 = vsub.f32 1.5, %v734
        %v736 = vmul.f32 %v731, %v735
        %vm737 = vweird.f32 %v730
        %vm738 = vweird.f32 %v731
        %vm739 = vmor %vm737, %vm738
        %v740 = vsel %vm739, %v731, %v736
        %v741 = vmul.f32 %v724, %v740
        %v742 = vmul.f32 %v741, %v494
        %v743 = vadd.f32 %v742, %v498
        %744 = vst.msk [vmem:[%s456] sm:$0xff] %vm474, %v743
        %s745 = scalar_lea.vmem [#allocation2], 8
        %v746 = vld [vmem:[%s745] sm:$0xff]
        %v747 = vpack.c.bf16 %v706, %v706
        %749 = vrot.lane.b32.xlu0 %v747, 32
        %v750 = vpop.permute.xlu0 %749
        %v752 = vsel %vm474, %v750, 0
        %754 = vmatpush.bf16.msra.mxu0 0
        %755 = vmatpush.bf16.msra.mxu0 0
        %756 = vmatpush.bf16.msra.mxu0 0
        %757 = vmatpush.bf16.msra.mxu0 0
        %758 = vmatpush.bf16.msra.mxu0 0
        %759 = vmatpush.bf16.msra.mxu0 0
        %760 = vmatpush.bf16.msra.mxu0 %v650
        %761 = vmatpush.bf16.msra.mxu0 %v649
        %762 = vmatmul.bf16.gmra.mxu0 %v752
        %v763 = vpop.f32.mrf.mxu0
        %v764 = vadd.f32 0.0, %v763
        %v765 = vpop.f32.mrf.mxu0
        %766 = vdwg.mxu0
        %v767 = vadd.f32 %v746, %v764
        %v768 = vxor.u32 %v767, 2147483648
        %v769 = vmul.f32 %v768, 1.442695
        %v770 = vpow.pop %v769
        %v771 = vadd.f32 %v770, 1.0
        %v772 = vrcp.pop %v771
        %v773 = vmul.f32 %v771, %v772
        %v774 = vsub.f32 1.0, %v773
        %v775 = vmul.f32 %v772, %v774
        %v776 = vadd.f32 %v772, %v775
        %vm777 = vweird.f32 %v771
        %vm778 = vweird.f32 %v772
        %vm779 = vmor %vm777, %vm778
        %v780 = vsel %vm779, %v772, %v776
        %v781 = vand.u32 2147483647, %v771
        %vm782 = vcmp.eq.f32.partialorder %v781, 8.507059e+37
        %v783 = vand.u32 %v771, 2147483648
        %v784 = vor.u32 1.1754944e-38, %v783
        %v785 = vsel %vm782, %v784, %v780
        %v786 = vmul.f32 1.0, %v785
        %v787 = vtanh.pop %v767
        %v788 = vmul.f32 %v786, %v700
        %790 = vrot.lane.b32.xlu0 %v787, 64
        %v791 = vpop.permute.xlu0 %790
        %v793 = vmul.f32 %v786, %v791
        %795 = vrot.lane.b32.xlu0 %v793, 32
        %v796 = vpop.permute.xlu0 %795
        %v798 = vadd.f32 %v788, %v796
        %v799 = vtanh.pop %v798
        %801 = vrot.lane.b32.xlu0 %v799, 64
        %v802 = vpop.permute.xlu0 %801
        %v804 = vmul.f32 %v786, %v802
        %s805 = scalar_lea.vmem %s456, 8 [#allocation10]
        %v806 = vld [vmem:[%s805] sm:$0xff]
        %808 = vrot.lane.b32.xlu0 %v804, 32
        %v809 = vpop.permute.xlu0 %808
        %v811 = vadd.f32 %v806, %v809
        %v812 = vsel %vm474, %v811, 0.0
        %813 = vadd.xlane.f32.xlu0 %v812
        %v814 = vpop.xlane.xlu0 %813
        %v815 = vmul.f32 %v814, %v722
        %v816 = vsub.f32 %v811, %v815
        %v817 = vmul.f32 %v816, %v816
        %v818 = vsel %vm474, %v817, 0.0
        %819 = vadd.xlane.f32.xlu0 %v818
        %v820 = vpop.xlane.xlu0 %819
        %v821 = vmul.f32 %v820, %v722
        %v822 = vadd.f32 %v821, 1e-05
        %v823 = vrsqrt.pop %v822
        %v824 = vmul.f32 %v823, %v822
        %v825 = vmul.f32 %v824, %v823
        %v826 = vmul.f32 0.5, %v825
        %v827 = vsub.f32 1.5, %v826
        %v828 = vmul.f32 %v823, %v827
        %vm829 = vweird.f32 %v822
        %vm830 = vweird.f32 %v823
        %vm831 = vmor %vm829, %vm830
        %v832 = vsel %vm831, %v823, %v828
        %v833 = vmul.f32 %v816, %v832
        %v834 = vmul.f32 %v833, %v494
        %v835 = vadd.f32 %v834, %v498
        %836 = vst.msk [vmem:[%s805] sm:$0xff] %vm474, %v835
        %s837 = scalar_lea.vmem [#allocation2], 16
        %v838 = vld [vmem:[%s837] sm:$0xff]
        %v839 = vpack.c.bf16 %v804, %v804
        %841 = vrot.lane.b32.xlu0 %v839, 32
        %v842 = vpop.permute.xlu0 %841
        %v844 = vsel %vm474, %v842, 0
        %846 = vmatpush.bf16.msra.mxu0 0
        %847 = vmatpush.bf16.msra.mxu0 0
        %848 = vmatpush.bf16.msra.mxu0 0
        %849 = vmatpush.bf16.msra.mxu0 0
        %850 = vmatpush.bf16.msra.mxu0 0
        %851 = vmatpush.bf16.msra.mxu0 0
        %852 = vmatpush.bf16.msra.mxu0 %v650
        %853 = vmatpush.bf16.msra.mxu0 %v649
        %854 = vmatmul.bf16.gmra.mxu0 %v844
        %v855 = vpop.f32.mrf.mxu0
        %v856 = vadd.f32 0.0, %v855
        %v857 = vpop.f32.mrf.mxu0
        %858 = vdwg.mxu0
        %v859 = vadd.f32 %v838, %v856
        %v860 = vxor.u32 %v859, 2147483648
        %v861 = vmul.f32 %v860, 1.442695
        %v862 = vpow.pop %v861
        %v863 = vadd.f32 %v862, 1.0
        %v864 = vrcp.pop %v863
        %v865 = vmul.f32 %v863, %v864
        %v866 = vsub.f32 1.0, %v865
        %v867 = vmul.f32 %v864, %v866
        %v868 = vadd.f32 %v864, %v867
        %vm869 = vweird.f32 %v863
        %vm870 = vweird.f32 %v864
        %vm871 = vmor %vm869, %vm870
        %v872 = vsel %vm871, %v864, %v868
        %v873 = vand.u32 2147483647, %v863
        %vm874 = vcmp.eq.f32.partialorder %v873, 8.507059e+37
        %v875 = vand.u32 %v863, 2147483648
        %v876 = vor.u32 1.1754944e-38, %v875
        %v877 = vsel %vm874, %v876, %v872
        %v878 = vmul.f32 1.0, %v877
        %v879 = vtanh.pop %v859
        %v880 = vmul.f32 %v878, %v798
        %882 = vrot.lane.b32.xlu0 %v879, 64
        %v883 = vpop.permute.xlu0 %882
        %v885 = vmul.f32 %v878, %v883
        %887 = vrot.lane.b32.xlu0 %v885, 32
        %v888 = vpop.permute.xlu0 %887
        %v890 = vadd.f32 %v880, %v888
        %v891 = vtanh.pop %v890
        %893 = vrot.lane.b32.xlu0 %v891, 64
        %v894 = vpop.permute.xlu0 %893
        %v896 = vmul.f32 %v878, %v894
        %s897 = scalar_lea.vmem %s456, 16 [#allocation10]
        %v898 = vld [vmem:[%s897] sm:$0xff]
        %900 = vrot.lane.b32.xlu0 %v896, 32
        %v901 = vpop.permute.xlu0 %900
        %v903 = vadd.f32 %v898, %v901
        %v904 = vsel %vm474, %v903, 0.0
        %905 = vadd.xlane.f32.xlu0 %v904
        %v906 = vpop.xlane.xlu0 %905
        %v907 = vmul.f32 %v906, %v722
        %v908 = vsub.f32 %v903, %v907
        %v909 = vmul.f32 %v908, %v908
        %v910 = vsel %vm474, %v909, 0.0
        %911 = vadd.xlane.f32.xlu0 %v910
        %v912 = vpop.xlane.xlu0 %911
        %v913 = vmul.f32 %v912, %v722
        %v914 = vadd.f32 %v913, 1e-05
        %v915 = vrsqrt.pop %v914
        %v916 = vmul.f32 %v915, %v914
        %v917 = vmul.f32 %v916, %v915
        %v918 = vmul.f32 0.5, %v917
        %v919 = vsub.f32 1.5, %v918
        %v920 = vmul.f32 %v915, %v919
        %vm921 = vweird.f32 %v914
        %vm922 = vweird.f32 %v915
        %vm923 = vmor %vm921, %vm922
        %v924 = vsel %vm923, %v915, %v920
        %v925 = vmul.f32 %v908, %v924
        %v926 = vmul.f32 %v925, %v494
        %v927 = vadd.f32 %v926, %v498
        %928 = vst.msk [vmem:[%s897] sm:$0xff] %vm474, %v927
        %s929 = scalar_lea.vmem [#allocation2], 24
        %v930 = vld [vmem:[%s929] sm:$0xff]
        %v931 = vpack.c.bf16 %v896, %v896
        %933 = vrot.lane.b32.xlu0 %v931, 32
        %v934 = vpop.permute.xlu0 %933
        %v936 = vsel %vm474, %v934, 0
        %938 = vmatpush.bf16.msra.mxu0 0
        %939 = vmatpush.bf16.msra.mxu0 0
        %940 = vmatpush.bf16.msra.mxu0 0
        %941 = vmatpush.bf16.msra.mxu0 0
        %942 = vmatpush.bf16.msra.mxu0 0
        %943 = vmatpush.bf16.msra.mxu0 0
        %944 = vmatpush.bf16.msra.mxu0 %v650
        %945 = vmatpush.bf16.msra.mxu0 %v649
        %946 = vmatmul.bf16.gmra.mxu0 %v936
        %v947 = vpop.f32.mrf.mxu0
        %v948 = vadd.f32 0.0, %v947
        %v949 = vpop.f32.mrf.mxu0
        %950 = vdwg.mxu0
        %v951 = vadd.f32 %v930, %v948
        %v952 = vxor.u32 %v951, 2147483648
        %v953 = vmul.f32 %v952, 1.442695
        %v954 = vpow.pop %v953
        %v955 = vadd.f32 %v954, 1.0
        %v956 = vrcp.pop %v955
        %v957 = vmul.f32 %v955, %v956
        %v958 = vsub.f32 1.0, %v957
        %v959 = vmul.f32 %v956, %v958
        %v960 = vadd.f32 %v956, %v959
        %vm961 = vweird.f32 %v955
        %vm962 = vweird.f32 %v956
        %vm963 = vmor %vm961, %vm962
        %v964 = vsel %vm963, %v956, %v960
        %v965 = vand.u32 2147483647, %v955
        %vm966 = vcmp.eq.f32.partialorder %v965, 8.507059e+37
        %v967 = vand.u32 %v955, 2147483648
        %v968 = vor.u32 1.1754944e-38, %v967
        %v969 = vsel %vm966, %v968, %v964
        %v970 = vmul.f32 1.0, %v969
        %v971 = vtanh.pop %v951
        %v972 = vmul.f32 %v970, %v890
        %974 = vrot.lane.b32.xlu0 %v971, 64
        %v975 = vpop.permute.xlu0 %974
        %v977 = vmul.f32 %v970, %v975
        %979 = vrot.lane.b32.xlu0 %v977, 32
        %v980 = vpop.permute.xlu0 %979
        %v982 = vadd.f32 %v972, %v980
        %v983 = vtanh.pop %v982
        %985 = vrot.lane.b32.xlu0 %v983, 64
        %v986 = vpop.permute.xlu0 %985
        %v988 = vmul.f32 %v970, %v986
        %s989 = scalar_lea.vmem %s456, 24 [#allocation10]
        %v990 = vld [vmem:[%s989] sm:$0xff]
        %992 = vrot.lane.b32.xlu0 %v988, 32
        %v993 = vpop.permute.xlu0 %992
        %v995 = vadd.f32 %v990, %v993
        %v996 = vsel %vm474, %v995, 0.0
        %997 = vadd.xlane.f32.xlu0 %v996
        %v998 = vpop.xlane.xlu0 %997
        %v999 = vmul.f32 %v998, %v722
        %v1000 = vsub.f32 %v995, %v999
        %v1001 = vmul.f32 %v1000, %v1000
        %v1002 = vsel %vm474, %v1001, 0.0
        %1003 = vadd.xlane.f32.xlu0 %v1002
        %v1004 = vpop.xlane.xlu0 %1003
        %v1005 = vmul.f32 %v1004, %v722
        %v1006 = vadd.f32 %v1005, 1e-05
        %v1007 = vrsqrt.pop %v1006
        %v1008 = vmul.f32 %v1007, %v1006
        %v1009 = vmul.f32 %v1008, %v1007
        %v1010 = vmul.f32 0.5, %v1009
        %v1011 = vsub.f32 1.5, %v1010
        %v1012 = vmul.f32 %v1007, %v1011
        %vm1013 = vweird.f32 %v1006
        %vm1014 = vweird.f32 %v1007
        %vm1015 = vmor %vm1013, %vm1014
        %v1016 = vsel %vm1015, %v1007, %v1012
        %v1017 = vmul.f32 %v1000, %v1016
        %v1018 = vmul.f32 %v1017, %v494
        %v1019 = vadd.f32 %v1018, %v498
        %1020 = vst.msk [vmem:[%s989] sm:$0xff] %vm474, %v1019
        %s1021 = scalar_lea.vmem [#allocation2], 32
        %v1022 = vld [vmem:[%s1021] sm:$0xff]
        %v1023 = vpack.c.bf16 %v988, %v988
        %1025 = vrot.lane.b32.xlu0 %v1023, 32
        %v1026 = vpop.permute.xlu0 %1025
        %v1028 = vsel %vm474, %v1026, 0
        %1030 = vmatpush.bf16.msra.mxu0 0
        %1031 = vmatpush.bf16.msra.mxu0 0
        %1032 = vmatpush.bf16.msra.mxu0 0
        %1033 = vmatpush.bf16.msra.mxu0 0
        %1034 = vmatpush.bf16.msra.mxu0 0
        %1035 = vmatpush.bf16.msra.mxu0 0
        %1036 = vmatpush.bf16.msra.mxu0 %v650
        %1037 = vmatpush.bf16.msra.mxu0 %v649
        %1038 = vmatmul.bf16.gmra.mxu0 %v1028
        %v1039 = vpop.f32.mrf.mxu0
        %v1040 = vadd.f32 0.0, %v1039
        %v1041 = vpop.f32.mrf.mxu0
        %1042 = vdwg.mxu0
        %v1043 = vadd.f32 %v1022, %v1040
        %v1044 = vxor.u32 %v1043, 2147483648
        %v1045 = vmul.f32 %v1044, 1.442695
        %v1046 = vpow.pop %v1045
        %v1047 = vadd.f32 %v1046, 1.0
        %v1048 = vrcp.pop %v1047
        %v1049 = vmul.f32 %v1047, %v1048
        %v1050 = vsub.f32 1.0, %v1049
        %v1051 = vmul.f32 %v1048, %v1050
        %v1052 = vadd.f32 %v1048, %v1051
        %vm1053 = vweird.f32 %v1047
        %vm1054 = vweird.f32 %v1048
        %vm1055 = vmor %vm1053, %vm1054
        %v1056 = vsel %vm1055, %v1048, %v1052
        %v1057 = vand.u32 2147483647, %v1047
        %vm1058 = vcmp.eq.f32.partialorder %v1057, 8.507059e+37
        %v1059 = vand.u32 %v1047, 2147483648
        %v1060 = vor.u32 1.1754944e-38, %v1059
        %v1061 = vsel %vm1058, %v1060, %v1056
        %v1062 = vmul.f32 1.0, %v1061
        %v1063 = vtanh.pop %v1043
        %v1064 = vmul.f32 %v1062, %v982
        %1066 = vrot.lane.b32.xlu0 %v1063, 64
        %v1067 = vpop.permute.xlu0 %1066
        %v1069 = vmul.f32 %v1062, %v1067
        %1071 = vrot.lane.b32.xlu0 %v1069, 32
        %v1072 = vpop.permute.xlu0 %1071
        %v1074 = vadd.f32 %v1064, %v1072
        %v1075 = vtanh.pop %v1074
        %1077 = vrot.lane.b32.xlu0 %v1075, 64
        %v1078 = vpop.permute.xlu0 %1077
        %v1080 = vmul.f32 %v1062, %v1078
        %s1081 = scalar_lea.vmem %s456, 32 [#allocation10]
        %v1082 = vld [vmem:[%s1081] sm:$0xff]
        %1084 = vrot.lane.b32.xlu0 %v1080, 32
        %v1085 = vpop.permute.xlu0 %1084
        %v1087 = vadd.f32 %v1082, %v1085
        %v1088 = vsel %vm474, %v1087, 0.0
        %1089 = vadd.xlane.f32.xlu0 %v1088
        %v1090 = vpop.xlane.xlu0 %1089
        %v1091 = vmul.f32 %v1090, %v722
        %v1092 = vsub.f32 %v1087, %v1091
        %v1093 = vmul.f32 %v1092, %v1092
        %v1094 = vsel %vm474, %v1093, 0.0
        %1095 = vadd.xlane.f32.xlu0 %v1094
        %v1096 = vpop.xlane.xlu0 %1095
        %v1097 = vmul.f32 %v1096, %v722
        %v1098 = vadd.f32 %v1097, 1e-05
        %v1099 = vrsqrt.pop %v1098
        %v1100 = vmul.f32 %v1099, %v1098
        %v1101 = vmul.f32 %v1100, %v1099
        %v1102 = vmul.f32 0.5, %v1101
        %v1103 = vsub.f32 1.5, %v1102
        %v1104 = vmul.f32 %v1099, %v1103
        %vm1105 = vweird.f32 %v1098
        %vm1106 = vweird.f32 %v1099
        %vm1107 = vmor %vm1105, %vm1106
        %v1108 = vsel %vm1107, %v1099, %v1104
        %v1109 = vmul.f32 %v1092, %v1108
        %v1110 = vmul.f32 %v1109, %v494
        %v1111 = vadd.f32 %v1110, %v498
        %1112 = vst.msk [vmem:[%s1081] sm:$0xff] %vm474, %v1111
        %s1113 = scalar_lea.vmem [#allocation2], 40
        %v1114 = vld [vmem:[%s1113] sm:$0xff]
        %v1115 = vpack.c.bf16 %v1080, %v1080
        %1117 = vrot.lane.b32.xlu0 %v1115, 32
        %v1118 = vpop.permute.xlu0 %1117
        %v1120 = vsel %vm474, %v1118, 0
        %1122 = vmatpush.bf16.msra.mxu0 0
        %1123 = vmatpush.bf16.msra.mxu0 0
        %1124 = vmatpush.bf16.msra.mxu0 0
        %1125 = vmatpush.bf16.msra.mxu0 0
        %1126 = vmatpush.bf16.msra.mxu0 0
        %1127 = vmatpush.bf16.msra.mxu0 0
        %1128 = vmatpush.bf16.msra.mxu0 %v650
        %1129 = vmatpush.bf16.msra.mxu0 %v649
        %1130 = vmatmul.bf16.gmra.mxu0 %v1120
        %v1131 = vpop.f32.mrf.mxu0
        %v1132 = vadd.f32 0.0, %v1131
        %v1133 = vpop.f32.mrf.mxu0
        %1134 = vdwg.mxu0
        %v1135 = vadd.f32 %v1114, %v1132
        %v1136 = vxor.u32 %v1135, 2147483648
        %v1137 = vmul.f32 %v1136, 1.442695
        %v1138 = vpow.pop %v1137
        %v1139 = vadd.f32 %v1138, 1.0
        %v1140 = vrcp.pop %v1139
        %v1141 = vmul.f32 %v1139, %v1140
        %v1142 = vsub.f32 1.0, %v1141
        %v1143 = vmul.f32 %v1140, %v1142
        %v1144 = vadd.f32 %v1140, %v1143
        %vm1145 = vweird.f32 %v1139
        %vm1146 = vweird.f32 %v1140
        %vm1147 = vmor %vm1145, %vm1146
        %v1148 = vsel %vm1147, %v1140, %v1144
        %v1149 = vand.u32 2147483647, %v1139
        %vm1150 = vcmp.eq.f32.partialorder %v1149, 8.507059e+37
        %v1151 = vand.u32 %v1139, 2147483648
        %v1152 = vor.u32 1.1754944e-38, %v1151
        %v1153 = vsel %vm1150, %v1152, %v1148
        %v1154 = vmul.f32 1.0, %v1153
        %v1155 = vtanh.pop %v1135
        %v1156 = vmul.f32 %v1154, %v1074
        %1158 = vrot.lane.b32.xlu0 %v1155, 64
        %v1159 = vpop.permute.xlu0 %1158
        %v1161 = vmul.f32 %v1154, %v1159
        %1163 = vrot.lane.b32.xlu0 %v1161, 32
        %v1164 = vpop.permute.xlu0 %1163
        %v1166 = vadd.f32 %v1156, %v1164
        %v1167 = vtanh.pop %v1166
        %1169 = vrot.lane.b32.xlu0 %v1167, 64
        %v1170 = vpop.permute.xlu0 %1169
        %v1172 = vmul.f32 %v1154, %v1170
        %s1173 = scalar_lea.vmem %s456, 40 [#allocation10]
        %v1174 = vld [vmem:[%s1173] sm:$0xff]
        %1176 = vrot.lane.b32.xlu0 %v1172, 32
        %v1177 = vpop.permute.xlu0 %1176
        %v1179 = vadd.f32 %v1174, %v1177
        %v1180 = vsel %vm474, %v1179, 0.0
        %1181 = vadd.xlane.f32.xlu0 %v1180
        %v1182 = vpop.xlane.xlu0 %1181
        %v1183 = vmul.f32 %v1182, %v722
        %v1184 = vsub.f32 %v1179, %v1183
        %v1185 = vmul.f32 %v1184, %v1184
        %v1186 = vsel %vm474, %v1185, 0.0
        %1187 = vadd.xlane.f32.xlu0 %v1186
        %v1188 = vpop.xlane.xlu0 %1187
        %v1189 = vmul.f32 %v1188, %v722
        %v1190 = vadd.f32 %v1189, 1e-05
        %v1191 = vrsqrt.pop %v1190
        %v1192 = vmul.f32 %v1191, %v1190
        %v1193 = vmul.f32 %v1192, %v1191
        %v1194 = vmul.f32 0.5, %v1193
        %v1195 = vsub.f32 1.5, %v1194
        %v1196 = vmul.f32 %v1191, %v1195
        %vm1197 = vweird.f32 %v1190
        %vm1198 = vweird.f32 %v1191
        %vm1199 = vmor %vm1197, %vm1198
        %v1200 = vsel %vm1199, %v1191, %v1196
        %v1201 = vmul.f32 %v1184, %v1200
        %v1202 = vmul.f32 %v1201, %v494
        %v1203 = vadd.f32 %v1202, %v498
        %1204 = vst.msk [vmem:[%s1173] sm:$0xff] %vm474, %v1203
        %s1205 = scalar_lea.vmem [#allocation2], 48
        %v1206 = vld [vmem:[%s1205] sm:$0xff]
        %v1207 = vpack.c.bf16 %v1172, %v1172
        %1209 = vrot.lane.b32.xlu0 %v1207, 32
        %v1210 = vpop.permute.xlu0 %1209
        %v1212 = vsel %vm474, %v1210, 0
        %1214 = vmatpush.bf16.msra.mxu0 0
        %1215 = vmatpush.bf16.msra.mxu0 0
        %1216 = vmatpush.bf16.msra.mxu0 0
        %1217 = vmatpush.bf16.msra.mxu0 0
        %1218 = vmatpush.bf16.msra.mxu0 0
        %1219 = vmatpush.bf16.msra.mxu0 0
        %1220 = vmatpush.bf16.msra.mxu0 %v650
        %1221 = vmatpush.bf16.msra.mxu0 %v649
        %1222 = vmatmul.bf16.gmra.mxu0 %v1212
        %v1223 = vpop.f32.mrf.mxu0
        %v1224 = vadd.f32 0.0, %v1223
        %v1225 = vpop.f32.mrf.mxu0
        %1226 = vdwg.mxu0
        %v1227 = vadd.f32 %v1206, %v1224
        %v1228 = vxor.u32 %v1227, 2147483648
        %v1229 = vmul.f32 %v1228, 1.442695
        %v1230 = vpow.pop %v1229
        %v1231 = vadd.f32 %v1230, 1.0
        %v1232 = vrcp.pop %v1231
        %v1233 = vmul.f32 %v1231, %v1232
        %v1234 = vsub.f32 1.0, %v1233
        %v1235 = vmul.f32 %v1232, %v1234
        %v1236 = vadd.f32 %v1232, %v1235
        %vm1237 = vweird.f32 %v1231
        %vm1238 = vweird.f32 %v1232
        %vm1239 = vmor %vm1237, %vm1238
        %v1240 = vsel %vm1239, %v1232, %v1236
        %v1241 = vand.u32 2147483647, %v1231
        %vm1242 = vcmp.eq.f32.partialorder %v1241, 8.507059e+37
        %v1243 = vand.u32 %v1231, 2147483648
        %v1244 = vor.u32 1.1754944e-38, %v1243
        %v1245 = vsel %vm1242, %v1244, %v1240
        %v1246 = vmul.f32 1.0, %v1245
        %v1247 = vtanh.pop %v1227
        %v1248 = vmul.f32 %v1246, %v1166
        %1250 = vrot.lane.b32.xlu0 %v1247, 64
        %v1251 = vpop.permute.xlu0 %1250
        %v1253 = vmul.f32 %v1246, %v1251
        %1255 = vrot.lane.b32.xlu0 %v1253, 32
        %v1256 = vpop.permute.xlu0 %1255
        %v1258 = vadd.f32 %v1248, %v1256
        %v1259 = vtanh.pop %v1258
        %1261 = vrot.lane.b32.xlu0 %v1259, 64
        %v1262 = vpop.permute.xlu0 %1261
        %v1264 = vmul.f32 %v1246, %v1262
        %s1265 = scalar_lea.vmem %s456, 48 [#allocation10]
        %v1266 = vld [vmem:[%s1265] sm:$0xff]
        %1268 = vrot.lane.b32.xlu0 %v1264, 32
        %v1269 = vpop.permute.xlu0 %1268
        %v1271 = vadd.f32 %v1266, %v1269
        %v1272 = vsel %vm474, %v1271, 0.0
        %1273 = vadd.xlane.f32.xlu0 %v1272
        %v1274 = vpop.xlane.xlu0 %1273
        %v1275 = vmul.f32 %v1274, %v722
        %v1276 = vsub.f32 %v1271, %v1275
        %v1277 = vmul.f32 %v1276, %v1276
        %v1278 = vsel %vm474, %v1277, 0.0
        %1279 = vadd.xlane.f32.xlu0 %v1278
        %v1280 = vpop.xlane.xlu0 %1279
        %v1281 = vmul.f32 %v1280, %v722
        %v1282 = vadd.f32 %v1281, 1e-05
        %v1283 = vrsqrt.pop %v1282
        %v1284 = vmul.f32 %v1283, %v1282
        %v1285 = vmul.f32 %v1284, %v1283
        %v1286 = vmul.f32 0.5, %v1285
        %v1287 = vsub.f32 1.5, %v1286
        %v1288 = vmul.f32 %v1283, %v1287
        %vm1289 = vweird.f32 %v1282
        %vm1290 = vweird.f32 %v1283
        %vm1291 = vmor %vm1289, %vm1290
        %v1292 = vsel %vm1291, %v1283, %v1288
        %v1293 = vmul.f32 %v1276, %v1292
        %v1294 = vmul.f32 %v1293, %v494
        %v1295 = vadd.f32 %v1294, %v498
        %1296 = vst.msk [vmem:[%s1265] sm:$0xff] %vm474, %v1295
        %s1297 = scalar_lea.vmem [#allocation2], 56
        %v1298 = vld [vmem:[%s1297] sm:$0xff]
        %v1299 = vpack.c.bf16 %v1264, %v1264
        %1301 = vrot.lane.b32.xlu0 %v1299, 32
        %v1302 = vpop.permute.xlu0 %1301
        %v1304 = vsel %vm474, %v1302, 0
        %1306 = vmatpush.bf16.msra.mxu0 0
        %1307 = vmatpush.bf16.msra.mxu0 0
        %1308 = vmatpush.bf16.msra.mxu0 0
        %1309 = vmatpush.bf16.msra.mxu0 0
        %1310 = vmatpush.bf16.msra.mxu0 0
        %1311 = vmatpush.bf16.msra.mxu0 0
        %1312 = vmatpush.bf16.msra.mxu0 %v650
        %1313 = vmatpush.bf16.msra.mxu0 %v649
        %1314 = vmatmul.bf16.gmra.mxu0 %v1304
        %v1315 = vpop.f32.mrf.mxu0
        %v1316 = vadd.f32 0.0, %v1315
        %v1317 = vpop.f32.mrf.mxu0
        %1318 = vdwg.mxu0
        %v1319 = vadd.f32 %v1298, %v1316
        %v1320 = vxor.u32 %v1319, 2147483648
        %v1321 = vmul.f32 %v1320, 1.442695
        %v1322 = vpow.pop %v1321
        %v1323 = vadd.f32 %v1322, 1.0
        %v1324 = vrcp.pop %v1323
        %v1325 = vmul.f32 %v1323, %v1324
        %v1326 = vsub.f32 1.0, %v1325
        %v1327 = vmul.f32 %v1324, %v1326
        %v1328 = vadd.f32 %v1324, %v1327
        %vm1329 = vweird.f32 %v1323
        %vm1330 = vweird.f32 %v1324
        %vm1331 = vmor %vm1329, %vm1330
        %v1332 = vsel %vm1331, %v1324, %v1328
        %v1333 = vand.u32 2147483647, %v1323
        %vm1334 = vcmp.eq.f32.partialorder %v1333, 8.507059e+37
        %v1335 = vand.u32 %v1323, 2147483648
        %v1336 = vor.u32 1.1754944e-38, %v1335
        %v1337 = vsel %vm1334, %v1336, %v1332
        %v1338 = vmul.f32 1.0, %v1337
        %v1339 = vtanh.pop %v1319
        %v1340 = vmul.f32 %v1338, %v1258
        %1342 = vrot.lane.b32.xlu0 %v1339, 64
        %v1343 = vpop.permute.xlu0 %1342
        %v1345 = vmul.f32 %v1338, %v1343
        %1347 = vrot.lane.b32.xlu0 %v1345, 32
        %v1348 = vpop.permute.xlu0 %1347
        %v1350 = vadd.f32 %v1340, %v1348
        %v1351 = vtanh.pop %v1350
        %1353 = vrot.lane.b32.xlu0 %v1351, 64
        %v1354 = vpop.permute.xlu0 %1353
        %v1356 = vmul.f32 %v1338, %v1354
        %s1357 = scalar_lea.vmem %s456, 56 [#allocation10]
        %v1358 = vld [vmem:[%s1357] sm:$0xff]
        %1360 = vrot.lane.b32.xlu0 %v1356, 32
        %v1361 = vpop.permute.xlu0 %1360
        %v1363 = vadd.f32 %v1358, %v1361
        %v1364 = vsel %vm474, %v1363, 0.0
        %1365 = vadd.xlane.f32.xlu0 %v1364
        %v1366 = vpop.xlane.xlu0 %1365
        %v1367 = vmul.f32 %v1366, %v722
        %v1368 = vsub.f32 %v1363, %v1367
        %v1369 = vmul.f32 %v1368, %v1368
        %v1370 = vsel %vm474, %v1369, 0.0
        %1371 = vadd.xlane.f32.xlu0 %v1370
        %v1372 = vpop.xlane.xlu0 %1371
        %v1373 = vmul.f32 %v1372, %v722
        %v1374 = vadd.f32 %v1373, 1e-05
        %v1375 = vrsqrt.pop %v1374
        %v1376 = vmul.f32 %v1375, %v1374
        %v1377 = vmul.f32 %v1376, %v1375
        %v1378 = vmul.f32 0.5, %v1377
        %v1379 = vsub.f32 1.5, %v1378
        %v1380 = vmul.f32 %v1375, %v1379
        %vm1381 = vweird.f32 %v1374
        %vm1382 = vweird.f32 %v1375
        %vm1383 = vmor %vm1381, %vm1382
        %v1384 = vsel %vm1383, %v1375, %v1380
        %v1385 = vmul.f32 %v1368, %v1384
        %v1386 = vmul.f32 %v1385, %v494
        %v1387 = vadd.f32 %v1386, %v498
        %1388 = vst.msk [vmem:[%s1357] sm:$0xff] %vm474, %v1387
        %s1389 = scalar_lea.vmem [#allocation5], 16
        %v1390 = vld [vmem:[%s1389] sm:$0xf]
        %v1391 = vld [vmem:[%s1389 + $0x4] sm:$0xf]
        %v1392 = vld [vmem:[%s1389 + $0x8] sm:$0xf]
        %v1393 = vld [vmem:[%s1389 + $0xc] sm:$0xf]
        %s1394 = scalar_lea.vmem [#allocation8], 16
        %v1395 = vld [vmem:[%s1394] sm:$0xf]
        %v1396 = vld [vmem:[%s1394 + $0x4] sm:$0xf]
        %v1397 = vld [vmem:[%s1394 + $0x8] sm:$0xf]
        %v1398 = vld [vmem:[%s1394 + $0xc] sm:$0xf]
        %s1399 = scalar_lea.vmem %s4, 1
        %v1400 = vld [vmem:[%s1399] sm:$0x1]
        %s1401 = scalar_lea.vmem %s5, 1
        %v1402 = vld [vmem:[%s1401] sm:$0x1]
        %v1404 = vperm.slane %v1402, 0
        %s1406 = scalar_lea.vmem %s6, 1
        %v1407 = vld [vmem:[%s1406] sm:$0x1]
        %v1409 = vperm.slane %v1407, 0
        %v1411 = vld [vmem:[%s456] sm:$0xff]
        %v1412 = vld [vmem:[%s456 + $0x8] sm:$0xff]
        %v1413 = vld [vmem:[%s456 + $0x10] sm:$0xff]
        %v1414 = vld [vmem:[%s456 + $0x18] sm:$0xff]
        %v1415 = vld [vmem:[%s456 + $0x20] sm:$0xff]
        %v1416 = vld [vmem:[%s456 + $0x28] sm:$0xff]
        %v1417 = vld [vmem:[%s456 + $0x30] sm:$0xff]
        %v1418 = vld [vmem:[%s456 + $0x38] sm:$0xff]
        %v1419 = vmul.f32 %v1411, %v511
        %v1420 = vmul.f32 %v1412, %v516
        %v1421 = vmul.f32 %v1413, %v521
        %v1422 = vmul.f32 %v1414, %v526
        %v1423 = vmul.f32 %v1415, %v531
        %v1424 = vmul.f32 %v1416, %v536
        %v1425 = vmul.f32 %v1417, %v541
        %v1426 = vmul.f32 %v1418, %v546
        %1427 = vst.msk [vmem:[%s456] sm:$0xff] %vm474, %v1419
        %1428 = vst.msk [vmem:[%s456 + $0x8] sm:$0xff] %vm474, %v1420
        %1429 = vst.msk [vmem:[%s456 + $0x10] sm:$0xff] %vm474, %v1421
        %1430 = vst.msk [vmem:[%s456 + $0x18] sm:$0xff] %vm474, %v1422
        %1431 = vst.msk [vmem:[%s456 + $0x20] sm:$0xff] %vm474, %v1423
        %1432 = vst.msk [vmem:[%s456 + $0x28] sm:$0xff] %vm474, %v1424
        %1433 = vst.msk [vmem:[%s456 + $0x30] sm:$0xff] %vm474, %v1425
        %1434 = vst.msk [vmem:[%s456 + $0x38] sm:$0xff] %vm474, %v1426
        %v1435 = vld [vmem:[%s456] sm:$0xff]
        %v1436 = vld [vmem:[%s456 + $0x8] sm:$0xff]
        %v1437 = vld [vmem:[%s456 + $0x10] sm:$0xff]
        %v1438 = vld [vmem:[%s456 + $0x18] sm:$0xff]
        %v1439 = vld [vmem:[%s456 + $0x20] sm:$0xff]
        %v1440 = vld [vmem:[%s456 + $0x28] sm:$0xff]
        %v1441 = vld [vmem:[%s456 + $0x30] sm:$0xff]
        %v1442 = vld [vmem:[%s456 + $0x38] sm:$0xff]
        %v1443 = vpack.c.bf16 %v1436, %v1435
        %v1444 = vpack.c.bf16 %v1438, %v1437
        %v1445 = vpack.c.bf16 %v1440, %v1439
        %v1446 = vpack.c.bf16 %v1442, %v1441
        %v1448 = vperm.slane %v1400, 0
        %v1454 = vunpack.c.l.b16 %v1390
        %v1455 = vunpack.c.l.b16 %v1391
        %v1456 = vunpack.c.l.b16 %v1392
        %v1457 = vunpack.c.l.b16 %v1393
        %v1458 = vpack.c.b16 %v1455, %v1454
        %v1459 = vpack.c.b16 %v1457, %v1456
        %v1463 = vsel %vm474, %v1443, 0
        %v1466 = vsel %vm474, %v1444, 0
        %v1469 = vsel %vm474, %v1445, 0
        %v1472 = vsel %vm474, %v1446, 0
        %1474 = vmatpush.bf16.msra.mxu0 0
        %1475 = vmatpush.bf16.msra.mxu0 0
        %1476 = vmatpush.bf16.msra.mxu0 0
        %1477 = vmatpush.bf16.msra.mxu0 0
        %1478 = vmatpush.bf16.msra.mxu0 0
        %1479 = vmatpush.bf16.msra.mxu0 0
        %1480 = vmatpush.bf16.msra.mxu0 %v1459
        %1481 = vmatpush.bf16.msra.mxu0 %v1458
        %1482 = vmatmul.bf16.gmra.mxu0 %v1463
        %v1483 = vpop.f32.mrf.mxu0
        %v1484 = vadd.f32 %v1448, %v1483
        %v1485 = vpop.f32.mrf.mxu0
        %v1486 = vadd.f32 %v1448, %v1485
        %1487 = vmatmul.bf16.gmra.mxu0 %v1466
        %v1488 = vpop.f32.mrf.mxu0
        %v1489 = vadd.f32 %v1448, %v1488
        %v1490 = vpop.f32.mrf.mxu0
        %v1491 = vadd.f32 %v1448, %v1490
        %1492 = vmatmul.bf16.gmra.mxu0 %v1469
        %v1493 = vpop.f32.mrf.mxu0
        %v1494 = vadd.f32 %v1448, %v1493
        %v1495 = vpop.f32.mrf.mxu0
        %v1496 = vadd.f32 %v1448, %v1495
        %1497 = vmatmul.bf16.gmra.mxu0 %v1472
        %v1498 = vpop.f32.mrf.mxu0
        %v1499 = vadd.f32 %v1448, %v1498
        %v1500 = vpop.f32.mrf.mxu0
        %v1501 = vadd.f32 %v1448, %v1500
        %1502 = vdwg.mxu0
        %1503 = vst [vmem:[#allocation2] sm:$0xff] %v1484
        %1504 = vst [vmem:[#allocation2 + $0x8] sm:$0xff] %v1486
        %1505 = vst [vmem:[#allocation2 + $0x10] sm:$0xff] %v1489
        %1506 = vst [vmem:[#allocation2 + $0x18] sm:$0xff] %v1491
        %1507 = vst [vmem:[#allocation2 + $0x20] sm:$0xff] %v1494
        %1508 = vst [vmem:[#allocation2 + $0x28] sm:$0xff] %v1496
        %1509 = vst [vmem:[#allocation2 + $0x30] sm:$0xff] %v1499
        %1510 = vst [vmem:[#allocation2 + $0x38] sm:$0xff] %v1501
        %v1511 = vld [vmem:[#allocation2] sm:$0xff]
        %v1516 = vunpack.c.l.b16 %v1395
        %v1517 = vunpack.c.l.b16 %v1396
        %v1518 = vunpack.c.l.b16 %v1397
        %v1519 = vunpack.c.l.b16 %v1398
        %v1520 = vpack.c.b16 %v1517, %v1516
        %v1521 = vpack.c.b16 %v1519, %v1518
        %1524 = vmatpush.bf16.msra.mxu0 0
        %1525 = vmatpush.bf16.msra.mxu0 0
        %1526 = vmatpush.bf16.msra.mxu0 0
        %1527 = vmatpush.bf16.msra.mxu0 0
        %1528 = vmatpush.bf16.msra.mxu0 0
        %1529 = vmatpush.bf16.msra.mxu0 0
        %1530 = vmatpush.bf16.msra.mxu0 %v1521
        %1531 = vmatpush.bf16.msra.mxu0 %v1520
        %1532 = vmatmul.bf16.gmra.mxu0 %v654
        %v1533 = vpop.f32.mrf.mxu0
        %v1534 = vadd.f32 0.0, %v1533
        %v1535 = vpop.f32.mrf.mxu0
        %1536 = vdwg.mxu0
        %v1537 = vadd.f32 %v1511, %v1534
        %v1538 = vxor.u32 %v1537, 2147483648
        %v1539 = vmul.f32 %v1538, 1.442695
        %v1540 = vpow.pop %v1539
        %v1541 = vadd.f32 %v1540, 1.0
        %v1542 = vrcp.pop %v1541
        %v1543 = vmul.f32 %v1541, %v1542
        %v1544 = vsub.f32 1.0, %v1543
        %v1545 = vmul.f32 %v1542, %v1544
        %v1546 = vadd.f32 %v1542, %v1545
        %vm1547 = vweird.f32 %v1541
        %vm1548 = vweird.f32 %v1542
        %vm1549 = vmor %vm1547, %vm1548
        %v1550 = vsel %vm1549, %v1542, %v1546
        %v1551 = vand.u32 2147483647, %v1541
        %vm1552 = vcmp.eq.f32.partialorder %v1551, 8.507059e+37
        %v1553 = vand.u32 %v1541, 2147483648
        %v1554 = vor.u32 1.1754944e-38, %v1553
        %v1555 = vsel %vm1552, %v1554, %v1550
        %v1556 = vmul.f32 1.0, %v1555
        %v1557 = vtanh.pop %v1537
        %v1558 = vmul.f32 %v1556, 0.0
        %1560 = vrot.lane.b32.xlu0 %v1557, 64
        %v1561 = vpop.permute.xlu0 %1560
        %v1563 = vmul.f32 %v1556, %v1561
        %1565 = vrot.lane.b32.xlu0 %v1563, 32
        %v1566 = vpop.permute.xlu0 %1565
        %v1568 = vadd.f32 %v1558, %v1566
        %v1569 = vtanh.pop %v1568
        %1571 = vrot.lane.b32.xlu0 %v1569, 64
        %v1572 = vpop.permute.xlu0 %1571
        %v1574 = vmul.f32 %v1556, %v1572
        %v1575 = vld [vmem:[%s456] sm:$0xff]
        %1577 = vrot.lane.b32.xlu0 %v1574, 32
        %v1578 = vpop.permute.xlu0 %1577
        %v1580 = vadd.f32 %v1575, %v1578
        %v1581 = vsel %vm474, %v1580, 0.0
        %1582 = vadd.xlane.f32.xlu0 %v1581
        %v1583 = vpop.xlane.xlu0 %1582
        %v1584 = vmul.f32 %v1583, %v722
        %v1585 = vsub.f32 %v1580, %v1584
        %v1586 = vmul.f32 %v1585, %v1585
        %v1587 = vsel %vm474, %v1586, 0.0
        %1588 = vadd.xlane.f32.xlu0 %v1587
        %v1589 = vpop.xlane.xlu0 %1588
        %v1590 = vmul.f32 %v1589, %v722
        %v1591 = vadd.f32 %v1590, 1e-05
        %v1592 = vrsqrt.pop %v1591
        %v1593 = vmul.f32 %v1592, %v1591
        %v1594 = vmul.f32 %v1593, %v1592
        %v1595 = vmul.f32 0.5, %v1594
        %v1596 = vsub.f32 1.5, %v1595
        %v1597 = vmul.f32 %v1592, %v1596
        %vm1598 = vweird.f32 %v1591
        %vm1599 = vweird.f32 %v1592
        %vm1600 = vmor %vm1598, %vm1599
        %v1601 = vsel %vm1600, %v1592, %v1597
        %v1602 = vmul.f32 %v1585, %v1601
        %v1603 = vmul.f32 %v1602, %v1404
        %v1604 = vadd.f32 %v1603, %v1409
        %1605 = vst.msk [vmem:[%s456] sm:$0xff] %vm474, %v1604
        %v1606 = vld [vmem:[%s745] sm:$0xff]
        %v1607 = vpack.c.bf16 %v1574, %v1574
        %1609 = vrot.lane.b32.xlu0 %v1607, 32
        %v1610 = vpop.permute.xlu0 %1609
        %v1612 = vsel %vm474, %v1610, 0
        %1614 = vmatpush.bf16.msra.mxu0 0
        %1615 = vmatpush.bf16.msra.mxu0 0
        %1616 = vmatpush.bf16.msra.mxu0 0
        %1617 = vmatpush.bf16.msra.mxu0 0
        %1618 = vmatpush.bf16.msra.mxu0 0
        %1619 = vmatpush.bf16.msra.mxu0 0
        %1620 = vmatpush.bf16.msra.mxu0 %v1521
        %1621 = vmatpush.bf16.msra.mxu0 %v1520
        %1622 = vmatmul.bf16.gmra.mxu0 %v1612
        %v1623 = vpop.f32.mrf.mxu0
        %v1624 = vadd.f32 0.0, %v1623
        %v1625 = vpop.f32.mrf.mxu0
        %1626 = vdwg.mxu0
        %v1627 = vadd.f32 %v1606, %v1624
        %v1628 = vxor.u32 %v1627, 2147483648
        %v1629 = vmul.f32 %v1628, 1.442695
        %v1630 = vpow.pop %v1629
        %v1631 = vadd.f32 %v1630, 1.0
        %v1632 = vrcp.pop %v1631
        %v1633 = vmul.f32 %v1631, %v1632
        %v1634 = vsub.f32 1.0, %v1633
        %v1635 = vmul.f32 %v1632, %v1634
        %v1636 = vadd.f32 %v1632, %v1635
        %vm1637 = vweird.f32 %v1631
        %vm1638 = vweird.f32 %v1632
        %vm1639 = vmor %vm1637, %vm1638
        %v1640 = vsel %vm1639, %v1632, %v1636
        %v1641 = vand.u32 2147483647, %v1631
        %vm1642 = vcmp.eq.f32.partialorder %v1641, 8.507059e+37
        %v1643 = vand.u32 %v1631, 2147483648
        %v1644 = vor.u32 1.1754944e-38, %v1643
        %v1645 = vsel %vm1642, %v1644, %v1640
        %v1646 = vmul.f32 1.0, %v1645
        %v1647 = vtanh.pop %v1627
        %v1648 = vmul.f32 %v1646, %v1568
        %1650 = vrot.lane.b32.xlu0 %v1647, 64
        %v1651 = vpop.permute.xlu0 %1650
        %v1653 = vmul.f32 %v1646, %v1651
        %1655 = vrot.lane.b32.xlu0 %v1653, 32
        %v1656 = vpop.permute.xlu0 %1655
        %v1658 = vadd.f32 %v1648, %v1656
        %v1659 = vtanh.pop %v1658
        %1661 = vrot.lane.b32.xlu0 %v1659, 64
        %v1662 = vpop.permute.xlu0 %1661
        %v1664 = vmul.f32 %v1646, %v1662
        %v1665 = vld [vmem:[%s805] sm:$0xff]
        %1667 = vrot.lane.b32.xlu0 %v1664, 32
        %v1668 = vpop.permute.xlu0 %1667
        %v1670 = vadd.f32 %v1665, %v1668
        %v1671 = vsel %vm474, %v1670, 0.0
        %1672 = vadd.xlane.f32.xlu0 %v1671
        %v1673 = vpop.xlane.xlu0 %1672
        %v1674 = vmul.f32 %v1673, %v722
        %v1675 = vsub.f32 %v1670, %v1674
        %v1676 = vmul.f32 %v1675, %v1675
        %v1677 = vsel %vm474, %v1676, 0.0
        %1678 = vadd.xlane.f32.xlu0 %v1677
        %v1679 = vpop.xlane.xlu0 %1678
        %v1680 = vmul.f32 %v1679, %v722
        %v1681 = vadd.f32 %v1680, 1e-05
        %v1682 = vrsqrt.pop %v1681
        %v1683 = vmul.f32 %v1682, %v1681
        %v1684 = vmul.f32 %v1683, %v1682
        %v1685 = vmul.f32 0.5, %v1684
        %v1686 = vsub.f32 1.5, %v1685
        %v1687 = vmul.f32 %v1682, %v1686
        %vm1688 = vweird.f32 %v1681
        %vm1689 = vweird.f32 %v1682
        %vm1690 = vmor %vm1688, %vm1689
        %v1691 = vsel %vm1690, %v1682, %v1687
        %v1692 = vmul.f32 %v1675, %v1691
        %v1693 = vmul.f32 %v1692, %v1404
        %v1694 = vadd.f32 %v1693, %v1409
        %1695 = vst.msk [vmem:[%s805] sm:$0xff] %vm474, %v1694
        %v1696 = vld [vmem:[%s837] sm:$0xff]
        %v1697 = vpack.c.bf16 %v1664, %v1664
        %1699 = vrot.lane.b32.xlu0 %v1697, 32
        %v1700 = vpop.permute.xlu0 %1699
        %v1702 = vsel %vm474, %v1700, 0
        %1704 = vmatpush.bf16.msra.mxu0 0
        %1705 = vmatpush.bf16.msra.mxu0 0
        %1706 = vmatpush.bf16.msra.mxu0 0
        %1707 = vmatpush.bf16.msra.mxu0 0
        %1708 = vmatpush.bf16.msra.mxu0 0
        %1709 = vmatpush.bf16.msra.mxu0 0
        %1710 = vmatpush.bf16.msra.mxu0 %v1521
        %1711 = vmatpush.bf16.msra.mxu0 %v1520
        %1712 = vmatmul.bf16.gmra.mxu0 %v1702
        %v1713 = vpop.f32.mrf.mxu0
        %v1714 = vadd.f32 0.0, %v1713
        %v1715 = vpop.f32.mrf.mxu0
        %1716 = vdwg.mxu0
        %v1717 = vadd.f32 %v1696, %v1714
        %v1718 = vxor.u32 %v1717, 2147483648
        %v1719 = vmul.f32 %v1718, 1.442695
        %v1720 = vpow.pop %v1719
        %v1721 = vadd.f32 %v1720, 1.0
        %v1722 = vrcp.pop %v1721
        %v1723 = vmul.f32 %v1721, %v1722
        %v1724 = vsub.f32 1.0, %v1723
        %v1725 = vmul.f32 %v1722, %v1724
        %v1726 = vadd.f32 %v1722, %v1725
        %vm1727 = vweird.f32 %v1721
        %vm1728 = vweird.f32 %v1722
        %vm1729 = vmor %vm1727, %vm1728
        %v1730 = vsel %vm1729, %v1722, %v1726
        %v1731 = vand.u32 2147483647, %v1721
        %vm1732 = vcmp.eq.f32.partialorder %v1731, 8.507059e+37
        %v1733 = vand.u32 %v1721, 2147483648
        %v1734 = vor.u32 1.1754944e-38, %v1733
        %v1735 = vsel %vm1732, %v1734, %v1730
        %v1736 = vmul.f32 1.0, %v1735
        %v1737 = vtanh.pop %v1717
        %v1738 = vmul.f32 %v1736, %v1658
        %1740 = vrot.lane.b32.xlu0 %v1737, 64
        %v1741 = vpop.permute.xlu0 %1740
        %v1743 = vmul.f32 %v1736, %v1741
        %1745 = vrot.lane.b32.xlu0 %v1743, 32
        %v1746 = vpop.permute.xlu0 %1745
        %v1748 = vadd.f32 %v1738, %v1746
        %v1749 = vtanh.pop %v1748
        %1751 = vrot.lane.b32.xlu0 %v1749, 64
        %v1752 = vpop.permute.xlu0 %1751
        %v1754 = vmul.f32 %v1736, %v1752
        %v1755 = vld [vmem:[%s897] sm:$0xff]
        %1757 = vrot.lane.b32.xlu0 %v1754, 32
        %v1758 = vpop.permute.xlu0 %1757
        %v1760 = vadd.f32 %v1755, %v1758
        %v1761 = vsel %vm474, %v1760, 0.0
        %1762 = vadd.xlane.f32.xlu0 %v1761
        %v1763 = vpop.xlane.xlu0 %1762
        %v1764 = vmul.f32 %v1763, %v722
        %v1765 = vsub.f32 %v1760, %v1764
        %v1766 = vmul.f32 %v1765, %v1765
        %v1767 = vsel %vm474, %v1766, 0.0
        %1768 = vadd.xlane.f32.xlu0 %v1767
        %v1769 = vpop.xlane.xlu0 %1768
        %v1770 = vmul.f32 %v1769, %v722
        %v1771 = vadd.f32 %v1770, 1e-05
        %v1772 = vrsqrt.pop %v1771
        %v1773 = vmul.f32 %v1772, %v1771
        %v1774 = vmul.f32 %v1773, %v1772
        %v1775 = vmul.f32 0.5, %v1774
        %v1776 = vsub.f32 1.5, %v1775
        %v1777 = vmul.f32 %v1772, %v1776
        %vm1778 = vweird.f32 %v1771
        %vm1779 = vweird.f32 %v1772
        %vm1780 = vmor %vm1778, %vm1779
        %v1781 = vsel %vm1780, %v1772, %v1777
        %v1782 = vmul.f32 %v1765, %v1781
        %v1783 = vmul.f32 %v1782, %v1404
        %v1784 = vadd.f32 %v1783, %v1409
        %1785 = vst.msk [vmem:[%s897] sm:$0xff] %vm474, %v1784
        %v1786 = vld [vmem:[%s929] sm:$0xff]
        %v1787 = vpack.c.bf16 %v1754, %v1754
        %1789 = vrot.lane.b32.xlu0 %v1787, 32
        %v1790 = vpop.permute.xlu0 %1789
        %v1792 = vsel %vm474, %v1790, 0
        %1794 = vmatpush.bf16.msra.mxu0 0
        %1795 = vmatpush.bf16.msra.mxu0 0
        %1796 = vmatpush.bf16.msra.mxu0 0
        %1797 = vmatpush.bf16.msra.mxu0 0
        %1798 = vmatpush.bf16.msra.mxu0 0
        %1799 = vmatpush.bf16.msra.mxu0 0
        %1800 = vmatpush.bf16.msra.mxu0 %v1521
        %1801 = vmatpush.bf16.msra.mxu0 %v1520
        %1802 = vmatmul.bf16.gmra.mxu0 %v1792
        %v1803 = vpop.f32.mrf.mxu0
        %v1804 = vadd.f32 0.0, %v1803
        %v1805 = vpop.f32.mrf.mxu0
        %1806 = vdwg.mxu0
        %v1807 = vadd.f32 %v1786, %v1804
        %v1808 = vxor.u32 %v1807, 2147483648
        %v1809 = vmul.f32 %v1808, 1.442695
        %v1810 = vpow.pop %v1809
        %v1811 = vadd.f32 %v1810, 1.0
        %v1812 = vrcp.pop %v1811
        %v1813 = vmul.f32 %v1811, %v1812
        %v1814 = vsub.f32 1.0, %v1813
        %v1815 = vmul.f32 %v1812, %v1814
        %v1816 = vadd.f32 %v1812, %v1815
        %vm1817 = vweird.f32 %v1811
        %vm1818 = vweird.f32 %v1812
        %vm1819 = vmor %vm1817, %vm1818
        %v1820 = vsel %vm1819, %v1812, %v1816
        %v1821 = vand.u32 2147483647, %v1811
        %vm1822 = vcmp.eq.f32.partialorder %v1821, 8.507059e+37
        %v1823 = vand.u32 %v1811, 2147483648
        %v1824 = vor.u32 1.1754944e-38, %v1823
        %v1825 = vsel %vm1822, %v1824, %v1820
        %v1826 = vmul.f32 1.0, %v1825
        %v1827 = vtanh.pop %v1807
        %v1828 = vmul.f32 %v1826, %v1748
        %1830 = vrot.lane.b32.xlu0 %v1827, 64
        %v1831 = vpop.permute.xlu0 %1830
        %v1833 = vmul.f32 %v1826, %v1831
        %1835 = vrot.lane.b32.xlu0 %v1833, 32
        %v1836 = vpop.permute.xlu0 %1835
        %v1838 = vadd.f32 %v1828, %v1836
        %v1839 = vtanh.pop %v1838
        %1841 = vrot.lane.b32.xlu0 %v1839, 64
        %v1842 = vpop.permute.xlu0 %1841
        %v1844 = vmul.f32 %v1826, %v1842
        %v1845 = vld [vmem:[%s989] sm:$0xff]
        %1847 = vrot.lane.b32.xlu0 %v1844, 32
        %v1848 = vpop.permute.xlu0 %1847
        %v1850 = vadd.f32 %v1845, %v1848
        %v1851 = vsel %vm474, %v1850, 0.0
        %1852 = vadd.xlane.f32.xlu0 %v1851
        %v1853 = vpop.xlane.xlu0 %1852
        %v1854 = vmul.f32 %v1853, %v722
        %v1855 = vsub.f32 %v1850, %v1854
        %v1856 = vmul.f32 %v1855, %v1855
        %v1857 = vsel %vm474, %v1856, 0.0
        %1858 = vadd.xlane.f32.xlu0 %v1857
        %v1859 = vpop.xlane.xlu0 %1858
        %v1860 = vmul.f32 %v1859, %v722
        %v1861 = vadd.f32 %v1860, 1e-05
        %v1862 = vrsqrt.pop %v1861
        %v1863 = vmul.f32 %v1862, %v1861
        %v1864 = vmul.f32 %v1863, %v1862
        %v1865 = vmul.f32 0.5, %v1864
        %v1866 = vsub.f32 1.5, %v1865
        %v1867 = vmul.f32 %v1862, %v1866
        %vm1868 = vweird.f32 %v1861
        %vm1869 = vweird.f32 %v1862
        %vm1870 = vmor %vm1868, %vm1869
        %v1871 = vsel %vm1870, %v1862, %v1867
        %v1872 = vmul.f32 %v1855, %v1871
        %v1873 = vmul.f32 %v1872, %v1404
        %v1874 = vadd.f32 %v1873, %v1409
        %1875 = vst.msk [vmem:[%s989] sm:$0xff] %vm474, %v1874
        %v1876 = vld [vmem:[%s1021] sm:$0xff]
        %v1877 = vpack.c.bf16 %v1844, %v1844
        %1879 = vrot.lane.b32.xlu0 %v1877, 32
        %v1880 = vpop.permute.xlu0 %1879
        %v1882 = vsel %vm474, %v1880, 0
        %1884 = vmatpush.bf16.msra.mxu0 0
        %1885 = vmatpush.bf16.msra.mxu0 0
        %1886 = vmatpush.bf16.msra.mxu0 0
        %1887 = vmatpush.bf16.msra.mxu0 0
        %1888 = vmatpush.bf16.msra.mxu0 0
        %1889 = vmatpush.bf16.msra.mxu0 0
        %1890 = vmatpush.bf16.msra.mxu0 %v1521
        %1891 = vmatpush.bf16.msra.mxu0 %v1520
        %1892 = vmatmul.bf16.gmra.mxu0 %v1882
        %v1893 = vpop.f32.mrf.mxu0
        %v1894 = vadd.f32 0.0, %v1893
        %v1895 = vpop.f32.mrf.mxu0
        %1896 = vdwg.mxu0
        %v1897 = vadd.f32 %v1876, %v1894
        %v1898 = vxor.u32 %v1897, 2147483648
        %v1899 = vmul.f32 %v1898, 1.442695
        %v1900 = vpow.pop %v1899
        %v1901 = vadd.f32 %v1900, 1.0
        %v1902 = vrcp.pop %v1901
        %v1903 = vmul.f32 %v1901, %v1902
        %v1904 = vsub.f32 1.0, %v1903
        %v1905 = vmul.f32 %v1902, %v1904
        %v1906 = vadd.f32 %v1902, %v1905
        %vm1907 = vweird.f32 %v1901
        %vm1908 = vweird.f32 %v1902
        %vm1909 = vmor %vm1907, %vm1908
        %v1910 = vsel %vm1909, %v1902, %v1906
        %v1911 = vand.u32 2147483647, %v1901
        %vm1912 = vcmp.eq.f32.partialorder %v1911, 8.507059e+37
        %v1913 = vand.u32 %v1901, 2147483648
        %v1914 = vor.u32 1.1754944e-38, %v1913
        %v1915 = vsel %vm1912, %v1914, %v1910
        %v1916 = vmul.f32 1.0, %v1915
        %v1917 = vtanh.pop %v1897
        %v1918 = vmul.f32 %v1916, %v1838
        %1920 = vrot.lane.b32.xlu0 %v1917, 64
        %v1921 = vpop.permute.xlu0 %1920
        %v1923 = vmul.f32 %v1916, %v1921
        %1925 = vrot.lane.b32.xlu0 %v1923, 32
        %v1926 = vpop.permute.xlu0 %1925
        %v1928 = vadd.f32 %v1918, %v1926
        %v1929 = vtanh.pop %v1928
        %1931 = vrot.lane.b32.xlu0 %v1929, 64
        %v1932 = vpop.permute.xlu0 %1931
        %v1934 = vmul.f32 %v1916, %v1932
        %v1935 = vld [vmem:[%s1081] sm:$0xff]
        %1937 = vrot.lane.b32.xlu0 %v1934, 32
        %v1938 = vpop.permute.xlu0 %1937
        %v1940 = vadd.f32 %v1935, %v1938
        %v1941 = vsel %vm474, %v1940, 0.0
        %1942 = vadd.xlane.f32.xlu0 %v1941
        %v1943 = vpop.xlane.xlu0 %1942
        %v1944 = vmul.f32 %v1943, %v722
        %v1945 = vsub.f32 %v1940, %v1944
        %v1946 = vmul.f32 %v1945, %v1945
        %v1947 = vsel %vm474, %v1946, 0.0
        %1948 = vadd.xlane.f32.xlu0 %v1947
        %v1949 = vpop.xlane.xlu0 %1948
        %v1950 = vmul.f32 %v1949, %v722
        %v1951 = vadd.f32 %v1950, 1e-05
        %v1952 = vrsqrt.pop %v1951
        %v1953 = vmul.f32 %v1952, %v1951
        %v1954 = vmul.f32 %v1953, %v1952
        %v1955 = vmul.f32 0.5, %v1954
        %v1956 = vsub.f32 1.5, %v1955
        %v1957 = vmul.f32 %v1952, %v1956
        %vm1958 = vweird.f32 %v1951
        %vm1959 = vweird.f32 %v1952
        %vm1960 = vmor %vm1958, %vm1959
        %v1961 = vsel %vm1960, %v1952, %v1957
        %v1962 = vmul.f32 %v1945, %v1961
        %v1963 = vmul.f32 %v1962, %v1404
        %v1964 = vadd.f32 %v1963, %v1409
        %1965 = vst.msk [vmem:[%s1081] sm:$0xff] %vm474, %v1964
        %v1966 = vld [vmem:[%s1113] sm:$0xff]
        %v1967 = vpack.c.bf16 %v1934, %v1934
        %1969 = vrot.lane.b32.xlu0 %v1967, 32
        %v1970 = vpop.permute.xlu0 %1969
        %v1972 = vsel %vm474, %v1970, 0
        %1974 = vmatpush.bf16.msra.mxu0 0
        %1975 = vmatpush.bf16.msra.mxu0 0
        %1976 = vmatpush.bf16.msra.mxu0 0
        %1977 = vmatpush.bf16.msra.mxu0 0
        %1978 = vmatpush.bf16.msra.mxu0 0
        %1979 = vmatpush.bf16.msra.mxu0 0
        %1980 = vmatpush.bf16.msra.mxu0 %v1521
        %1981 = vmatpush.bf16.msra.mxu0 %v1520
        %1982 = vmatmul.bf16.gmra.mxu0 %v1972
        %v1983 = vpop.f32.mrf.mxu0
        %v1984 = vadd.f32 0.0, %v1983
        %v1985 = vpop.f32.mrf.mxu0
        %1986 = vdwg.mxu0
        %v1987 = vadd.f32 %v1966, %v1984
        %v1988 = vxor.u32 %v1987, 2147483648
        %v1989 = vmul.f32 %v1988, 1.442695
        %v1990 = vpow.pop %v1989
        %v1991 = vadd.f32 %v1990, 1.0
        %v1992 = vrcp.pop %v1991
        %v1993 = vmul.f32 %v1991, %v1992
        %v1994 = vsub.f32 1.0, %v1993
        %v1995 = vmul.f32 %v1992, %v1994
        %v1996 = vadd.f32 %v1992, %v1995
        %vm1997 = vweird.f32 %v1991
        %vm1998 = vweird.f32 %v1992
        %vm1999 = vmor %vm1997, %vm1998
        %v2000 = vsel %vm1999, %v1992, %v1996
        %v2001 = vand.u32 2147483647, %v1991
        %vm2002 = vcmp.eq.f32.partialorder %v2001, 8.507059e+37
        %v2003 = vand.u32 %v1991, 2147483648
        %v2004 = vor.u32 1.1754944e-38, %v2003
        %v2005 = vsel %vm2002, %v2004, %v2000
        %v2006 = vmul.f32 1.0, %v2005
        %v2007 = vtanh.pop %v1987
        %v2008 = vmul.f32 %v2006, %v1928
        %2010 = vrot.lane.b32.xlu0 %v2007, 64
        %v2011 = vpop.permute.xlu0 %2010
        %v2013 = vmul.f32 %v2006, %v2011
        %2015 = vrot.lane.b32.xlu0 %v2013, 32
        %v2016 = vpop.permute.xlu0 %2015
        %v2018 = vadd.f32 %v2008, %v2016
        %v2019 = vtanh.pop %v2018
        %2021 = vrot.lane.b32.xlu0 %v2019, 64
        %v2022 = vpop.permute.xlu0 %2021
        %v2024 = vmul.f32 %v2006, %v2022
        %v2025 = vld [vmem:[%s1173] sm:$0xff]
        %2027 = vrot.lane.b32.xlu0 %v2024, 32
        %v2028 = vpop.permute.xlu0 %2027
        %v2030 = vadd.f32 %v2025, %v2028
        %v2031 = vsel %vm474, %v2030, 0.0
        %2032 = vadd.xlane.f32.xlu0 %v2031
        %v2033 = vpop.xlane.xlu0 %2032
        %v2034 = vmul.f32 %v2033, %v722
        %v2035 = vsub.f32 %v2030, %v2034
        %v2036 = vmul.f32 %v2035, %v2035
        %v2037 = vsel %vm474, %v2036, 0.0
        %2038 = vadd.xlane.f32.xlu0 %v2037
        %v2039 = vpop.xlane.xlu0 %2038
        %v2040 = vmul.f32 %v2039, %v722
        %v2041 = vadd.f32 %v2040, 1e-05
        %v2042 = vrsqrt.pop %v2041
        %v2043 = vmul.f32 %v2042, %v2041
        %v2044 = vmul.f32 %v2043, %v2042
        %v2045 = vmul.f32 0.5, %v2044
        %v2046 = vsub.f32 1.5, %v2045
        %v2047 = vmul.f32 %v2042, %v2046
        %vm2048 = vweird.f32 %v2041
        %vm2049 = vweird.f32 %v2042
        %vm2050 = vmor %vm2048, %vm2049
        %v2051 = vsel %vm2050, %v2042, %v2047
        %v2052 = vmul.f32 %v2035, %v2051
        %v2053 = vmul.f32 %v2052, %v1404
        %v2054 = vadd.f32 %v2053, %v1409
        %2055 = vst.msk [vmem:[%s1173] sm:$0xff] %vm474, %v2054
        %v2056 = vld [vmem:[%s1205] sm:$0xff]
        %v2057 = vpack.c.bf16 %v2024, %v2024
        %2059 = vrot.lane.b32.xlu0 %v2057, 32
        %v2060 = vpop.permute.xlu0 %2059
        %v2062 = vsel %vm474, %v2060, 0
        %2064 = vmatpush.bf16.msra.mxu0 0
        %2065 = vmatpush.bf16.msra.mxu0 0
        %2066 = vmatpush.bf16.msra.mxu0 0
        %2067 = vmatpush.bf16.msra.mxu0 0
        %2068 = vmatpush.bf16.msra.mxu0 0
        %2069 = vmatpush.bf16.msra.mxu0 0
        %2070 = vmatpush.bf16.msra.mxu0 %v1521
        %2071 = vmatpush.bf16.msra.mxu0 %v1520
        %2072 = vmatmul.bf16.gmra.mxu0 %v2062
        %v2073 = vpop.f32.mrf.mxu0
        %v2074 = vadd.f32 0.0, %v2073
        %v2075 = vpop.f32.mrf.mxu0
        %2076 = vdwg.mxu0
        %v2077 = vadd.f32 %v2056, %v2074
        %v2078 = vxor.u32 %v2077, 2147483648
        %v2079 = vmul.f32 %v2078, 1.442695
        %v2080 = vpow.pop %v2079
        %v2081 = vadd.f32 %v2080, 1.0
        %v2082 = vrcp.pop %v2081
        %v2083 = vmul.f32 %v2081, %v2082
        %v2084 = vsub.f32 1.0, %v2083
        %v2085 = vmul.f32 %v2082, %v2084
        %v2086 = vadd.f32 %v2082, %v2085
        %vm2087 = vweird.f32 %v2081
        %vm2088 = vweird.f32 %v2082
        %vm2089 = vmor %vm2087, %vm2088
        %v2090 = vsel %vm2089, %v2082, %v2086
        %v2091 = vand.u32 2147483647, %v2081
        %vm2092 = vcmp.eq.f32.partialorder %v2091, 8.507059e+37
        %v2093 = vand.u32 %v2081, 2147483648
        %v2094 = vor.u32 1.1754944e-38, %v2093
        %v2095 = vsel %vm2092, %v2094, %v2090
        %v2096 = vmul.f32 1.0, %v2095
        %v2097 = vtanh.pop %v2077
        %v2098 = vmul.f32 %v2096, %v2018
        %2100 = vrot.lane.b32.xlu0 %v2097, 64
        %v2101 = vpop.permute.xlu0 %2100
        %v2103 = vmul.f32 %v2096, %v2101
        %2105 = vrot.lane.b32.xlu0 %v2103, 32
        %v2106 = vpop.permute.xlu0 %2105
        %v2108 = vadd.f32 %v2098, %v2106
        %v2109 = vtanh.pop %v2108
        %2111 = vrot.lane.b32.xlu0 %v2109, 64
        %v2112 = vpop.permute.xlu0 %2111
        %v2114 = vmul.f32 %v2096, %v2112
        %v2115 = vld [vmem:[%s1265] sm:$0xff]
        %2117 = vrot.lane.b32.xlu0 %v2114, 32
        %v2118 = vpop.permute.xlu0 %2117
        %v2120 = vadd.f32 %v2115, %v2118
        %v2121 = vsel %vm474, %v2120, 0.0
        %2122 = vadd.xlane.f32.xlu0 %v2121
        %v2123 = vpop.xlane.xlu0 %2122
        %v2124 = vmul.f32 %v2123, %v722
        %v2125 = vsub.f32 %v2120, %v2124
        %v2126 = vmul.f32 %v2125, %v2125
        %v2127 = vsel %vm474, %v2126, 0.0
        %2128 = vadd.xlane.f32.xlu0 %v2127
        %v2129 = vpop.xlane.xlu0 %2128
        %v2130 = vmul.f32 %v2129, %v722
        %v2131 = vadd.f32 %v2130, 1e-05
        %v2132 = vrsqrt.pop %v2131
        %v2133 = vmul.f32 %v2132, %v2131
        %v2134 = vmul.f32 %v2133, %v2132
        %v2135 = vmul.f32 0.5, %v2134
        %v2136 = vsub.f32 1.5, %v2135
        %v2137 = vmul.f32 %v2132, %v2136
        %vm2138 = vweird.f32 %v2131
        %vm2139 = vweird.f32 %v2132
        %vm2140 = vmor %vm2138, %vm2139
        %v2141 = vsel %vm2140, %v2132, %v2137
        %v2142 = vmul.f32 %v2125, %v2141
        %v2143 = vmul.f32 %v2142, %v1404
        %v2144 = vadd.f32 %v2143, %v1409
        %2145 = vst.msk [vmem:[%s1265] sm:$0xff] %vm474, %v2144
        %v2146 = vld [vmem:[%s1297] sm:$0xff]
        %v2147 = vpack.c.bf16 %v2114, %v2114
        %2149 = vrot.lane.b32.xlu0 %v2147, 32
        %v2150 = vpop.permute.xlu0 %2149
        %v2152 = vsel %vm474, %v2150, 0
        %2154 = vmatpush.bf16.msra.mxu0 0
        %2155 = vmatpush.bf16.msra.mxu0 0
        %2156 = vmatpush.bf16.msra.mxu0 0
        %2157 = vmatpush.bf16.msra.mxu0 0
        %2158 = vmatpush.bf16.msra.mxu0 0
        %2159 = vmatpush.bf16.msra.mxu0 0
        %2160 = vmatpush.bf16.msra.mxu0 %v1521
        %2161 = vmatpush.bf16.msra.mxu0 %v1520
        %2162 = vmatmul.bf16.gmra.mxu0 %v2152
        %v2163 = vpop.f32.mrf.mxu0
        %v2164 = vadd.f32 0.0, %v2163
        %v2165 = vpop.f32.mrf.mxu0
        %2166 = vdwg.mxu0
        %v2167 = vadd.f32 %v2146, %v2164
        %v2168 = vxor.u32 %v2167, 2147483648
        %v2169 = vmul.f32 %v2168, 1.442695
        %v2170 = vpow.pop %v2169
        %v2171 = vadd.f32 %v2170, 1.0
        %v2172 = vrcp.pop %v2171
        %v2173 = vmul.f32 %v2171, %v2172
        %v2174 = vsub.f32 1.0, %v2173
        %v2175 = vmul.f32 %v2172, %v2174
        %v2176 = vadd.f32 %v2172, %v2175
        %vm2177 = vweird.f32 %v2171
        %vm2178 = vweird.f32 %v2172
        %vm2179 = vmor %vm2177, %vm2178
        %v2180 = vsel %vm2179, %v2172, %v2176
        %v2181 = vand.u32 2147483647, %v2171
        %vm2182 = vcmp.eq.f32.partialorder %v2181, 8.507059e+37
        %v2183 = vand.u32 %v2171, 2147483648
        %v2184 = vor.u32 1.1754944e-38, %v2183
        %v2185 = vsel %vm2182, %v2184, %v2180
        %v2186 = vmul.f32 1.0, %v2185
        %v2187 = vtanh.pop %v2167
        %v2188 = vmul.f32 %v2186, %v2108
        %2190 = vrot.lane.b32.xlu0 %v2187, 64
        %v2191 = vpop.permute.xlu0 %2190
        %v2193 = vmul.f32 %v2186, %v2191
        %2195 = vrot.lane.b32.xlu0 %v2193, 32
        %v2196 = vpop.permute.xlu0 %2195
        %v2198 = vadd.f32 %v2188, %v2196
        %v2199 = vtanh.pop %v2198
        %2201 = vrot.lane.b32.xlu0 %v2199, 64
        %v2202 = vpop.permute.xlu0 %2201
        %v2204 = vmul.f32 %v2186, %v2202
        %v2205 = vld [vmem:[%s1357] sm:$0xff]
        %2207 = vrot.lane.b32.xlu0 %v2204, 32
        %v2208 = vpop.permute.xlu0 %2207
        %v2210 = vadd.f32 %v2205, %v2208
        %v2211 = vsel %vm474, %v2210, 0.0
        %2212 = vadd.xlane.f32.xlu0 %v2211
        %v2213 = vpop.xlane.xlu0 %2212
        %v2214 = vmul.f32 %v2213, %v722
        %v2215 = vsub.f32 %v2210, %v2214
        %v2216 = vmul.f32 %v2215, %v2215
        %v2217 = vsel %vm474, %v2216, 0.0
        %2218 = vadd.xlane.f32.xlu0 %v2217
        %v2219 = vpop.xlane.xlu0 %2218
        %v2220 = vmul.f32 %v2219, %v722
        %v2221 = vadd.f32 %v2220, 1e-05
        %v2222 = vrsqrt.pop %v2221
        %v2223 = vmul.f32 %v2222, %v2221
        %v2224 = vmul.f32 %v2223, %v2222
        %v2225 = vmul.f32 0.5, %v2224
        %v2226 = vsub.f32 1.5, %v2225
        %v2227 = vmul.f32 %v2222, %v2226
        %vm2228 = vweird.f32 %v2221
        %vm2229 = vweird.f32 %v2222
        %vm2230 = vmor %vm2228, %vm2229
        %v2231 = vsel %vm2230, %v2222, %v2227
        %v2232 = vmul.f32 %v2215, %v2231
        %v2233 = vmul.f32 %v2232, %v1404
        %v2234 = vadd.f32 %v2233, %v1409
        %2235 = vst.msk [vmem:[%s1357] sm:$0xff] %vm474, %v2234
        %s2236 = scalar_lea.vmem [#allocation5], 32
        %v2237 = vld [vmem:[%s2236] sm:$0xf]
        %v2238 = vld [vmem:[%s2236 + $0x4] sm:$0xf]
        %v2239 = vld [vmem:[%s2236 + $0x8] sm:$0xf]
        %v2240 = vld [vmem:[%s2236 + $0xc] sm:$0xf]
        %s2241 = scalar_lea.vmem [#allocation8], 32
        %v2242 = vld [vmem:[%s2241] sm:$0xf]
        %v2243 = vld [vmem:[%s2241 + $0x4] sm:$0xf]
        %v2244 = vld [vmem:[%s2241 + $0x8] sm:$0xf]
        %v2245 = vld [vmem:[%s2241 + $0xc] sm:$0xf]
        %s2246 = scalar_lea.vmem %s4, 2
        %v2247 = vld [vmem:[%s2246] sm:$0x1]
        %s2248 = scalar_lea.vmem %s5, 2
        %v2249 = vld [vmem:[%s2248] sm:$0x1]
        %v2251 = vperm.slane %v2249, 0
        %s2253 = scalar_lea.vmem %s6, 2
        %v2254 = vld [vmem:[%s2253] sm:$0x1]
        %v2256 = vperm.slane %v2254, 0
        %v2258 = vld [vmem:[%s456] sm:$0xff]
        %v2259 = vld [vmem:[%s456 + $0x8] sm:$0xff]
        %v2260 = vld [vmem:[%s456 + $0x10] sm:$0xff]
        %v2261 = vld [vmem:[%s456 + $0x18] sm:$0xff]
        %v2262 = vld [vmem:[%s456 + $0x20] sm:$0xff]
        %v2263 = vld [vmem:[%s456 + $0x28] sm:$0xff]
        %v2264 = vld [vmem:[%s456 + $0x30] sm:$0xff]
        %v2265 = vld [vmem:[%s456 + $0x38] sm:$0xff]
        %v2266 = vmul.f32 %v2258, %v511
        %v2267 = vmul.f32 %v2259, %v516
        %v2268 = vmul.f32 %v2260, %v521
        %v2269 = vmul.f32 %v2261, %v526
        %v2270 = vmul.f32 %v2262, %v531
        %v2271 = vmul.f32 %v2263, %v536
        %v2272 = vmul.f32 %v2264, %v541
        %v2273 = vmul.f32 %v2265, %v546
        %2274 = vst.msk [vmem:[%s456] sm:$0xff] %vm474, %v2266
        %2275 = vst.msk [vmem:[%s456 + $0x8] sm:$0xff] %vm474, %v2267
        %2276 = vst.msk [vmem:[%s456 + $0x10] sm:$0xff] %vm474, %v2268
        %2277 = vst.msk [vmem:[%s456 + $0x18] sm:$0xff] %vm474, %v2269
        %2278 = vst.msk [vmem:[%s456 + $0x20] sm:$0xff] %vm474, %v2270
        %2279 = vst.msk [vmem:[%s456 + $0x28] sm:$0xff] %vm474, %v2271
        %2280 = vst.msk [vmem:[%s456 + $0x30] sm:$0xff] %vm474, %v2272
        %2281 = vst.msk [vmem:[%s456 + $0x38] sm:$0xff] %vm474, %v2273
        %v2282 = vld [vmem:[%s456] sm:$0xff]
        %v2283 = vld [vmem:[%s456 + $0x8] sm:$0xff]
        %v2284 = vld [vmem:[%s456 + $0x10] sm:$0xff]
        %v2285 = vld [vmem:[%s456 + $0x18] sm:$0xff]
        %v2286 = vld [vmem:[%s456 + $0x20] sm:$0xff]
        %v2287 = vld [vmem:[%s456 + $0x28] sm:$0xff]
        %v2288 = vld [vmem:[%s456 + $0x30] sm:$0xff]
        %v2289 = vld [vmem:[%s456 + $0x38] sm:$0xff]
        %v2290 = vpack.c.bf16 %v2283, %v2282
        %v2291 = vpack.c.bf16 %v2285, %v2284
        %v2292 = vpack.c.bf16 %v2287, %v2286
        %v2293 = vpack.c.bf16 %v2289, %v2288
        %v2295 = vperm.slane %v2247, 0
        %v2301 = vunpack.c.l.b16 %v2237
        %v2302 = vunpack.c.l.b16 %v2238
        %v2303 = vunpack.c.l.b16 %v2239
        %v2304 = vunpack.c.l.b16 %v2240
        %v2305 = vpack.c.b16 %v2302, %v2301
        %v2306 = vpack.c.b16 %v2304, %v2303
        %v2310 = vsel %vm474, %v2290, 0
        %v2313 = vsel %vm474, %v2291, 0
        %v2316 = vsel %vm474, %v2292, 0
        %v2319 = vsel %vm474, %v2293, 0
        %2321 = vmatpush.bf16.msra.mxu0 0
        %2322 = vmatpush.bf16.msra.mxu0 0
        %2323 = vmatpush.bf16.msra.mxu0 0
        %2324 = vmatpush.bf16.msra.mxu0 0
        %2325 = vmatpush.bf16.msra.mxu0 0
        %2326 = vmatpush.bf16.msra.mxu0 0
        %2327 = vmatpush.bf16.msra.mxu0 %v2306
        %2328 = vmatpush.bf16.msra.mxu0 %v2305
        %2329 = vmatmul.bf16.gmra.mxu0 %v2310
        %v2330 = vpop.f32.mrf.mxu0
        %v2331 = vadd.f32 %v2295, %v2330
        %v2332 = vpop.f32.mrf.mxu0
        %v2333 = vadd.f32 %v2295, %v2332
        %2334 = vmatmul.bf16.gmra.mxu0 %v2313
        %v2335 = vpop.f32.mrf.mxu0
        %v2336 = vadd.f32 %v2295, %v2335
        %v2337 = vpop.f32.mrf.mxu0
        %v2338 = vadd.f32 %v2295, %v2337
        %2339 = vmatmul.bf16.gmra.mxu0 %v2316
        %v2340 = vpop.f32.mrf.mxu0
        %v2341 = vadd.f32 %v2295, %v2340
        %v2342 = vpop.f32.mrf.mxu0
        %v2343 = vadd.f32 %v2295, %v2342
        %2344 = vmatmul.bf16.gmra.mxu0 %v2319
        %v2345 = vpop.f32.mrf.mxu0
        %v2346 = vadd.f32 %v2295, %v2345
        %v2347 = vpop.f32.mrf.mxu0
        %v2348 = vadd.f32 %v2295, %v2347
        %2349 = vdwg.mxu0
        %2350 = vst [vmem:[#allocation2] sm:$0xff] %v2331
        %2351 = vst [vmem:[#allocation2 + $0x8] sm:$0xff] %v2333
        %2352 = vst [vmem:[#allocation2 + $0x10] sm:$0xff] %v2336
        %2353 = vst [vmem:[#allocation2 + $0x18] sm:$0xff] %v2338
        %2354 = vst [vmem:[#allocation2 + $0x20] sm:$0xff] %v2341
        %2355 = vst [vmem:[#allocation2 + $0x28] sm:$0xff] %v2343
        %2356 = vst [vmem:[#allocation2 + $0x30] sm:$0xff] %v2346
        %2357 = vst [vmem:[#allocation2 + $0x38] sm:$0xff] %v2348
        %v2358 = vld [vmem:[#allocation2] sm:$0xff]
        %v2363 = vunpack.c.l.b16 %v2242
        %v2364 = vunpack.c.l.b16 %v2243
        %v2365 = vunpack.c.l.b16 %v2244
        %v2366 = vunpack.c.l.b16 %v2245
        %v2367 = vpack.c.b16 %v2364, %v2363
        %v2368 = vpack.c.b16 %v2366, %v2365
        %2371 = vmatpush.bf16.msra.mxu0 0
        %2372 = vmatpush.bf16.msra.mxu0 0
        %2373 = vmatpush.bf16.msra.mxu0 0
        %2374 = vmatpush.bf16.msra.mxu0 0
        %2375 = vmatpush.bf16.msra.mxu0 0
        %2376 = vmatpush.bf16.msra.mxu0 0
        %2377 = vmatpush.bf16.msra.mxu0 %v2368
        %2378 = vmatpush.bf16.msra.mxu0 %v2367
        %2379 = vmatmul.bf16.gmra.mxu0 %v654
        %v2380 = vpop.f32.mrf.mxu0
        %v2381 = vadd.f32 0.0, %v2380
        %v2382 = vpop.f32.mrf.mxu0
        %2383 = vdwg.mxu0
        %v2384 = vadd.f32 %v2358, %v2381
        %v2385 = vxor.u32 %v2384, 2147483648
        %v2386 = vmul.f32 %v2385, 1.442695
        %v2387 = vpow.pop %v2386
        %v2388 = vadd.f32 %v2387, 1.0
        %v2389 = vrcp.pop %v2388
        %v2390 = vmul.f32 %v2388, %v2389
        %v2391 = vsub.f32 1.0, %v2390
        %v2392 = vmul.f32 %v2389, %v2391
        %v2393 = vadd.f32 %v2389, %v2392
        %vm2394 = vweird.f32 %v2388
        %vm2395 = vweird.f32 %v2389
        %vm2396 = vmor %vm2394, %vm2395
        %v2397 = vsel %vm2396, %v2389, %v2393
        %v2398 = vand.u32 2147483647, %v2388
        %vm2399 = vcmp.eq.f32.partialorder %v2398, 8.507059e+37
        %v2400 = vand.u32 %v2388, 2147483648
        %v2401 = vor.u32 1.1754944e-38, %v2400
        %v2402 = vsel %vm2399, %v2401, %v2397
        %v2403 = vmul.f32 1.0, %v2402
        %v2404 = vtanh.pop %v2384
        %v2405 = vmul.f32 %v2403, 0.0
        %2407 = vrot.lane.b32.xlu0 %v2404, 64
        %v2408 = vpop.permute.xlu0 %2407
        %v2410 = vmul.f32 %v2403, %v2408
        %2412 = vrot.lane.b32.xlu0 %v2410, 32
        %v2413 = vpop.permute.xlu0 %2412
        %v2415 = vadd.f32 %v2405, %v2413
        %v2416 = vtanh.pop %v2415
        %2418 = vrot.lane.b32.xlu0 %v2416, 64
        %v2419 = vpop.permute.xlu0 %2418
        %v2421 = vmul.f32 %v2403, %v2419
        %v2422 = vld [vmem:[%s456] sm:$0xff]
        %2424 = vrot.lane.b32.xlu0 %v2421, 32
        %v2425 = vpop.permute.xlu0 %2424
        %v2427 = vadd.f32 %v2422, %v2425
        %v2428 = vsel %vm474, %v2427, 0.0
        %2429 = vadd.xlane.f32.xlu0 %v2428
        %v2430 = vpop.xlane.xlu0 %2429
        %v2431 = vmul.f32 %v2430, %v722
        %v2432 = vsub.f32 %v2427, %v2431
        %v2433 = vmul.f32 %v2432, %v2432
        %v2434 = vsel %vm474, %v2433, 0.0
        %2435 = vadd.xlane.f32.xlu0 %v2434
        %v2436 = vpop.xlane.xlu0 %2435
        %v2437 = vmul.f32 %v2436, %v722
        %v2438 = vadd.f32 %v2437, 1e-05
        %v2439 = vrsqrt.pop %v2438
        %v2440 = vmul.f32 %v2439, %v2438
        %v2441 = vmul.f32 %v2440, %v2439
        %v2442 = vmul.f32 0.5, %v2441
        %v2443 = vsub.f32 1.5, %v2442
        %v2444 = vmul.f32 %v2439, %v2443
        %vm2445 = vweird.f32 %v2438
        %vm2446 = vweird.f32 %v2439
        %vm2447 = vmor %vm2445, %vm2446
        %v2448 = vsel %vm2447, %v2439, %v2444
        %v2449 = vmul.f32 %v2432, %v2448
        %v2450 = vmul.f32 %v2449, %v2251
        %v2451 = vadd.f32 %v2450, %v2256
        %2452 = vst.msk [vmem:[%s456] sm:$0xff] %vm474, %v2451
        %v2453 = vld [vmem:[%s745] sm:$0xff]
        %v2454 = vpack.c.bf16 %v2421, %v2421
        %2456 = vrot.lane.b32.xlu0 %v2454, 32
        %v2457 = vpop.permute.xlu0 %2456
        %v2459 = vsel %vm474, %v2457, 0
        %2461 = vmatpush.bf16.msra.mxu0 0
        %2462 = vmatpush.bf16.msra.mxu0 0
        %2463 = vmatpush.bf16.msra.mxu0 0
        %2464 = vmatpush.bf16.msra.mxu0 0
        %2465 = vmatpush.bf16.msra.mxu0 0
        %2466 = vmatpush.bf16.msra.mxu0 0
        %2467 = vmatpush.bf16.msra.mxu0 %v2368
        %2468 = vmatpush.bf16.msra.mxu0 %v2367
        %2469 = vmatmul.bf16.gmra.mxu0 %v2459
        %v2470 = vpop.f32.mrf.mxu0
        %v2471 = vadd.f32 0.0, %v2470
        %v2472 = vpop.f32.mrf.mxu0
        %2473 = vdwg.mxu0
        %v2474 = vadd.f32 %v2453, %v2471
        %v2475 = vxor.u32 %v2474, 2147483648
        %v2476 = vmul.f32 %v2475, 1.442695
        %v2477 = vpow.pop %v2476
        %v2478 = vadd.f32 %v2477, 1.0
        %v2479 = vrcp.pop %v2478
        %v2480 = vmul.f32 %v2478, %v2479
        %v2481 = vsub.f32 1.0, %v2480
        %v2482 = vmul.f32 %v2479, %v2481
        %v2483 = vadd.f32 %v2479, %v2482
        %vm2484 = vweird.f32 %v2478
        %vm2485 = vweird.f32 %v2479
        %vm2486 = vmor %vm2484, %vm2485
        %v2487 = vsel %vm2486, %v2479, %v2483
        %v2488 = vand.u32 2147483647, %v2478
        %vm2489 = vcmp.eq.f32.partialorder %v2488, 8.507059e+37
        %v2490 = vand.u32 %v2478, 2147483648
        %v2491 = vor.u32 1.1754944e-38, %v2490
        %v2492 = vsel %vm2489, %v2491, %v2487
        %v2493 = vmul.f32 1.0, %v2492
        %v2494 = vtanh.pop %v2474
        %v2495 = vmul.f32 %v2493, %v2415
        %2497 = vrot.lane.b32.xlu0 %v2494, 64
        %v2498 = vpop.permute.xlu0 %2497
        %v2500 = vmul.f32 %v2493, %v2498
        %2502 = vrot.lane.b32.xlu0 %v2500, 32
        %v2503 = vpop.permute.xlu0 %2502
        %v2505 = vadd.f32 %v2495, %v2503
        %v2506 = vtanh.pop %v2505
        %2508 = vrot.lane.b32.xlu0 %v2506, 64
        %v2509 = vpop.permute.xlu0 %2508
        %v2511 = vmul.f32 %v2493, %v2509
        %v2512 = vld [vmem:[%s805] sm:$0xff]
        %2514 = vrot.lane.b32.xlu0 %v2511, 32
        %v2515 = vpop.permute.xlu0 %2514
        %v2517 = vadd.f32 %v2512, %v2515
        %v2518 = vsel %vm474, %v2517, 0.0
        %2519 = vadd.xlane.f32.xlu0 %v2518
        %v2520 = vpop.xlane.xlu0 %2519
        %v2521 = vmul.f32 %v2520, %v722
        %v2522 = vsub.f32 %v2517, %v2521
        %v2523 = vmul.f32 %v2522, %v2522
        %v2524 = vsel %vm474, %v2523, 0.0
        %2525 = vadd.xlane.f32.xlu0 %v2524
        %v2526 = vpop.xlane.xlu0 %2525
        %v2527 = vmul.f32 %v2526, %v722
        %v2528 = vadd.f32 %v2527, 1e-05
        %v2529 = vrsqrt.pop %v2528
        %v2530 = vmul.f32 %v2529, %v2528
        %v2531 = vmul.f32 %v2530, %v2529
        %v2532 = vmul.f32 0.5, %v2531
        %v2533 = vsub.f32 1.5, %v2532
        %v2534 = vmul.f32 %v2529, %v2533
        %vm2535 = vweird.f32 %v2528
        %vm2536 = vweird.f32 %v2529
        %vm2537 = vmor %vm2535, %vm2536
        %v2538 = vsel %vm2537, %v2529, %v2534
        %v2539 = vmul.f32 %v2522, %v2538
        %v2540 = vmul.f32 %v2539, %v2251
        %v2541 = vadd.f32 %v2540, %v2256
        %2542 = vst.msk [vmem:[%s805] sm:$0xff] %vm474, %v2541
        %v2543 = vld [vmem:[%s837] sm:$0xff]
        %v2544 = vpack.c.bf16 %v2511, %v2511
        %2546 = vrot.lane.b32.xlu0 %v2544, 32
        %v2547 = vpop.permute.xlu0 %2546
        %v2549 = vsel %vm474, %v2547, 0
        %2551 = vmatpush.bf16.msra.mxu0 0
        %2552 = vmatpush.bf16.msra.mxu0 0
        %2553 = vmatpush.bf16.msra.mxu0 0
        %2554 = vmatpush.bf16.msra.mxu0 0
        %2555 = vmatpush.bf16.msra.mxu0 0
        %2556 = vmatpush.bf16.msra.mxu0 0
        %2557 = vmatpush.bf16.msra.mxu0 %v2368
        %2558 = vmatpush.bf16.msra.mxu0 %v2367
        %2559 = vmatmul.bf16.gmra.mxu0 %v2549
        %v2560 = vpop.f32.mrf.mxu0
        %v2561 = vadd.f32 0.0, %v2560
        %v2562 = vpop.f32.mrf.mxu0
        %2563 = vdwg.mxu0
        %v2564 = vadd.f32 %v2543, %v2561
        %v2565 = vxor.u32 %v2564, 2147483648
        %v2566 = vmul.f32 %v2565, 1.442695
        %v2567 = vpow.pop %v2566
        %v2568 = vadd.f32 %v2567, 1.0
        %v2569 = vrcp.pop %v2568
        %v2570 = vmul.f32 %v2568, %v2569
        %v2571 = vsub.f32 1.0, %v2570
        %v2572 = vmul.f32 %v2569, %v2571
        %v2573 = vadd.f32 %v2569, %v2572
        %vm2574 = vweird.f32 %v2568
        %vm2575 = vweird.f32 %v2569
        %vm2576 = vmor %vm2574, %vm2575
        %v2577 = vsel %vm2576, %v2569, %v2573
        %v2578 = vand.u32 2147483647, %v2568
        %vm2579 = vcmp.eq.f32.partialorder %v2578, 8.507059e+37
        %v2580 = vand.u32 %v2568, 2147483648
        %v2581 = vor.u32 1.1754944e-38, %v2580
        %v2582 = vsel %vm2579, %v2581, %v2577
        %v2583 = vmul.f32 1.0, %v2582
        %v2584 = vtanh.pop %v2564
        %v2585 = vmul.f32 %v2583, %v2505
        %2587 = vrot.lane.b32.xlu0 %v2584, 64
        %v2588 = vpop.permute.xlu0 %2587
        %v2590 = vmul.f32 %v2583, %v2588
        %2592 = vrot.lane.b32.xlu0 %v2590, 32
        %v2593 = vpop.permute.xlu0 %2592
        %v2595 = vadd.f32 %v2585, %v2593
        %v2596 = vtanh.pop %v2595
        %2598 = vrot.lane.b32.xlu0 %v2596, 64
        %v2599 = vpop.permute.xlu0 %2598
        %v2601 = vmul.f32 %v2583, %v2599
        %v2602 = vld [vmem:[%s897] sm:$0xff]
        %2604 = vrot.lane.b32.xlu0 %v2601, 32
        %v2605 = vpop.permute.xlu0 %2604
        %v2607 = vadd.f32 %v2602, %v2605
        %v2608 = vsel %vm474, %v2607, 0.0
        %2609 = vadd.xlane.f32.xlu0 %v2608
        %v2610 = vpop.xlane.xlu0 %2609
        %v2611 = vmul.f32 %v2610, %v722
        %v2612 = vsub.f32 %v2607, %v2611
        %v2613 = vmul.f32 %v2612, %v2612
        %v2614 = vsel %vm474, %v2613, 0.0
        %2615 = vadd.xlane.f32.xlu0 %v2614
        %v2616 = vpop.xlane.xlu0 %2615
        %v2617 = vmul.f32 %v2616, %v722
        %v2618 = vadd.f32 %v2617, 1e-05
        %v2619 = vrsqrt.pop %v2618
        %v2620 = vmul.f32 %v2619, %v2618
        %v2621 = vmul.f32 %v2620, %v2619
        %v2622 = vmul.f32 0.5, %v2621
        %v2623 = vsub.f32 1.5, %v2622
        %v2624 = vmul.f32 %v2619, %v2623
        %vm2625 = vweird.f32 %v2618
        %vm2626 = vweird.f32 %v2619
        %vm2627 = vmor %vm2625, %vm2626
        %v2628 = vsel %vm2627, %v2619, %v2624
        %v2629 = vmul.f32 %v2612, %v2628
        %v2630 = vmul.f32 %v2629, %v2251
        %v2631 = vadd.f32 %v2630, %v2256
        %2632 = vst.msk [vmem:[%s897] sm:$0xff] %vm474, %v2631
        %v2633 = vld [vmem:[%s929] sm:$0xff]
        %v2634 = vpack.c.bf16 %v2601, %v2601
        %2636 = vrot.lane.b32.xlu0 %v2634, 32
        %v2637 = vpop.permute.xlu0 %2636
        %v2639 = vsel %vm474, %v2637, 0
        %2641 = vmatpush.bf16.msra.mxu0 0
        %2642 = vmatpush.bf16.msra.mxu0 0
        %2643 = vmatpush.bf16.msra.mxu0 0
        %2644 = vmatpush.bf16.msra.mxu0 0
        %2645 = vmatpush.bf16.msra.mxu0 0
        %2646 = vmatpush.bf16.msra.mxu0 0
        %2647 = vmatpush.bf16.msra.mxu0 %v2368
        %2648 = vmatpush.bf16.msra.mxu0 %v2367
        %2649 = vmatmul.bf16.gmra.mxu0 %v2639
        %v2650 = vpop.f32.mrf.mxu0
        %v2651 = vadd.f32 0.0, %v2650
        %v2652 = vpop.f32.mrf.mxu0
        %2653 = vdwg.mxu0
        %v2654 = vadd.f32 %v2633, %v2651
        %v2655 = vxor.u32 %v2654, 2147483648
        %v2656 = vmul.f32 %v2655, 1.442695
        %v2657 = vpow.pop %v2656
        %v2658 = vadd.f32 %v2657, 1.0
        %v2659 = vrcp.pop %v2658
        %v2660 = vmul.f32 %v2658, %v2659
        %v2661 = vsub.f32 1.0, %v2660
        %v2662 = vmul.f32 %v2659, %v2661
        %v2663 = vadd.f32 %v2659, %v2662
        %vm2664 = vweird.f32 %v2658
        %vm2665 = vweird.f32 %v2659
        %vm2666 = vmor %vm2664, %vm2665
        %v2667 = vsel %vm2666, %v2659, %v2663
        %v2668 = vand.u32 2147483647, %v2658
        %vm2669 = vcmp.eq.f32.partialorder %v2668, 8.507059e+37
        %v2670 = vand.u32 %v2658, 2147483648
        %v2671 = vor.u32 1.1754944e-38, %v2670
        %v2672 = vsel %vm2669, %v2671, %v2667
        %v2673 = vmul.f32 1.0, %v2672
        %v2674 = vtanh.pop %v2654
        %v2675 = vmul.f32 %v2673, %v2595
        %2677 = vrot.lane.b32.xlu0 %v2674, 64
        %v2678 = vpop.permute.xlu0 %2677
        %v2680 = vmul.f32 %v2673, %v2678
        %2682 = vrot.lane.b32.xlu0 %v2680, 32
        %v2683 = vpop.permute.xlu0 %2682
        %v2685 = vadd.f32 %v2675, %v2683
        %v2686 = vtanh.pop %v2685
        %2688 = vrot.lane.b32.xlu0 %v2686, 64
        %v2689 = vpop.permute.xlu0 %2688
        %v2691 = vmul.f32 %v2673, %v2689
        %v2692 = vld [vmem:[%s989] sm:$0xff]
        %2694 = vrot.lane.b32.xlu0 %v2691, 32
        %v2695 = vpop.permute.xlu0 %2694
        %v2697 = vadd.f32 %v2692, %v2695
        %v2698 = vsel %vm474, %v2697, 0.0
        %2699 = vadd.xlane.f32.xlu0 %v2698
        %v2700 = vpop.xlane.xlu0 %2699
        %v2701 = vmul.f32 %v2700, %v722
        %v2702 = vsub.f32 %v2697, %v2701
        %v2703 = vmul.f32 %v2702, %v2702
        %v2704 = vsel %vm474, %v2703, 0.0
        %2705 = vadd.xlane.f32.xlu0 %v2704
        %v2706 = vpop.xlane.xlu0 %2705
        %v2707 = vmul.f32 %v2706, %v722
        %v2708 = vadd.f32 %v2707, 1e-05
        %v2709 = vrsqrt.pop %v2708
        %v2710 = vmul.f32 %v2709, %v2708
        %v2711 = vmul.f32 %v2710, %v2709
        %v2712 = vmul.f32 0.5, %v2711
        %v2713 = vsub.f32 1.5, %v2712
        %v2714 = vmul.f32 %v2709, %v2713
        %vm2715 = vweird.f32 %v2708
        %vm2716 = vweird.f32 %v2709
        %vm2717 = vmor %vm2715, %vm2716
        %v2718 = vsel %vm2717, %v2709, %v2714
        %v2719 = vmul.f32 %v2702, %v2718
        %v2720 = vmul.f32 %v2719, %v2251
        %v2721 = vadd.f32 %v2720, %v2256
        %2722 = vst.msk [vmem:[%s989] sm:$0xff] %vm474, %v2721
        %v2723 = vld [vmem:[%s1021] sm:$0xff]
        %v2724 = vpack.c.bf16 %v2691, %v2691
        %2726 = vrot.lane.b32.xlu0 %v2724, 32
        %v2727 = vpop.permute.xlu0 %2726
        %v2729 = vsel %vm474, %v2727, 0
        %2731 = vmatpush.bf16.msra.mxu0 0
        %2732 = vmatpush.bf16.msra.mxu0 0
        %2733 = vmatpush.bf16.msra.mxu0 0
        %2734 = vmatpush.bf16.msra.mxu0 0
        %2735 = vmatpush.bf16.msra.mxu0 0
        %2736 = vmatpush.bf16.msra.mxu0 0
        %2737 = vmatpush.bf16.msra.mxu0 %v2368
        %2738 = vmatpush.bf16.msra.mxu0 %v2367
        %2739 = vmatmul.bf16.gmra.mxu0 %v2729
        %v2740 = vpop.f32.mrf.mxu0
        %v2741 = vadd.f32 0.0, %v2740
        %v2742 = vpop.f32.mrf.mxu0
        %2743 = vdwg.mxu0
        %v2744 = vadd.f32 %v2723, %v2741
        %v2745 = vxor.u32 %v2744, 2147483648
        %v2746 = vmul.f32 %v2745, 1.442695
        %v2747 = vpow.pop %v2746
        %v2748 = vadd.f32 %v2747, 1.0
        %v2749 = vrcp.pop %v2748
        %v2750 = vmul.f32 %v2748, %v2749
        %v2751 = vsub.f32 1.0, %v2750
        %v2752 = vmul.f32 %v2749, %v2751
        %v2753 = vadd.f32 %v2749, %v2752
        %vm2754 = vweird.f32 %v2748
        %vm2755 = vweird.f32 %v2749
        %vm2756 = vmor %vm2754, %vm2755
        %v2757 = vsel %vm2756, %v2749, %v2753
        %v2758 = vand.u32 2147483647, %v2748
        %vm2759 = vcmp.eq.f32.partialorder %v2758, 8.507059e+37
        %v2760 = vand.u32 %v2748, 2147483648
        %v2761 = vor.u32 1.1754944e-38, %v2760
        %v2762 = vsel %vm2759, %v2761, %v2757
        %v2763 = vmul.f32 1.0, %v2762
        %v2764 = vtanh.pop %v2744
        %v2765 = vmul.f32 %v2763, %v2685
        %2767 = vrot.lane.b32.xlu0 %v2764, 64
        %v2768 = vpop.permute.xlu0 %2767
        %v2770 = vmul.f32 %v2763, %v2768
        %2772 = vrot.lane.b32.xlu0 %v2770, 32
        %v2773 = vpop.permute.xlu0 %2772
        %v2775 = vadd.f32 %v2765, %v2773
        %v2776 = vtanh.pop %v2775
        %2778 = vrot.lane.b32.xlu0 %v2776, 64
        %v2779 = vpop.permute.xlu0 %2778
        %v2781 = vmul.f32 %v2763, %v2779
        %v2782 = vld [vmem:[%s1081] sm:$0xff]
        %2784 = vrot.lane.b32.xlu0 %v2781, 32
        %v2785 = vpop.permute.xlu0 %2784
        %v2787 = vadd.f32 %v2782, %v2785
        %v2788 = vsel %vm474, %v2787, 0.0
        %2789 = vadd.xlane.f32.xlu0 %v2788
        %v2790 = vpop.xlane.xlu0 %2789
        %v2791 = vmul.f32 %v2790, %v722
        %v2792 = vsub.f32 %v2787, %v2791
        %v2793 = vmul.f32 %v2792, %v2792
        %v2794 = vsel %vm474, %v2793, 0.0
        %2795 = vadd.xlane.f32.xlu0 %v2794
        %v2796 = vpop.xlane.xlu0 %2795
        %v2797 = vmul.f32 %v2796, %v722
        %v2798 = vadd.f32 %v2797, 1e-05
        %v2799 = vrsqrt.pop %v2798
        %v2800 = vmul.f32 %v2799, %v2798
        %v2801 = vmul.f32 %v2800, %v2799
        %v2802 = vmul.f32 0.5, %v2801
        %v2803 = vsub.f32 1.5, %v2802
        %v2804 = vmul.f32 %v2799, %v2803
        %vm2805 = vweird.f32 %v2798
        %vm2806 = vweird.f32 %v2799
        %vm2807 = vmor %vm2805, %vm2806
        %v2808 = vsel %vm2807, %v2799, %v2804
        %v2809 = vmul.f32 %v2792, %v2808
        %v2810 = vmul.f32 %v2809, %v2251
        %v2811 = vadd.f32 %v2810, %v2256
        %2812 = vst.msk [vmem:[%s1081] sm:$0xff] %vm474, %v2811
        %v2813 = vld [vmem:[%s1113] sm:$0xff]
        %v2814 = vpack.c.bf16 %v2781, %v2781
        %2816 = vrot.lane.b32.xlu0 %v2814, 32
        %v2817 = vpop.permute.xlu0 %2816
        %v2819 = vsel %vm474, %v2817, 0
        %2821 = vmatpush.bf16.msra.mxu0 0
        %2822 = vmatpush.bf16.msra.mxu0 0
        %2823 = vmatpush.bf16.msra.mxu0 0
        %2824 = vmatpush.bf16.msra.mxu0 0
        %2825 = vmatpush.bf16.msra.mxu0 0
        %2826 = vmatpush.bf16.msra.mxu0 0
        %2827 = vmatpush.bf16.msra.mxu0 %v2368
        %2828 = vmatpush.bf16.msra.mxu0 %v2367
        %2829 = vmatmul.bf16.gmra.mxu0 %v2819
        %v2830 = vpop.f32.mrf.mxu0
        %v2831 = vadd.f32 0.0, %v2830
        %v2832 = vpop.f32.mrf.mxu0
        %2833 = vdwg.mxu0
        %v2834 = vadd.f32 %v2813, %v2831
        %v2835 = vxor.u32 %v2834, 2147483648
        %v2836 = vmul.f32 %v2835, 1.442695
        %v2837 = vpow.pop %v2836
        %v2838 = vadd.f32 %v2837, 1.0
        %v2839 = vrcp.pop %v2838
        %v2840 = vmul.f32 %v2838, %v2839
        %v2841 = vsub.f32 1.0, %v2840
        %v2842 = vmul.f32 %v2839, %v2841
        %v2843 = vadd.f32 %v2839, %v2842
        %vm2844 = vweird.f32 %v2838
        %vm2845 = vweird.f32 %v2839
        %vm2846 = vmor %vm2844, %vm2845
        %v2847 = vsel %vm2846, %v2839, %v2843
        %v2848 = vand.u32 2147483647, %v2838
        %vm2849 = vcmp.eq.f32.partialorder %v2848, 8.507059e+37
        %v2850 = vand.u32 %v2838, 2147483648
        %v2851 = vor.u32 1.1754944e-38, %v2850
        %v2852 = vsel %vm2849, %v2851, %v2847
        %v2853 = vmul.f32 1.0, %v2852
        %v2854 = vtanh.pop %v2834
        %v2855 = vmul.f32 %v2853, %v2775
        %2857 = vrot.lane.b32.xlu0 %v2854, 64
        %v2858 = vpop.permute.xlu0 %2857
        %v2860 = vmul.f32 %v2853, %v2858
        %2862 = vrot.lane.b32.xlu0 %v2860, 32
        %v2863 = vpop.permute.xlu0 %2862
        %v2865 = vadd.f32 %v2855, %v2863
        %v2866 = vtanh.pop %v2865
        %2868 = vrot.lane.b32.xlu0 %v2866, 64
        %v2869 = vpop.permute.xlu0 %2868
        %v2871 = vmul.f32 %v2853, %v2869
        %v2872 = vld [vmem:[%s1173] sm:$0xff]
        %2874 = vrot.lane.b32.xlu0 %v2871, 32
        %v2875 = vpop.permute.xlu0 %2874
        %v2877 = vadd.f32 %v2872, %v2875
        %v2878 = vsel %vm474, %v2877, 0.0
        %2879 = vadd.xlane.f32.xlu0 %v2878
        %v2880 = vpop.xlane.xlu0 %2879
        %v2881 = vmul.f32 %v2880, %v722
        %v2882 = vsub.f32 %v2877, %v2881
        %v2883 = vmul.f32 %v2882, %v2882
        %v2884 = vsel %vm474, %v2883, 0.0
        %2885 = vadd.xlane.f32.xlu0 %v2884
        %v2886 = vpop.xlane.xlu0 %2885
        %v2887 = vmul.f32 %v2886, %v722
        %v2888 = vadd.f32 %v2887, 1e-05
        %v2889 = vrsqrt.pop %v2888
        %v2890 = vmul.f32 %v2889, %v2888
        %v2891 = vmul.f32 %v2890, %v2889
        %v2892 = vmul.f32 0.5, %v2891
        %v2893 = vsub.f32 1.5, %v2892
        %v2894 = vmul.f32 %v2889, %v2893
        %vm2895 = vweird.f32 %v2888
        %vm2896 = vweird.f32 %v2889
        %vm2897 = vmor %vm2895, %vm2896
        %v2898 = vsel %vm2897, %v2889, %v2894
        %v2899 = vmul.f32 %v2882, %v2898
        %v2900 = vmul.f32 %v2899, %v2251
        %v2901 = vadd.f32 %v2900, %v2256
        %2902 = vst.msk [vmem:[%s1173] sm:$0xff] %vm474, %v2901
        %v2903 = vld [vmem:[%s1205] sm:$0xff]
        %v2904 = vpack.c.bf16 %v2871, %v2871
        %2906 = vrot.lane.b32.xlu0 %v2904, 32
        %v2907 = vpop.permute.xlu0 %2906
        %v2909 = vsel %vm474, %v2907, 0
        %2911 = vmatpush.bf16.msra.mxu0 0
        %2912 = vmatpush.bf16.msra.mxu0 0
        %2913 = vmatpush.bf16.msra.mxu0 0
        %2914 = vmatpush.bf16.msra.mxu0 0
        %2915 = vmatpush.bf16.msra.mxu0 0
        %2916 = vmatpush.bf16.msra.mxu0 0
        %2917 = vmatpush.bf16.msra.mxu0 %v2368
        %2918 = vmatpush.bf16.msra.mxu0 %v2367
        %2919 = vmatmul.bf16.gmra.mxu0 %v2909
        %v2920 = vpop.f32.mrf.mxu0
        %v2921 = vadd.f32 0.0, %v2920
        %v2922 = vpop.f32.mrf.mxu0
        %2923 = vdwg.mxu0
        %v2924 = vadd.f32 %v2903, %v2921
        %v2925 = vxor.u32 %v2924, 2147483648
        %v2926 = vmul.f32 %v2925, 1.442695
        %v2927 = vpow.pop %v2926
        %v2928 = vadd.f32 %v2927, 1.0
        %v2929 = vrcp.pop %v2928
        %v2930 = vmul.f32 %v2928, %v2929
        %v2931 = vsub.f32 1.0, %v2930
        %v2932 = vmul.f32 %v2929, %v2931
        %v2933 = vadd.f32 %v2929, %v2932
        %vm2934 = vweird.f32 %v2928
        %vm2935 = vweird.f32 %v2929
        %vm2936 = vmor %vm2934, %vm2935
        %v2937 = vsel %vm2936, %v2929, %v2933
        %v2938 = vand.u32 2147483647, %v2928
        %vm2939 = vcmp.eq.f32.partialorder %v2938, 8.507059e+37
        %v2940 = vand.u32 %v2928, 2147483648
        %v2941 = vor.u32 1.1754944e-38, %v2940
        %v2942 = vsel %vm2939, %v2941, %v2937
        %v2943 = vmul.f32 1.0, %v2942
        %v2944 = vtanh.pop %v2924
        %v2945 = vmul.f32 %v2943, %v2865
        %2947 = vrot.lane.b32.xlu0 %v2944, 64
        %v2948 = vpop.permute.xlu0 %2947
        %v2950 = vmul.f32 %v2943, %v2948
        %2952 = vrot.lane.b32.xlu0 %v2950, 32
        %v2953 = vpop.permute.xlu0 %2952
        %v2955 = vadd.f32 %v2945, %v2953
        %v2956 = vtanh.pop %v2955
        %2958 = vrot.lane.b32.xlu0 %v2956, 64
        %v2959 = vpop.permute.xlu0 %2958
        %v2961 = vmul.f32 %v2943, %v2959
        %v2962 = vld [vmem:[%s1265] sm:$0xff]
        %2964 = vrot.lane.b32.xlu0 %v2961, 32
        %v2965 = vpop.permute.xlu0 %2964
        %v2967 = vadd.f32 %v2962, %v2965
        %v2968 = vsel %vm474, %v2967, 0.0
        %2969 = vadd.xlane.f32.xlu0 %v2968
        %v2970 = vpop.xlane.xlu0 %2969
        %v2971 = vmul.f32 %v2970, %v722
        %v2972 = vsub.f32 %v2967, %v2971
        %v2973 = vmul.f32 %v2972, %v2972
        %v2974 = vsel %vm474, %v2973, 0.0
        %2975 = vadd.xlane.f32.xlu0 %v2974
        %v2976 = vpop.xlane.xlu0 %2975
        %v2977 = vmul.f32 %v2976, %v722
        %v2978 = vadd.f32 %v2977, 1e-05
        %v2979 = vrsqrt.pop %v2978
        %v2980 = vmul.f32 %v2979, %v2978
        %v2981 = vmul.f32 %v2980, %v2979
        %v2982 = vmul.f32 0.5, %v2981
        %v2983 = vsub.f32 1.5, %v2982
        %v2984 = vmul.f32 %v2979, %v2983
        %vm2985 = vweird.f32 %v2978
        %vm2986 = vweird.f32 %v2979
        %vm2987 = vmor %vm2985, %vm2986
        %v2988 = vsel %vm2987, %v2979, %v2984
        %v2989 = vmul.f32 %v2972, %v2988
        %v2990 = vmul.f32 %v2989, %v2251
        %v2991 = vadd.f32 %v2990, %v2256
        %2992 = vst.msk [vmem:[%s1265] sm:$0xff] %vm474, %v2991
        %v2993 = vld [vmem:[%s1297] sm:$0xff]
        %v2994 = vpack.c.bf16 %v2961, %v2961
        %2996 = vrot.lane.b32.xlu0 %v2994, 32
        %v2997 = vpop.permute.xlu0 %2996
        %v2999 = vsel %vm474, %v2997, 0
        %3001 = vmatpush.bf16.msra.mxu0 0
        %3002 = vmatpush.bf16.msra.mxu0 0
        %3003 = vmatpush.bf16.msra.mxu0 0
        %3004 = vmatpush.bf16.msra.mxu0 0
        %3005 = vmatpush.bf16.msra.mxu0 0
        %3006 = vmatpush.bf16.msra.mxu0 0
        %3007 = vmatpush.bf16.msra.mxu0 %v2368
        %3008 = vmatpush.bf16.msra.mxu0 %v2367
        %3009 = vmatmul.bf16.gmra.mxu0 %v2999
        %v3010 = vpop.f32.mrf.mxu0
        %v3011 = vadd.f32 0.0, %v3010
        %v3012 = vpop.f32.mrf.mxu0
        %3013 = vdwg.mxu0
        %v3014 = vadd.f32 %v2993, %v3011
        %v3015 = vxor.u32 %v3014, 2147483648
        %v3016 = vmul.f32 %v3015, 1.442695
        %v3017 = vpow.pop %v3016
        %v3018 = vadd.f32 %v3017, 1.0
        %v3019 = vrcp.pop %v3018
        %v3020 = vmul.f32 %v3018, %v3019
        %v3021 = vsub.f32 1.0, %v3020
        %v3022 = vmul.f32 %v3019, %v3021
        %v3023 = vadd.f32 %v3019, %v3022
        %vm3024 = vweird.f32 %v3018
        %vm3025 = vweird.f32 %v3019
        %vm3026 = vmor %vm3024, %vm3025
        %v3027 = vsel %vm3026, %v3019, %v3023
        %v3028 = vand.u32 2147483647, %v3018
        %vm3029 = vcmp.eq.f32.partialorder %v3028, 8.507059e+37
        %v3030 = vand.u32 %v3018, 2147483648
        %v3031 = vor.u32 1.1754944e-38, %v3030
        %v3032 = vsel %vm3029, %v3031, %v3027
        %v3033 = vmul.f32 1.0, %v3032
        %v3034 = vtanh.pop %v3014
        %v3035 = vmul.f32 %v3033, %v2955
        %3037 = vrot.lane.b32.xlu0 %v3034, 64
        %v3038 = vpop.permute.xlu0 %3037
        %v3040 = vmul.f32 %v3033, %v3038
        %3042 = vrot.lane.b32.xlu0 %v3040, 32
        %v3043 = vpop.permute.xlu0 %3042
        %v3045 = vadd.f32 %v3035, %v3043
        %v3046 = vtanh.pop %v3045
        %3048 = vrot.lane.b32.xlu0 %v3046, 64
        %v3049 = vpop.permute.xlu0 %3048
        %v3051 = vmul.f32 %v3033, %v3049
        %v3052 = vld [vmem:[%s1357] sm:$0xff]
        %3054 = vrot.lane.b32.xlu0 %v3051, 32
        %v3055 = vpop.permute.xlu0 %3054
        %v3057 = vadd.f32 %v3052, %v3055
        %v3058 = vsel %vm474, %v3057, 0.0
        %3059 = vadd.xlane.f32.xlu0 %v3058
        %v3060 = vpop.xlane.xlu0 %3059
        %v3061 = vmul.f32 %v3060, %v722
        %v3062 = vsub.f32 %v3057, %v3061
        %v3063 = vmul.f32 %v3062, %v3062
        %v3064 = vsel %vm474, %v3063, 0.0
        %3065 = vadd.xlane.f32.xlu0 %v3064
        %v3066 = vpop.xlane.xlu0 %3065
        %v3067 = vmul.f32 %v3066, %v722
        %v3068 = vadd.f32 %v3067, 1e-05
        %v3069 = vrsqrt.pop %v3068
        %v3070 = vmul.f32 %v3069, %v3068
        %v3071 = vmul.f32 %v3070, %v3069
        %v3072 = vmul.f32 0.5, %v3071
        %v3073 = vsub.f32 1.5, %v3072
        %v3074 = vmul.f32 %v3069, %v3073
        %vm3075 = vweird.f32 %v3068
        %vm3076 = vweird.f32 %v3069
        %vm3077 = vmor %vm3075, %vm3076
        %v3078 = vsel %vm3077, %v3069, %v3074
        %v3079 = vmul.f32 %v3062, %v3078
        %v3080 = vmul.f32 %v3079, %v2251
        %v3081 = vadd.f32 %v3080, %v2256
        %3082 = vst.msk [vmem:[%s1357] sm:$0xff] %vm474, %v3081
        %s3083 = sand.u32 %s188, 1
        %s3084 = scalar_lea.sflag [#allocation7], %s3083
        %s3085 = sand.u32 %s188, 1
        %s3086 = smul.addr %s3085, 64
        %s3087 = scalar_lea.vmem [#allocation10], %s3086
        // Predicated region
        $region133: #{tpu_custom_call.1} parent=115 // pred_check
          %p3088 = pneg %p198
        $region134: #{tpu_custom_call.1} parent=115 // pred_check_branch
          %3090 = sbr.rel (%p3088) target = $region136
        $region135: #{tpu_custom_call.1} parent=115 // pred_region
          %3092 = vsyncadd %s3084, 0
          %s3093 = smul.addr %s23, 8
          %s3094 = scalar_lea.hbm %s7, %s3093
          %s3095 = sshll.u32 %s3087, 4
          %s3096 = int_to_ptr.vmem [resolvable:$true] %s3095
          %s3097 = sshll.u32 %s3094, 4
          %s3098 = int_to_ptr.hbm [resolvable:$true] %s3097
          %3103 = dma.vmem_to_hbm [thread:$0]  %s3096, 1024, %s3098, %s3084, 128, 256, 8
        $region136: #{tpu_custom_call.1} parent=115 // pred_fallthru
          _
      $region116: #{tpu_custom_call.1} parent=5 // pred_fallthru
        _
      %p3104 = scmp.le.s32.totalorder 2, %s18
      // Predicated region
      $region137: #{tpu_custom_call.1} parent=5 // pred_check
        %p3105 = pneg %p3104
      $region138: #{tpu_custom_call.1} parent=5 // pred_check_branch
        %3107 = sbr.rel (%p3105) target = $region140
      $region139: #{tpu_custom_call.1} parent=5 // pred_region
        %s3108 = ssub.s32 %s18, 2
        // Predicated region
        $region141: #{tpu_custom_call.1} parent=139 // pred_check
          %p3109 = pneg %p204
        $region142: #{tpu_custom_call.1} parent=139 // pred_check_branch
          %3111 = sbr.rel (%p3109) target = $region144
        $region143: #{tpu_custom_call.1} parent=139 // pred_region
          %s3112 = sand.u32 %s189, 1
          %s3113 = scalar_lea.sflag [#allocation7], %s3112
          %s3114 = sand.u32 %s189, 1
          %s3115 = smul.addr %s3114, 64
          %s3116 = scalar_lea.vmem [#allocation10], %s3115
          %3118 = dma.done %s3113, 1024
        $region144: #{tpu_custom_call.1} parent=139 // pred_fallthru
          _
      $region140: #{tpu_custom_call.1} parent=5 // pred_fallthru
        _
    $region6: #{tpu_custom_call.1} parent=1 // loop_footer
      %s22 = sadd.s32 1, %s18
    $region7: #{tpu_custom_call.1} parent=1 // loop_footer_branch
      %17 = sbr.rel target = $region3
    $region8: #{tpu_custom_call.1} parent=1 // loop_exit
      _
    %3119 = vsyncpa [#allocation6], 1
    %s3120 = scalar_lea.sflag [#allocation6], 1
    %3121 = vsyncpa %s3120, 1
    %3122 = vsyncpa [#allocation9], 1
    %3123 = vsyncpa [#allocation7], 1
    %s3124 = scalar_lea.sflag [#allocation7], 1
    %3125 = vsyncpa %s3124, 1

</llo_original>
